<compile_context>
chip_gen: v5e
topology: v5e:2x2
jax: 0.10.0
libtpu: 0.0.40
codegen_flags: <defaults>
</compile_context>

<pallas_src>
import functools
import math

import jax
import jax.numpy as jnp
from jax.experimental import pallas as pl
from jax.experimental.pallas import tpu as pltpu

# ----------------------------- configuration ------------------------------
B = 2            # batch
L = 8            # sequence length
VOCAB = 33       # len(ESM alphabet)
VP = 64          # lane-padded vocab (one-hot K dim and LM-head N dim)
E = 32           # embed_dim (encoder and decoder transformer)
HEADS = 4
DH = E // HEADS
FFN = 4 * E
N_LAYERS = 1

ENC_MLP_HIDDENS = [E, 16]                       # get_hiddens([16], input_dim=E)
LATENT_PER_POS = ENC_MLP_HIDDENS[-1] // 2       # 8
LAT = L * LATENT_PER_POS                        # 64
DEC_MLP_HIDDENS = [LATENT_PER_POS, 16, E]       # get_hiddens([16], in=8, out=E)
REG_HIDDENS = [LAT, 32, 2]                      # regressor head on `mean`

LN_EPS = 1e-5
MM_DTYPE = jnp.bfloat16                         # MXU operand dtype


# --------------------------- in-kernel helpers -----------------------------
def _ln(x, g_ref, b_ref):
    mu = jnp.mean(x, axis=-1, keepdims=True)
    var = jnp.mean((x - mu) ** 2, axis=-1, keepdims=True)
    return (x - mu) * jax.lax.rsqrt(var + LN_EPS) * g_ref[...] + b_ref[...]


def _mm(x, w_ref, b_ref, act="none"):
    """y = act(x @ W + b); bf16 operands, f32 accumulation."""
    y = jnp.dot(x.astype(MM_DTYPE), w_ref[...], preferred_element_type=jnp.float32)
    y = y + b_ref[...]
    if act == "relu":
        y = jnp.maximum(y, 0.0)
    elif act == "gelu":
        y = jax.nn.gelu(y)   # TODO(synk): tanh approx vs torch exact erf
    return y


def _tf_block(x, lyr):
    """Pre-LN transformer block on a (L, E) tile, fused QKV, per-head 8x8 attn."""
    hn = _ln(x, lyr["ln1_g"], lyr["ln1_b"])
    qkv = _mm(hn, lyr["wqkv"], lyr["bqkv"])                      # (L, 3E)
    q = qkv[:, 0:E]
    k = qkv[:, E:2 * E]
    v = qkv[:, 2 * E:3 * E]
    scale = 1.0 / math.sqrt(DH)
    heads = []
    for h in range(HEADS):                                       # static loop
        lo, hi = h * DH, (h + 1) * DH
        qh = q[:, lo:hi].astype(MM_DTYPE)
        kh = k[:, lo:hi].astype(MM_DTYPE)
        vh = v[:, lo:hi].astype(MM_DTYPE)
        s = jax.lax.dot_general(qh, kh, (((1,), (1,)), ((), ())),
                                preferred_element_type=jnp.float32) * scale
        s = s - jnp.max(s, axis=-1, keepdims=True)
        p = jnp.exp(s)
        p = p * pl.reciprocal(jnp.sum(p, axis=-1, keepdims=True), approx=True)
        heads.append(jnp.dot(p.astype(MM_DTYPE), vh,
                             preferred_element_type=jnp.float32))
    attn = jnp.concatenate(heads, axis=-1)                       # (L, E) lane-dense
    x = x + _mm(attn, lyr["wo"], lyr["bo"])
    hn2 = _ln(x, lyr["ln2_g"], lyr["ln2_b"])
    ff = _mm(hn2, lyr["w1"], lyr["b1"], act="gelu")
    return x + _mm(ff, lyr["w2"], lyr["b2"])


def _transformer(x, tf):
    for lyr in tf["layers"]:
        x = _tf_block(x, lyr)
    return _ln(x, tf["lnf_g"], tf["lnf_b"])


# ------------------------------ fused kernel -------------------------------
def _protein_vae_kernel(tok_sref, *refs, treedef, n_weight_leaves):
    b = pl.program_id(0)
    w_leaves = refs[:n_weight_leaves]
    eps_ref = refs[n_weight_leaves]
    logits_ref, mean_ref, logvar_ref, preds_ref = refs[n_weight_leaves + 1:]
    W = jax.tree_util.tree_unflatten(treedef, list(w_leaves))    # pytree of refs

    # ---- token embedding: gather-free one-hot @ table (MXU) ----
    vocab_iota = jax.lax.broadcasted_iota(jnp.int32, (1, VP), 1)
    oh_rows = [(vocab_iota == tok_sref[b, l]).astype(jnp.float32) for l in range(L)]
    onehot = jnp.concatenate(oh_rows, axis=0)                    # (L, VP)
    emb = jnp.dot(onehot.astype(MM_DTYPE), W["enc"]["embed"][...],
                  preferred_element_type=jnp.float32)            # (L, E)

    # ---- encoder transformer ----
    rep = _transformer(emb + W["enc"]["pos"][...], W["enc"])     # (L, E)

    # ---- encoder MLP (single linear E -> 16, no activation) ----
    ph = _mm(rep, W["enc_mlp"][0]["w"], W["enc_mlp"][0]["b"])    # (L, 16)

    # ---- flatten(1) + chunk(2): rows 0..3 -> mean, rows 4..7 -> logvar ----
    half = L // 2
    mean_flat = jnp.concatenate([ph[r:r + 1, :] for r in range(half)], axis=1)       # (1, LAT)
    logvar_flat = jnp.concatenate([ph[r:r + 1, :] for r in range(half, L)], axis=1)  # (1, LAT)
    mean_ref[0] = mean_flat
    logvar_ref[0] = logvar_flat

    # ---- reparameterize (rows layout avoids in-kernel reshapes) ----
    eps_rows = eps_ref[0]                                        # (half, 16)
    z_rows = ph[0:half, :] + eps_rows * jnp.exp(0.5 * ph[half:L, :])
    # z.reshape(B, L, LATENT_PER_POS): row 2r <- z_rows[r, :8], row 2r+1 <- z_rows[r, 8:]
    z_pieces = []
    for r in range(half):
        z_pieces.append(z_rows[r:r + 1, 0:LATENT_PER_POS])
        z_pieces.append(z_rows[r:r + 1, LATENT_PER_POS:2 * LATENT_PER_POS])
    z3d = jnp.concatenate(z_pieces, axis=0)                      # (L, LATENT_PER_POS)

    # ---- regressor head on `mean` (+tanh in-kernel) ----
    hr = _mm(mean_flat, W["reg"][0]["w"], W["reg"][0]["b"], act="relu")   # (1, 32)
    pr = _mm(hr, W["reg"][1]["w"], W["reg"][1]["b"])                      # (1, 2)
    preds_ref[0] = jnp.tanh(pr)

    # ---- decoder MLP (8 -> 16 relu -> 32) ----
    hd = _mm(z3d, W["dec_mlp"][0]["w"], W["dec_mlp"][0]["b"], act="relu")
    pd = _mm(hd, W["dec_mlp"][1]["w"], W["dec_mlp"][1]["b"])              # (L, E)

    # ---- decoder transformer (reference padding mask is all-False) ----
    repd = _transformer(pd + W["dec"]["pos"][...], W["dec"])              # (L, E)

    # ---- RobertaLMHead: dense + gelu + LN + (tied-shape) projection ----
    hh = _mm(repd, W["lm"]["dense_w"], W["lm"]["dense_b"], act="gelu")
    hh = _ln(hh, W["lm"]["ln_g"], W["lm"]["ln_b"])
    logits_ref[0] = _mm(hh, W["lm"]["proj_w"], W["lm"]["proj_b"])         # (L, VP) lane-dense


# ------------------------------ parameter init -----------------------------
def _init_linear(key, fan_in, fan_out):
    return {"w": jax.random.normal(key, (fan_in, fan_out), jnp.float32) * 0.02,
            "b": jnp.zeros((fan_out,), jnp.float32)}


def _init_transformer(key, with_embed_tokens):
    keys = jax.random.split(key, 2 + N_LAYERS)
    p = {"pos": jax.random.normal(keys[0], (L, E), jnp.float32) * 0.02,
         "lnf_g": jnp.ones((E,), jnp.float32),
         "lnf_b": jnp.zeros((E,), jnp.float32),
         "layers": []}
    if with_embed_tokens:
        p["embed"] = jax.random.normal(keys[1], (VOCAB, E), jnp.float32) * 0.02
    for i in range(N_LAYERS):
        lk = jax.random.split(keys[2 + i], 6)
        p["layers"].append({
            "ln1_g": jnp.ones((E,), jnp.float32), "ln1_b": jnp.zeros((E,), jnp.float32),
            "wq": _init_linear(lk[0], E, E), "wk": _init_linear(lk[1], E, E),
            "wv": _init_linear(lk[2], E, E), "wo": _init_linear(lk[3], E, E),
            "ln2_g": jnp.ones((E,), jnp.float32), "ln2_b": jnp.zeros((E,), jnp.float32),
            "w1": _init_linear(lk[4], E, FFN), "w2": _init_linear(lk[5], FFN, E)})
    return p


def _init_mlp(key, hiddens):
    keys = jax.random.split(key, len(hiddens) - 1)
    return [_init_linear(keys[i], hiddens[i], hiddens[i + 1])
            for i in range(len(hiddens) - 1)]


def init_params(key):
    k = jax.random.split(key, 7)
    return {
        "enc_tf": _init_transformer(k[0], True),
        "enc_mlp": _init_mlp(k[1], ENC_MLP_HIDDENS),
        "reg": _init_mlp(k[2], REG_HIDDENS),
        "dec_mlp": _init_mlp(k[3], DEC_MLP_HIDDENS),
        "dec_tf": _init_transformer(k[4], False),
        "lm_head": {
            "dense": _init_linear(k[6], E, E),
            "ln_g": jnp.ones((E,), jnp.float32),
            "ln_b": jnp.zeros((E,), jnp.float32),
            # torch.randn(embed_tokens.weight.shape): NOT tied, std 1.0
            "weight": jax.random.normal(k[5], (VOCAB, E), jnp.float32),
            "bias": jnp.zeros((VOCAB,), jnp.float32),
        },
    }


# ------------------- one-time packing into kernel-ready form ----------------
def _row(v):
    return jnp.asarray(v, jnp.float32).reshape(1, -1)


def _pack_tf(tp, with_embed):
    layers = []
    for lyr in tp["layers"]:
        wqkv = jnp.concatenate([lyr["wq"]["w"], lyr["wk"]["w"], lyr["wv"]["w"]], axis=1)
        bqkv = jnp.concatenate([lyr["wq"]["b"], lyr["wk"]["b"], lyr["wv"]["b"]], axis=0)
        layers.append({
            "ln1_g": _row(lyr["ln1_g"]), "ln1_b": _row(lyr["ln1_b"]),
            "wqkv": wqkv.astype(MM_DTYPE), "bqkv": _row(bqkv),
            "wo": lyr["wo"]["w"].astype(MM_DTYPE), "bo": _row(lyr["wo"]["b"]),
            "ln2_g": _row(lyr["ln2_g"]), "ln2_b": _row(lyr["ln2_b"]),
            "w1": lyr["w1"]["w"].astype(MM_DTYPE), "b1": _row(lyr["w1"]["b"]),
            "w2": lyr["w2"]["w"].astype(MM_DTYPE), "b2": _row(lyr["w2"]["b"]),
        })
    out = {"pos": tp["pos"].astype(jnp.float32),
           "lnf_g": _row(tp["lnf_g"]), "lnf_b": _row(tp["lnf_b"]),
           "layers": layers}
    if with_embed:
        emb = jnp.zeros((VP, E), jnp.float32).at[:VOCAB].set(tp["embed"])
        out["embed"] = emb.astype(MM_DTYPE)
    return out


def _pack_mlp(layers):
    return [{"w": l["w"].astype(MM_DTYPE), "b": _row(l["b"])} for l in layers]


def pack_params(p):
    lm = p["lm_head"]
    proj_w = jnp.zeros((E, VP), jnp.float32).at[:, :VOCAB].set(lm["weight"].T)
    proj_b = jnp.zeros((1, VP), jnp.float32).at[:, :VOCAB].set(lm["bias"][None, :])
    return {
        "enc": _pack_tf(p["enc_tf"], True),
        "enc_mlp": _pack_mlp(p["enc_mlp"]),
        "reg": _pack_mlp(p["reg"]),
        "dec_mlp": _pack_mlp(p["dec_mlp"]),
        "dec": _pack_tf(p["dec_tf"], False),
        "lm": {"dense_w": lm["dense"]["w"].astype(MM_DTYPE),
               "dense_b": _row(lm["dense"]["b"]),
               "ln_g": _row(lm["ln_g"]), "ln_b": _row(lm["ln_b"]),
               "proj_w": proj_w.astype(MM_DTYPE), "proj_b": proj_b},
    }


# ------------------------------- wrapper ------------------------------------
def make_forward(kparams):
    leaves, treedef = jax.tree_util.tree_flatten(kparams)
    n_w = len(leaves)

    def whole_spec(arr):
        nd = arr.ndim
        return pl.BlockSpec(arr.shape, lambda b, tok, nd=nd: (0,) * nd)

    in_specs = [whole_spec(x) for x in leaves]
    in_specs.append(                                   # eps, per-batch block
        pl.BlockSpec((1, L // 2, 2 * LATENT_PER_POS), lambda b, tok: (b, 0, 0)))

    out_shape = (
        jax.ShapeDtypeStruct((B, L, VP), jnp.float32),   # lane-padded logits
        jax.ShapeDtypeStruct((B, 1, LAT), jnp.float32),  # mean
        jax.ShapeDtypeStruct((B, 1, LAT), jnp.float32),  # logvar
        jax.ShapeDtypeStruct((B, 1, 2), jnp.float32),    # tanh(preds)
    )
    out_specs = (
        pl.BlockSpec((1, L, VP), lambda b, tok: (b, 0, 0)),
        pl.BlockSpec((1, 1, LAT), lambda b, tok: (b, 0, 0)),
        pl.BlockSpec((1, 1, LAT), lambda b, tok: (b, 0, 0)),
        pl.BlockSpec((1, 1, 2), lambda b, tok: (b, 0, 0)),
    )

    fused = pl.pallas_call(
        functools.partial(_protein_vae_kernel, treedef=treedef, n_weight_leaves=n_w),
        out_shape=out_shape,
        grid_spec=pltpu.PrefetchScalarGridSpec(
            num_scalar_prefetch=1,          # tokens -> SMEM
            grid=(B,),
            in_specs=in_specs,
            out_specs=out_specs,
        ),
        compiler_params=pltpu.CompilerParams(
            dimension_semantics=("parallel",),   # batch axis -> 2nd TC on v7x
        ),
    )

    @jax.jit
    def forward(tokens, eps):
        eps_rows = eps.reshape(B, L // 2, 2 * LATENT_PER_POS)
        logits_pad, mean3, logvar3, preds3 = fused(tokens, *leaves, eps_rows)
        logits = logits_pad[..., :VOCAB]
        mean = mean3.reshape(B, LAT)
        logvar = logvar3.reshape(B, LAT)
        pred_ddG = preds3[:, 0, 0]
        pred_dS = preds3[:, 0, 1]
        return logits, mean, logvar, pred_ddG, pred_dS

    return forward


# ------------------------------------ main ----------------------------------
if __name__ == "__main__":
    root = jax.random.PRNGKey(0)
    k_params, k_tok, k_eps = jax.random.split(root, 3)

    params = init_params(k_params)
    kparams = pack_params(params)
    forward = make_forward(kparams)

    tokens = jax.random.randint(k_tok, (B, L), 0, VOCAB, dtype=jnp.int32)
    eps = jax.random.normal(k_eps, (B, LAT), jnp.float32)

    logits, mean, logvar, pred_ddG, pred_dS = forward(tokens, eps)
    jax.block_until_ready((logits, mean, logvar, pred_ddG, pred_dS))

    assert logits.shape == (B, L, VOCAB)
    assert mean.shape == (B, LAT) and logvar.shape == (B, LAT)
    assert pred_ddG.shape == (B,) and pred_dS.shape == (B,)
    assert bool(jnp.all(jnp.isfinite(logits)))
    assert bool(jnp.all(jnp.isfinite(mean)))
    print("KERNEL_OK")
</pallas_src>

<mosaic_0001>
module attributes {stable_mosaic.version = 11 : i64} {
  func.func @_protein_vae_kernel(%arg0: i32, %arg1: memref<2x8xi32, #tpu.memory_space<smem>>, %arg2: memref<1x128xf32, #tpu.memory_space<vmem>>, %arg3: memref<1x32xf32, #tpu.memory_space<vmem>>, %arg4: memref<1x32xf32, #tpu.memory_space<vmem>>, %arg5: memref<1x96xf32, #tpu.memory_space<vmem>>, %arg6: memref<1x32xf32, #tpu.memory_space<vmem>>, %arg7: memref<1x32xf32, #tpu.memory_space<vmem>>, %arg8: memref<1x32xf32, #tpu.memory_space<vmem>>, %arg9: memref<1x32xf32, #tpu.memory_space<vmem>>, %arg10: memref<32x128xbf16, #tpu.memory_space<vmem>>, %arg11: memref<128x32xbf16, #tpu.memory_space<vmem>>, %arg12: memref<32x32xbf16, #tpu.memory_space<vmem>>, %arg13: memref<32x96xbf16, #tpu.memory_space<vmem>>, %arg14: memref<1x32xf32, #tpu.memory_space<vmem>>, %arg15: memref<1x32xf32, #tpu.memory_space<vmem>>, %arg16: memref<8x32xf32, #tpu.memory_space<vmem>>, %arg17: memref<1x16xf32, #tpu.memory_space<vmem>>, %arg18: memref<8x16xbf16, #tpu.memory_space<vmem>>, %arg19: memref<1x32xf32, #tpu.memory_space<vmem>>, %arg20: memref<16x32xbf16, #tpu.memory_space<vmem>>, %arg21: memref<64x32xbf16, #tpu.memory_space<vmem>>, %arg22: memref<1x128xf32, #tpu.memory_space<vmem>>, %arg23: memref<1x32xf32, #tpu.memory_space<vmem>>, %arg24: memref<1x32xf32, #tpu.memory_space<vmem>>, %arg25: memref<1x96xf32, #tpu.memory_space<vmem>>, %arg26: memref<1x32xf32, #tpu.memory_space<vmem>>, %arg27: memref<1x32xf32, #tpu.memory_space<vmem>>, %arg28: memref<1x32xf32, #tpu.memory_space<vmem>>, %arg29: memref<1x32xf32, #tpu.memory_space<vmem>>, %arg30: memref<32x128xbf16, #tpu.memory_space<vmem>>, %arg31: memref<128x32xbf16, #tpu.memory_space<vmem>>, %arg32: memref<32x32xbf16, #tpu.memory_space<vmem>>, %arg33: memref<32x96xbf16, #tpu.memory_space<vmem>>, %arg34: memref<1x32xf32, #tpu.memory_space<vmem>>, %arg35: memref<1x32xf32, #tpu.memory_space<vmem>>, %arg36: memref<8x32xf32, #tpu.memory_space<vmem>>, %arg37: memref<1x16xf32, #tpu.memory_space<vmem>>, %arg38: memref<32x16xbf16, #tpu.memory_space<vmem>>, %arg39: memref<1x32xf32, #tpu.memory_space<vmem>>, %arg40: memref<32x32xbf16, #tpu.memory_space<vmem>>, %arg41: memref<1x32xf32, #tpu.memory_space<vmem>>, %arg42: memref<1x32xf32, #tpu.memory_space<vmem>>, %arg43: memref<1x64xf32, #tpu.memory_space<vmem>>, %arg44: memref<32x64xbf16, #tpu.memory_space<vmem>>, %arg45: memref<1x32xf32, #tpu.memory_space<vmem>>, %arg46: memref<64x32xbf16, #tpu.memory_space<vmem>>, %arg47: memref<1x2xf32, #tpu.memory_space<vmem>>, %arg48: memref<32x2xbf16, #tpu.memory_space<vmem>>, %arg49: memref<1x4x16xf32, #tpu.memory_space<vmem>>, %arg50: memref<1x8x64xf32, #tpu.memory_space<vmem>>, %arg51: memref<1x1x64xf32, #tpu.memory_space<vmem>>, %arg52: memref<1x1x64xf32, #tpu.memory_space<vmem>>, %arg53: memref<1x1x2xf32, #tpu.memory_space<vmem>>) attributes {dimension_semantics = [#tpu.dimension_semantics<parallel>], iteration_bounds = array<i64: 2>, scalar_prefetch = 1 : i64, scratch_operands = 0 : i64, tpu.core_type = #tpu.core_type<tc>, window_params = [{pipeline_mode = #tpu.pipeline_mode<synchronous>, transform_indices = @transform_0, window_bounds = array<i64: 1, 128>}, {pipeline_mode = #tpu.pipeline_mode<synchronous>, transform_indices = @transform_1, window_bounds = array<i64: 1, 32>}, {pipeline_mode = #tpu.pipeline_mode<synchronous>, transform_indices = @transform_2, window_bounds = array<i64: 1, 32>}, {pipeline_mode = #tpu.pipeline_mode<synchronous>, transform_indices = @transform_3, window_bounds = array<i64: 1, 96>}, {pipeline_mode = #tpu.pipeline_mode<synchronous>, transform_indices = @transform_4, window_bounds = array<i64: 1, 32>}, {pipeline_mode = #tpu.pipeline_mode<synchronous>, transform_indices = @transform_5, window_bounds = array<i64: 1, 32>}, {pipeline_mode = #tpu.pipeline_mode<synchronous>, transform_indices = @transform_6, window_bounds = array<i64: 1, 32>}, {pipeline_mode = #tpu.pipeline_mode<synchronous>, transform_indices = @transform_7, window_bounds = array<i64: 1, 32>}, {pipeline_mode = #tpu.pipeline_mode<synchronous>, transform_indices = @transform_8, window_bounds = array<i64: 32, 128>}, {pipeline_mode = #tpu.pipeline_mode<synchronous>, transform_indices = @transform_9, window_bounds = array<i64: 128, 32>}, {pipeline_mode = #tpu.pipeline_mode<synchronous>, transform_indices = @transform_10, window_bounds = array<i64: 32, 32>}, {pipeline_mode = #tpu.pipeline_mode<synchronous>, transform_indices = @transform_11, window_bounds = array<i64: 32, 96>}, {pipeline_mode = #tpu.pipeline_mode<synchronous>, transform_indices = @transform_12, window_bounds = array<i64: 1, 32>}, {pipeline_mode = #tpu.pipeline_mode<synchronous>, transform_indices = @transform_13, window_bounds = array<i64: 1, 32>}, {pipeline_mode = #tpu.pipeline_mode<synchronous>, transform_indices = @transform_14, window_bounds = array<i64: 8, 32>}, {pipeline_mode = #tpu.pipeline_mode<synchronous>, transform_indices = @transform_15, window_bounds = array<i64: 1, 16>}, {pipeline_mode = #tpu.pipeline_mode<synchronous>, transform_indices = @transform_16, window_bounds = array<i64: 8, 16>}, {pipeline_mode = #tpu.pipeline_mode<synchronous>, transform_indices = @transform_17, window_bounds = array<i64: 1, 32>}, {pipeline_mode = #tpu.pipeline_mode<synchronous>, transform_indices = @transform_18, window_bounds = array<i64: 16, 32>}, {pipeline_mode = #tpu.pipeline_mode<synchronous>, transform_indices = @transform_19, window_bounds = array<i64: 64, 32>}, {pipeline_mode = #tpu.pipeline_mode<synchronous>, transform_indices = @transform_20, window_bounds = array<i64: 1, 128>}, {pipeline_mode = #tpu.pipeline_mode<synchronous>, transform_indices = @transform_21, window_bounds = array<i64: 1, 32>}, {pipeline_mode = #tpu.pipeline_mode<synchronous>, transform_indices = @transform_22, window_bounds = array<i64: 1, 32>}, {pipeline_mode = #tpu.pipeline_mode<synchronous>, transform_indices = @transform_23, window_bounds = array<i64: 1, 96>}, {pipeline_mode = #tpu.pipeline_mode<synchronous>, transform_indices = @transform_24, window_bounds = array<i64: 1, 32>}, {pipeline_mode = #tpu.pipeline_mode<synchronous>, transform_indices = @transform_25, window_bounds = array<i64: 1, 32>}, {pipeline_mode = #tpu.pipeline_mode<synchronous>, transform_indices = @transform_26, window_bounds = array<i64: 1, 32>}, {pipeline_mode = #tpu.pipeline_mode<synchronous>, transform_indices = @transform_27, window_bounds = array<i64: 1, 32>}, {pipeline_mode = #tpu.pipeline_mode<synchronous>, transform_indices = @transform_28, window_bounds = array<i64: 32, 128>}, {pipeline_mode = #tpu.pipeline_mode<synchronous>, transform_indices = @transform_29, window_bounds = array<i64: 128, 32>}, {pipeline_mode = #tpu.pipeline_mode<synchronous>, transform_indices = @transform_30, window_bounds = array<i64: 32, 32>}, {pipeline_mode = #tpu.pipeline_mode<synchronous>, transform_indices = @transform_31, window_bounds = array<i64: 32, 96>}, {pipeline_mode = #tpu.pipeline_mode<synchronous>, transform_indices = @transform_32, window_bounds = array<i64: 1, 32>}, {pipeline_mode = #tpu.pipeline_mode<synchronous>, transform_indices = @transform_33, window_bounds = array<i64: 1, 32>}, {pipeline_mode = #tpu.pipeline_mode<synchronous>, transform_indices = @transform_34, window_bounds = array<i64: 8, 32>}, {pipeline_mode = #tpu.pipeline_mode<synchronous>, transform_indices = @transform_35, window_bounds = array<i64: 1, 16>}, {pipeline_mode = #tpu.pipeline_mode<synchronous>, transform_indices = @transform_36, window_bounds = array<i64: 32, 16>}, {pipeline_mode = #tpu.pipeline_mode<synchronous>, transform_indices = @transform_37, window_bounds = array<i64: 1, 32>}, {pipeline_mode = #tpu.pipeline_mode<synchronous>, transform_indices = @transform_38, window_bounds = array<i64: 32, 32>}, {pipeline_mode = #tpu.pipeline_mode<synchronous>, transform_indices = @transform_39, window_bounds = array<i64: 1, 32>}, {pipeline_mode = #tpu.pipeline_mode<synchronous>, transform_indices = @transform_40, window_bounds = array<i64: 1, 32>}, {pipeline_mode = #tpu.pipeline_mode<synchronous>, transform_indices = @transform_41, window_bounds = array<i64: 1, 64>}, {pipeline_mode = #tpu.pipeline_mode<synchronous>, transform_indices = @transform_42, window_bounds = array<i64: 32, 64>}, {pipeline_mode = #tpu.pipeline_mode<synchronous>, transform_indices = @transform_43, window_bounds = array<i64: 1, 32>}, {pipeline_mode = #tpu.pipeline_mode<synchronous>, transform_indices = @transform_44, window_bounds = array<i64: 64, 32>}, {pipeline_mode = #tpu.pipeline_mode<synchronous>, transform_indices = @transform_45, window_bounds = array<i64: 1, 2>}, {pipeline_mode = #tpu.pipeline_mode<synchronous>, transform_indices = @transform_46, window_bounds = array<i64: 32, 2>}, {transform_indices = @transform_47, window_bounds = array<i64: 1, 4, 16>}, {transform_indices = @transform_48, window_bounds = array<i64: 1, 8, 64>}, {transform_indices = @transform_49, window_bounds = array<i64: 1, 1, 64>}, {transform_indices = @transform_50, window_bounds = array<i64: 1, 1, 64>}, {transform_indices = @transform_51, window_bounds = array<i64: 1, 1, 2>}]} {
    %0 = tpu.iota {dimensions = array<i32: 1>} : vector<1x64xi32>
    %1 = arith.index_cast %arg0 : i32 to index
    %c0 = arith.constant 0 : index
    %2 = memref.load %arg1[%1, %c0] : memref<2x8xi32, #tpu.memory_space<smem>>
    %3 = vector.broadcast %2 : i32 to vector<1x64xi32>
    %4 = arith.cmpi eq, %0, %3 : vector<1x64xi32>
    %5 = arith.extui %4 : vector<1x64xi1> to vector<1x64xi32>
    %6 = arith.sitofp %5 : vector<1x64xi32> to vector<1x64xf32>
    %7 = arith.index_cast %arg0 : i32 to index
    %c1 = arith.constant 1 : index
    %8 = memref.load %arg1[%7, %c1] : memref<2x8xi32, #tpu.memory_space<smem>>
    %9 = vector.broadcast %8 : i32 to vector<1x64xi32>
    %10 = arith.cmpi eq, %0, %9 : vector<1x64xi32>
    %11 = arith.extui %10 : vector<1x64xi1> to vector<1x64xi32>
    %12 = arith.sitofp %11 : vector<1x64xi32> to vector<1x64xf32>
    %13 = arith.index_cast %arg0 : i32 to index
    %c2 = arith.constant 2 : index
    %14 = memref.load %arg1[%13, %c2] : memref<2x8xi32, #tpu.memory_space<smem>>
    %15 = vector.broadcast %14 : i32 to vector<1x64xi32>
    %16 = arith.cmpi eq, %0, %15 : vector<1x64xi32>
    %17 = arith.extui %16 : vector<1x64xi1> to vector<1x64xi32>
    %18 = arith.sitofp %17 : vector<1x64xi32> to vector<1x64xf32>
    %19 = arith.index_cast %arg0 : i32 to index
    %c3 = arith.constant 3 : index
    %20 = memref.load %arg1[%19, %c3] : memref<2x8xi32, #tpu.memory_space<smem>>
    %21 = vector.broadcast %20 : i32 to vector<1x64xi32>
    %22 = arith.cmpi eq, %0, %21 : vector<1x64xi32>
    %23 = arith.extui %22 : vector<1x64xi1> to vector<1x64xi32>
    %24 = arith.sitofp %23 : vector<1x64xi32> to vector<1x64xf32>
    %25 = arith.index_cast %arg0 : i32 to index
    %c4 = arith.constant 4 : index
    %26 = memref.load %arg1[%25, %c4] : memref<2x8xi32, #tpu.memory_space<smem>>
    %27 = vector.broadcast %26 : i32 to vector<1x64xi32>
    %28 = arith.cmpi eq, %0, %27 : vector<1x64xi32>
    %29 = arith.extui %28 : vector<1x64xi1> to vector<1x64xi32>
    %30 = arith.sitofp %29 : vector<1x64xi32> to vector<1x64xf32>
    %31 = arith.index_cast %arg0 : i32 to index
    %c5 = arith.constant 5 : index
    %32 = memref.load %arg1[%31, %c5] : memref<2x8xi32, #tpu.memory_space<smem>>
    %33 = vector.broadcast %32 : i32 to vector<1x64xi32>
    %34 = arith.cmpi eq, %0, %33 : vector<1x64xi32>
    %35 = arith.extui %34 : vector<1x64xi1> to vector<1x64xi32>
    %36 = arith.sitofp %35 : vector<1x64xi32> to vector<1x64xf32>
    %37 = arith.index_cast %arg0 : i32 to index
    %c6 = arith.constant 6 : index
    %38 = memref.load %arg1[%37, %c6] : memref<2x8xi32, #tpu.memory_space<smem>>
    %39 = vector.broadcast %38 : i32 to vector<1x64xi32>
    %40 = arith.cmpi eq, %0, %39 : vector<1x64xi32>
    %41 = arith.extui %40 : vector<1x64xi1> to vector<1x64xi32>
    %42 = arith.sitofp %41 : vector<1x64xi32> to vector<1x64xf32>
    %43 = arith.index_cast %arg0 : i32 to index
    %c7 = arith.constant 7 : index
    %44 = memref.load %arg1[%43, %c7] : memref<2x8xi32, #tpu.memory_space<smem>>
    %45 = vector.broadcast %44 : i32 to vector<1x64xi32>
    %46 = arith.cmpi eq, %0, %45 : vector<1x64xi32>
    %47 = arith.extui %46 : vector<1x64xi1> to vector<1x64xi32>
    %48 = arith.sitofp %47 : vector<1x64xi32> to vector<1x64xf32>
    %49 = tpu.concatenate %6, %12, %18, %24, %30, %36, %42, %48 in 0 : vector<1x64xf32>, vector<1x64xf32>, vector<1x64xf32>, vector<1x64xf32>, vector<1x64xf32>, vector<1x64xf32>, vector<1x64xf32>, vector<1x64xf32> -> vector<8x64xf32>
    %50 = arith.truncf %49 : vector<8x64xf32> to vector<8x64xbf16>
    %c0_0 = arith.constant 0 : index
    %c0_1 = arith.constant 0 : index
    %51 = vector.load %arg21[%c0_0, %c0_1] : memref<64x32xbf16, #tpu.memory_space<vmem>>, vector<64x32xbf16>
    %cst = arith.constant dense<0.000000e+00> : vector<8x32xf32>
    %52 = tpu.matmul %50, %51, %cst {dimension_numbers = #tpu.dot_dimension_numbers<[1], [0], [0], [1], [0, 0, 1, 1], [], []>} : vector<8x64xbf16>, vector<64x32xbf16>, vector<8x32xf32> -> vector<8x32xf32>
    %c0_2 = arith.constant 0 : index
    %c0_3 = arith.constant 0 : index
    %53 = vector.load %arg36[%c0_2, %c0_3] : memref<8x32xf32, #tpu.memory_space<vmem>>, vector<8x32xf32>
    %54 = arith.addf %52, %53 : vector<8x32xf32>
    %cst_4 = arith.constant dense<0.000000e+00> : vector<8xf32>
    %55 = vector.multi_reduction <add>, %54, %cst_4 [1] : vector<8x32xf32> to vector<8xf32>
    %56 = vector.shape_cast %55 : vector<8xf32> to vector<8x1xf32>
    %cst_5 = arith.constant 3.200000e+01 : f32
    %57 = vector.broadcast %cst_5 : f32 to vector<8x1xf32>
    %58 = arith.divf %56, %57 : vector<8x1xf32>
    %59 = vector.broadcast %58 : vector<8x1xf32> to vector<8x32xf32>
    %60 = arith.subf %54, %59 : vector<8x32xf32>
    %61 = arith.mulf %60, %60 : vector<8x32xf32>
    %cst_6 = arith.constant dense<0.000000e+00> : vector<8xf32>
    %62 = vector.multi_reduction <add>, %61, %cst_6 [1] : vector<8x32xf32> to vector<8xf32>
    %63 = vector.shape_cast %62 : vector<8xf32> to vector<8x1xf32>
    %cst_7 = arith.constant 3.200000e+01 : f32
    %64 = vector.broadcast %cst_7 : f32 to vector<8x1xf32>
    %65 = arith.divf %63, %64 : vector<8x1xf32>
    %66 = vector.broadcast %58 : vector<8x1xf32> to vector<8x32xf32>
    %67 = arith.subf %54, %66 : vector<8x32xf32>
    %cst_8 = arith.constant 9.99999974E-6 : f32
    %68 = vector.broadcast %cst_8 : f32 to vector<8x1xf32>
    %69 = arith.addf %65, %68 : vector<8x1xf32>
    %70 = math.rsqrt %69 : vector<8x1xf32>
    %71 = vector.broadcast %70 : vector<8x1xf32> to vector<8x32xf32>
    %72 = arith.mulf %67, %71 : vector<8x32xf32>
    %c0_9 = arith.constant 0 : index
    %c0_10 = arith.constant 0 : index
    %73 = vector.load %arg27[%c0_9, %c0_10] : memref<1x32xf32, #tpu.memory_space<vmem>>, vector<1x32xf32>
    %74 = vector.broadcast %73 : vector<1x32xf32> to vector<8x32xf32>
    %75 = arith.mulf %72, %74 : vector<8x32xf32>
    %c0_11 = arith.constant 0 : index
    %c0_12 = arith.constant 0 : index
    %76 = vector.load %arg26[%c0_11, %c0_12] : memref<1x32xf32, #tpu.memory_space<vmem>>, vector<1x32xf32>
    %77 = vector.broadcast %76 : vector<1x32xf32> to vector<8x32xf32>
    %78 = arith.addf %75, %77 : vector<8x32xf32>
    %79 = arith.truncf %78 : vector<8x32xf32> to vector<8x32xbf16>
    %c0_13 = arith.constant 0 : index
    %c0_14 = arith.constant 0 : index
    %80 = vector.load %arg33[%c0_13, %c0_14] : memref<32x96xbf16, #tpu.memory_space<vmem>>, vector<32x96xbf16>
    %cst_15 = arith.constant dense<0.000000e+00> : vector<8x96xf32>
    %81 = tpu.matmul %79, %80, %cst_15 {dimension_numbers = #tpu.dot_dimension_numbers<[1], [0], [0], [1], [0, 0, 1, 1], [], []>} : vector<8x32xbf16>, vector<32x96xbf16>, vector<8x96xf32> -> vector<8x96xf32>
    %c0_16 = arith.constant 0 : index
    %c0_17 = arith.constant 0 : index
    %82 = vector.load %arg25[%c0_16, %c0_17] : memref<1x96xf32, #tpu.memory_space<vmem>>, vector<1x96xf32>
    %83 = vector.broadcast %82 : vector<1x96xf32> to vector<8x96xf32>
    %84 = arith.addf %81, %83 : vector<8x96xf32>
    %85 = vector.extract_strided_slice %84 {offsets = [0, 0], sizes = [8, 32], strides = [1, 1]} : vector<8x96xf32> to vector<8x32xf32>
    %86 = vector.extract_strided_slice %84 {offsets = [0, 32], sizes = [8, 32], strides = [1, 1]} : vector<8x96xf32> to vector<8x32xf32>
    %87 = vector.extract_strided_slice %84 {offsets = [0, 64], sizes = [8, 32], strides = [1, 1]} : vector<8x96xf32> to vector<8x32xf32>
    %88 = vector.extract_strided_slice %85 {offsets = [0, 0], sizes = [8, 8], strides = [1, 1]} : vector<8x32xf32> to vector<8x8xf32>
    %89 = arith.truncf %88 : vector<8x8xf32> to vector<8x8xbf16>
    %90 = vector.extract_strided_slice %86 {offsets = [0, 0], sizes = [8, 8], strides = [1, 1]} : vector<8x32xf32> to vector<8x8xf32>
    %91 = arith.truncf %90 : vector<8x8xf32> to vector<8x8xbf16>
    %92 = vector.extract_strided_slice %87 {offsets = [0, 0], sizes = [8, 8], strides = [1, 1]} : vector<8x32xf32> to vector<8x8xf32>
    %93 = arith.truncf %92 : vector<8x8xf32> to vector<8x8xbf16>
    %cst_18 = arith.constant dense<0.000000e+00> : vector<8x8xf32>
    %94 = tpu.matmul %89, %91, %cst_18 {dimension_numbers = #tpu.dot_dimension_numbers<[1], [1], [0], [0], [0, 0, 1, 0], [], []>} : vector<8x8xbf16>, vector<8x8xbf16>, vector<8x8xf32> -> vector<8x8xf32>
    %cst_19 = arith.constant 0.353553385 : f32
    %95 = vector.broadcast %cst_19 : f32 to vector<8x8xf32>
    %96 = arith.mulf %94, %95 : vector<8x8xf32>
    %cst_20 = arith.constant dense<0xFF800000> : vector<8xf32>
    %97 = vector.multi_reduction <maximumf>, %96, %cst_20 [1] : vector<8x8xf32> to vector<8xf32>
    %98 = vector.shape_cast %97 : vector<8xf32> to vector<8x1xf32>
    %99 = vector.broadcast %98 : vector<8x1xf32> to vector<8x8xf32>
    %100 = arith.subf %96, %99 : vector<8x8xf32>
    %101 = math.exp %100 : vector<8x8xf32>
    %cst_21 = arith.constant dense<0.000000e+00> : vector<8xf32>
    %102 = vector.multi_reduction <add>, %101, %cst_21 [1] : vector<8x8xf32> to vector<8xf32>
    %103 = vector.shape_cast %102 : vector<8xf32> to vector<8x1xf32>
    %104 = tpu.reciprocal %103 {approx = true} : vector<8x1xf32> -> vector<8x1xf32>
    %105 = vector.broadcast %104 : vector<8x1xf32> to vector<8x8xf32>
    %106 = arith.mulf %101, %105 : vector<8x8xf32>
    %107 = arith.truncf %106 : vector<8x8xf32> to vector<8x8xbf16>
    %cst_22 = arith.constant dense<0.000000e+00> : vector<8x8xf32>
    %108 = tpu.matmul %107, %93, %cst_22 {dimension_numbers = #tpu.dot_dimension_numbers<[1], [0], [0], [1], [0, 0, 1, 1], [], []>} : vector<8x8xbf16>, vector<8x8xbf16>, vector<8x8xf32> -> vector<8x8xf32>
    %109 = vector.extract_strided_slice %85 {offsets = [0, 8], sizes = [8, 8], strides = [1, 1]} : vector<8x32xf32> to vector<8x8xf32>
    %110 = arith.truncf %109 : vector<8x8xf32> to vector<8x8xbf16>
    %111 = vector.extract_strided_slice %86 {offsets = [0, 8], sizes = [8, 8], strides = [1, 1]} : vector<8x32xf32> to vector<8x8xf32>
    %112 = arith.truncf %111 : vector<8x8xf32> to vector<8x8xbf16>
    %113 = vector.extract_strided_slice %87 {offsets = [0, 8], sizes = [8, 8], strides = [1, 1]} : vector<8x32xf32> to vector<8x8xf32>
    %114 = arith.truncf %113 : vector<8x8xf32> to vector<8x8xbf16>
    %cst_23 = arith.constant dense<0.000000e+00> : vector<8x8xf32>
    %115 = tpu.matmul %110, %112, %cst_23 {dimension_numbers = #tpu.dot_dimension_numbers<[1], [1], [0], [0], [0, 0, 1, 0], [], []>} : vector<8x8xbf16>, vector<8x8xbf16>, vector<8x8xf32> -> vector<8x8xf32>
    %cst_24 = arith.constant 0.353553385 : f32
    %116 = vector.broadcast %cst_24 : f32 to vector<8x8xf32>
    %117 = arith.mulf %115, %116 : vector<8x8xf32>
    %cst_25 = arith.constant dense<0xFF800000> : vector<8xf32>
    %118 = vector.multi_reduction <maximumf>, %117, %cst_25 [1] : vector<8x8xf32> to vector<8xf32>
    %119 = vector.shape_cast %118 : vector<8xf32> to vector<8x1xf32>
    %120 = vector.broadcast %119 : vector<8x1xf32> to vector<8x8xf32>
    %121 = arith.subf %117, %120 : vector<8x8xf32>
    %122 = math.exp %121 : vector<8x8xf32>
    %cst_26 = arith.constant dense<0.000000e+00> : vector<8xf32>
    %123 = vector.multi_reduction <add>, %122, %cst_26 [1] : vector<8x8xf32> to vector<8xf32>
    %124 = vector.shape_cast %123 : vector<8xf32> to vector<8x1xf32>
    %125 = tpu.reciprocal %124 {approx = true} : vector<8x1xf32> -> vector<8x1xf32>
    %126 = vector.broadcast %125 : vector<8x1xf32> to vector<8x8xf32>
    %127 = arith.mulf %122, %126 : vector<8x8xf32>
    %128 = arith.truncf %127 : vector<8x8xf32> to vector<8x8xbf16>
    %cst_27 = arith.constant dense<0.000000e+00> : vector<8x8xf32>
    %129 = tpu.matmul %128, %114, %cst_27 {dimension_numbers = #tpu.dot_dimension_numbers<[1], [0], [0], [1], [0, 0, 1, 1], [], []>} : vector<8x8xbf16>, vector<8x8xbf16>, vector<8x8xf32> -> vector<8x8xf32>
    %130 = vector.extract_strided_slice %85 {offsets = [0, 16], sizes = [8, 8], strides = [1, 1]} : vector<8x32xf32> to vector<8x8xf32>
    %131 = arith.truncf %130 : vector<8x8xf32> to vector<8x8xbf16>
    %132 = vector.extract_strided_slice %86 {offsets = [0, 16], sizes = [8, 8], strides = [1, 1]} : vector<8x32xf32> to vector<8x8xf32>
    %133 = arith.truncf %132 : vector<8x8xf32> to vector<8x8xbf16>
    %134 = vector.extract_strided_slice %87 {offsets = [0, 16], sizes = [8, 8], strides = [1, 1]} : vector<8x32xf32> to vector<8x8xf32>
    %135 = arith.truncf %134 : vector<8x8xf32> to vector<8x8xbf16>
    %cst_28 = arith.constant dense<0.000000e+00> : vector<8x8xf32>
    %136 = tpu.matmul %131, %133, %cst_28 {dimension_numbers = #tpu.dot_dimension_numbers<[1], [1], [0], [0], [0, 0, 1, 0], [], []>} : vector<8x8xbf16>, vector<8x8xbf16>, vector<8x8xf32> -> vector<8x8xf32>
    %cst_29 = arith.constant 0.353553385 : f32
    %137 = vector.broadcast %cst_29 : f32 to vector<8x8xf32>
    %138 = arith.mulf %136, %137 : vector<8x8xf32>
    %cst_30 = arith.constant dense<0xFF800000> : vector<8xf32>
    %139 = vector.multi_reduction <maximumf>, %138, %cst_30 [1] : vector<8x8xf32> to vector<8xf32>
    %140 = vector.shape_cast %139 : vector<8xf32> to vector<8x1xf32>
    %141 = vector.broadcast %140 : vector<8x1xf32> to vector<8x8xf32>
    %142 = arith.subf %138, %141 : vector<8x8xf32>
    %143 = math.exp %142 : vector<8x8xf32>
    %cst_31 = arith.constant dense<0.000000e+00> : vector<8xf32>
    %144 = vector.multi_reduction <add>, %143, %cst_31 [1] : vector<8x8xf32> to vector<8xf32>
    %145 = vector.shape_cast %144 : vector<8xf32> to vector<8x1xf32>
    %146 = tpu.reciprocal %145 {approx = true} : vector<8x1xf32> -> vector<8x1xf32>
    %147 = vector.broadcast %146 : vector<8x1xf32> to vector<8x8xf32>
    %148 = arith.mulf %143, %147 : vector<8x8xf32>
    %149 = arith.truncf %148 : vector<8x8xf32> to vector<8x8xbf16>
    %cst_32 = arith.constant dense<0.000000e+00> : vector<8x8xf32>
    %150 = tpu.matmul %149, %135, %cst_32 {dimension_numbers = #tpu.dot_dimension_numbers<[1], [0], [0], [1], [0, 0, 1, 1], [], []>} : vector<8x8xbf16>, vector<8x8xbf16>, vector<8x8xf32> -> vector<8x8xf32>
    %151 = vector.extract_strided_slice %85 {offsets = [0, 24], sizes = [8, 8], strides = [1, 1]} : vector<8x32xf32> to vector<8x8xf32>
    %152 = arith.truncf %151 : vector<8x8xf32> to vector<8x8xbf16>
    %153 = vector.extract_strided_slice %86 {offsets = [0, 24], sizes = [8, 8], strides = [1, 1]} : vector<8x32xf32> to vector<8x8xf32>
    %154 = arith.truncf %153 : vector<8x8xf32> to vector<8x8xbf16>
    %155 = vector.extract_strided_slice %87 {offsets = [0, 24], sizes = [8, 8], strides = [1, 1]} : vector<8x32xf32> to vector<8x8xf32>
    %156 = arith.truncf %155 : vector<8x8xf32> to vector<8x8xbf16>
    %cst_33 = arith.constant dense<0.000000e+00> : vector<8x8xf32>
    %157 = tpu.matmul %152, %154, %cst_33 {dimension_numbers = #tpu.dot_dimension_numbers<[1], [1], [0], [0], [0, 0, 1, 0], [], []>} : vector<8x8xbf16>, vector<8x8xbf16>, vector<8x8xf32> -> vector<8x8xf32>
    %cst_34 = arith.constant 0.353553385 : f32
    %158 = vector.broadcast %cst_34 : f32 to vector<8x8xf32>
    %159 = arith.mulf %157, %158 : vector<8x8xf32>
    %cst_35 = arith.constant dense<0xFF800000> : vector<8xf32>
    %160 = vector.multi_reduction <maximumf>, %159, %cst_35 [1] : vector<8x8xf32> to vector<8xf32>
    %161 = vector.shape_cast %160 : vector<8xf32> to vector<8x1xf32>
    %162 = vector.broadcast %161 : vector<8x1xf32> to vector<8x8xf32>
    %163 = arith.subf %159, %162 : vector<8x8xf32>
    %164 = math.exp %163 : vector<8x8xf32>
    %cst_36 = arith.constant dense<0.000000e+00> : vector<8xf32>
    %165 = vector.multi_reduction <add>, %164, %cst_36 [1] : vector<8x8xf32> to vector<8xf32>
    %166 = vector.shape_cast %165 : vector<8xf32> to vector<8x1xf32>
    %167 = tpu.reciprocal %166 {approx = true} : vector<8x1xf32> -> vector<8x1xf32>
    %168 = vector.broadcast %167 : vector<8x1xf32> to vector<8x8xf32>
    %169 = arith.mulf %164, %168 : vector<8x8xf32>
    %170 = arith.truncf %169 : vector<8x8xf32> to vector<8x8xbf16>
    %cst_37 = arith.constant dense<0.000000e+00> : vector<8x8xf32>
    %171 = tpu.matmul %170, %156, %cst_37 {dimension_numbers = #tpu.dot_dimension_numbers<[1], [0], [0], [1], [0, 0, 1, 1], [], []>} : vector<8x8xbf16>, vector<8x8xbf16>, vector<8x8xf32> -> vector<8x8xf32>
    %172 = tpu.concatenate %108, %129, %150, %171 in 1 : vector<8x8xf32>, vector<8x8xf32>, vector<8x8xf32>, vector<8x8xf32> -> vector<8x32xf32>
    %173 = arith.truncf %172 : vector<8x32xf32> to vector<8x32xbf16>
    %c0_38 = arith.constant 0 : index
    %c0_39 = arith.constant 0 : index
    %174 = vector.load %arg32[%c0_38, %c0_39] : memref<32x32xbf16, #tpu.memory_space<vmem>>, vector<32x32xbf16>
    %cst_40 = arith.constant dense<0.000000e+00> : vector<8x32xf32>
    %175 = tpu.matmul %173, %174, %cst_40 {dimension_numbers = #tpu.dot_dimension_numbers<[1], [0], [0], [1], [0, 0, 1, 1], [], []>} : vector<8x32xbf16>, vector<32x32xbf16>, vector<8x32xf32> -> vector<8x32xf32>
    %c0_41 = arith.constant 0 : index
    %c0_42 = arith.constant 0 : index
    %176 = vector.load %arg24[%c0_41, %c0_42] : memref<1x32xf32, #tpu.memory_space<vmem>>, vector<1x32xf32>
    %177 = vector.broadcast %176 : vector<1x32xf32> to vector<8x32xf32>
    %178 = arith.addf %175, %177 : vector<8x32xf32>
    %179 = arith.addf %54, %178 : vector<8x32xf32>
    %cst_43 = arith.constant dense<0.000000e+00> : vector<8xf32>
    %180 = vector.multi_reduction <add>, %179, %cst_43 [1] : vector<8x32xf32> to vector<8xf32>
    %181 = vector.shape_cast %180 : vector<8xf32> to vector<8x1xf32>
    %cst_44 = arith.constant 3.200000e+01 : f32
    %182 = vector.broadcast %cst_44 : f32 to vector<8x1xf32>
    %183 = arith.divf %181, %182 : vector<8x1xf32>
    %184 = vector.broadcast %183 : vector<8x1xf32> to vector<8x32xf32>
    %185 = arith.subf %179, %184 : vector<8x32xf32>
    %186 = arith.mulf %185, %185 : vector<8x32xf32>
    %cst_45 = arith.constant dense<0.000000e+00> : vector<8xf32>
    %187 = vector.multi_reduction <add>, %186, %cst_45 [1] : vector<8x32xf32> to vector<8xf32>
    %188 = vector.shape_cast %187 : vector<8xf32> to vector<8x1xf32>
    %cst_46 = arith.constant 3.200000e+01 : f32
    %189 = vector.broadcast %cst_46 : f32 to vector<8x1xf32>
    %190 = arith.divf %188, %189 : vector<8x1xf32>
    %191 = vector.broadcast %183 : vector<8x1xf32> to vector<8x32xf32>
    %192 = arith.subf %179, %191 : vector<8x32xf32>
    %cst_47 = arith.constant 9.99999974E-6 : f32
    %193 = vector.broadcast %cst_47 : f32 to vector<8x1xf32>
    %194 = arith.addf %190, %193 : vector<8x1xf32>
    %195 = math.rsqrt %194 : vector<8x1xf32>
    %196 = vector.broadcast %195 : vector<8x1xf32> to vector<8x32xf32>
    %197 = arith.mulf %192, %196 : vector<8x32xf32>
    %c0_48 = arith.constant 0 : index
    %c0_49 = arith.constant 0 : index
    %198 = vector.load %arg29[%c0_48, %c0_49] : memref<1x32xf32, #tpu.memory_space<vmem>>, vector<1x32xf32>
    %199 = vector.broadcast %198 : vector<1x32xf32> to vector<8x32xf32>
    %200 = arith.mulf %197, %199 : vector<8x32xf32>
    %c0_50 = arith.constant 0 : index
    %c0_51 = arith.constant 0 : index
    %201 = vector.load %arg28[%c0_50, %c0_51] : memref<1x32xf32, #tpu.memory_space<vmem>>, vector<1x32xf32>
    %202 = vector.broadcast %201 : vector<1x32xf32> to vector<8x32xf32>
    %203 = arith.addf %200, %202 : vector<8x32xf32>
    %204 = arith.truncf %203 : vector<8x32xf32> to vector<8x32xbf16>
    %c0_52 = arith.constant 0 : index
    %c0_53 = arith.constant 0 : index
    %205 = vector.load %arg30[%c0_52, %c0_53] : memref<32x128xbf16, #tpu.memory_space<vmem>>, vector<32x128xbf16>
    %cst_54 = arith.constant dense<0.000000e+00> : vector<8x128xf32>
    %206 = tpu.matmul %204, %205, %cst_54 {dimension_numbers = #tpu.dot_dimension_numbers<[1], [0], [0], [1], [0, 0, 1, 1], [], []>} : vector<8x32xbf16>, vector<32x128xbf16>, vector<8x128xf32> -> vector<8x128xf32>
    %c0_55 = arith.constant 0 : index
    %c0_56 = arith.constant 0 : index
    %207 = vector.load %arg22[%c0_55, %c0_56] : memref<1x128xf32, #tpu.memory_space<vmem>>, vector<1x128xf32>
    %208 = vector.broadcast %207 : vector<1x128xf32> to vector<8x128xf32>
    %209 = arith.addf %206, %208 : vector<8x128xf32>
    %210 = arith.mulf %209, %209 : vector<8x128xf32>
    %211 = arith.mulf %209, %210 : vector<8x128xf32>
    %cst_57 = arith.constant 4.471500e-02 : f32
    %212 = vector.broadcast %cst_57 : f32 to vector<8x128xf32>
    %213 = arith.mulf %212, %211 : vector<8x128xf32>
    %214 = arith.addf %209, %213 : vector<8x128xf32>
    %cst_58 = arith.constant 0.797884583 : f32
    %215 = vector.broadcast %cst_58 : f32 to vector<8x128xf32>
    %216 = arith.mulf %215, %214 : vector<8x128xf32>
    %217 = math.tanh %216 : vector<8x128xf32>
    %cst_59 = arith.constant 1.000000e+00 : f32
    %218 = vector.broadcast %cst_59 : f32 to vector<8x128xf32>
    %219 = arith.addf %218, %217 : vector<8x128xf32>
    %cst_60 = arith.constant 5.000000e-01 : f32
    %220 = vector.broadcast %cst_60 : f32 to vector<8x128xf32>
    %221 = arith.mulf %220, %219 : vector<8x128xf32>
    %222 = arith.mulf %209, %221 : vector<8x128xf32>
    %223 = arith.truncf %222 : vector<8x128xf32> to vector<8x128xbf16>
    %c0_61 = arith.constant 0 : index
    %c0_62 = arith.constant 0 : index
    %224 = vector.load %arg31[%c0_61, %c0_62] : memref<128x32xbf16, #tpu.memory_space<vmem>>, vector<128x32xbf16>
    %cst_63 = arith.constant dense<0.000000e+00> : vector<8x32xf32>
    %225 = tpu.matmul %223, %224, %cst_63 {dimension_numbers = #tpu.dot_dimension_numbers<[1], [0], [0], [1], [0, 0, 1, 1], [], []>} : vector<8x128xbf16>, vector<128x32xbf16>, vector<8x32xf32> -> vector<8x32xf32>
    %c0_64 = arith.constant 0 : index
    %c0_65 = arith.constant 0 : index
    %226 = vector.load %arg23[%c0_64, %c0_65] : memref<1x32xf32, #tpu.memory_space<vmem>>, vector<1x32xf32>
    %227 = vector.broadcast %226 : vector<1x32xf32> to vector<8x32xf32>
    %228 = arith.addf %225, %227 : vector<8x32xf32>
    %229 = arith.addf %179, %228 : vector<8x32xf32>
    %cst_66 = arith.constant dense<0.000000e+00> : vector<8xf32>
    %230 = vector.multi_reduction <add>, %229, %cst_66 [1] : vector<8x32xf32> to vector<8xf32>
    %231 = vector.shape_cast %230 : vector<8xf32> to vector<8x1xf32>
    %cst_67 = arith.constant 3.200000e+01 : f32
    %232 = vector.broadcast %cst_67 : f32 to vector<8x1xf32>
    %233 = arith.divf %231, %232 : vector<8x1xf32>
    %234 = vector.broadcast %233 : vector<8x1xf32> to vector<8x32xf32>
    %235 = arith.subf %229, %234 : vector<8x32xf32>
    %236 = arith.mulf %235, %235 : vector<8x32xf32>
    %cst_68 = arith.constant dense<0.000000e+00> : vector<8xf32>
    %237 = vector.multi_reduction <add>, %236, %cst_68 [1] : vector<8x32xf32> to vector<8xf32>
    %238 = vector.shape_cast %237 : vector<8xf32> to vector<8x1xf32>
    %cst_69 = arith.constant 3.200000e+01 : f32
    %239 = vector.broadcast %cst_69 : f32 to vector<8x1xf32>
    %240 = arith.divf %238, %239 : vector<8x1xf32>
    %241 = vector.broadcast %233 : vector<8x1xf32> to vector<8x32xf32>
    %242 = arith.subf %229, %241 : vector<8x32xf32>
    %cst_70 = arith.constant 9.99999974E-6 : f32
    %243 = vector.broadcast %cst_70 : f32 to vector<8x1xf32>
    %244 = arith.addf %240, %243 : vector<8x1xf32>
    %245 = math.rsqrt %244 : vector<8x1xf32>
    %246 = vector.broadcast %245 : vector<8x1xf32> to vector<8x32xf32>
    %247 = arith.mulf %242, %246 : vector<8x32xf32>
    %c0_71 = arith.constant 0 : index
    %c0_72 = arith.constant 0 : index
    %248 = vector.load %arg35[%c0_71, %c0_72] : memref<1x32xf32, #tpu.memory_space<vmem>>, vector<1x32xf32>
    %249 = vector.broadcast %248 : vector<1x32xf32> to vector<8x32xf32>
    %250 = arith.mulf %247, %249 : vector<8x32xf32>
    %c0_73 = arith.constant 0 : index
    %c0_74 = arith.constant 0 : index
    %251 = vector.load %arg34[%c0_73, %c0_74] : memref<1x32xf32, #tpu.memory_space<vmem>>, vector<1x32xf32>
    %252 = vector.broadcast %251 : vector<1x32xf32> to vector<8x32xf32>
    %253 = arith.addf %250, %252 : vector<8x32xf32>
    %254 = arith.truncf %253 : vector<8x32xf32> to vector<8x32xbf16>
    %c0_75 = arith.constant 0 : index
    %c0_76 = arith.constant 0 : index
    %255 = vector.load %arg38[%c0_75, %c0_76] : memref<32x16xbf16, #tpu.memory_space<vmem>>, vector<32x16xbf16>
    %cst_77 = arith.constant dense<0.000000e+00> : vector<8x16xf32>
    %256 = tpu.matmul %254, %255, %cst_77 {dimension_numbers = #tpu.dot_dimension_numbers<[1], [0], [0], [1], [0, 0, 1, 1], [], []>} : vector<8x32xbf16>, vector<32x16xbf16>, vector<8x16xf32> -> vector<8x16xf32>
    %c0_78 = arith.constant 0 : index
    %c0_79 = arith.constant 0 : index
    %257 = vector.load %arg37[%c0_78, %c0_79] : memref<1x16xf32, #tpu.memory_space<vmem>>, vector<1x16xf32>
    %258 = vector.broadcast %257 : vector<1x16xf32> to vector<8x16xf32>
    %259 = arith.addf %256, %258 : vector<8x16xf32>
    %260 = vector.extract_strided_slice %259 {offsets = [0, 0], sizes = [1, 16], strides = [1, 1]} : vector<8x16xf32> to vector<1x16xf32>
    %261 = vector.extract_strided_slice %259 {offsets = [1, 0], sizes = [1, 16], strides = [1, 1]} : vector<8x16xf32> to vector<1x16xf32>
    %262 = vector.extract_strided_slice %259 {offsets = [2, 0], sizes = [1, 16], strides = [1, 1]} : vector<8x16xf32> to vector<1x16xf32>
    %263 = vector.extract_strided_slice %259 {offsets = [3, 0], sizes = [1, 16], strides = [1, 1]} : vector<8x16xf32> to vector<1x16xf32>
    %264 = tpu.concatenate %260, %261, %262, %263 in 1 : vector<1x16xf32>, vector<1x16xf32>, vector<1x16xf32>, vector<1x16xf32> -> vector<1x64xf32>
    %265 = vector.extract_strided_slice %259 {offsets = [4, 0], sizes = [1, 16], strides = [1, 1]} : vector<8x16xf32> to vector<1x16xf32>
    %266 = vector.extract_strided_slice %259 {offsets = [5, 0], sizes = [1, 16], strides = [1, 1]} : vector<8x16xf32> to vector<1x16xf32>
    %267 = vector.extract_strided_slice %259 {offsets = [6, 0], sizes = [1, 16], strides = [1, 1]} : vector<8x16xf32> to vector<1x16xf32>
    %268 = vector.extract_strided_slice %259 {offsets = [7, 0], sizes = [1, 16], strides = [1, 1]} : vector<8x16xf32> to vector<1x16xf32>
    %269 = tpu.concatenate %265, %266, %267, %268 in 1 : vector<1x16xf32>, vector<1x16xf32>, vector<1x16xf32>, vector<1x16xf32> -> vector<1x64xf32>
    %c0_80 = arith.constant 0 : index
    %c0_81 = arith.constant 0 : index
    %c0_82 = arith.constant 0 : index
    %270 = vector.load %arg51[%c0_80, %c0_81, %c0_82] : memref<1x1x64xf32, #tpu.memory_space<vmem>>, vector<1x1x64xf32>
    %271 = vector.shape_cast %270 : vector<1x1x64xf32> to vector<1x64xf32>
    %272 = vector.shape_cast %264 : vector<1x64xf32> to vector<1x1x64xf32>
    tpu.vector_store %arg51[%c0_80, %c0_81, %c0_82], %272 {strides = array<i32>} : memref<1x1x64xf32, #tpu.memory_space<vmem>>, vector<1x1x64xf32>,
    %c0_83 = arith.constant 0 : index
    %c0_84 = arith.constant 0 : index
    %c0_85 = arith.constant 0 : index
    %273 = vector.load %arg52[%c0_83, %c0_84, %c0_85] : memref<1x1x64xf32, #tpu.memory_space<vmem>>, vector<1x1x64xf32>
    %274 = vector.shape_cast %273 : vector<1x1x64xf32> to vector<1x64xf32>
    %275 = vector.shape_cast %269 : vector<1x64xf32> to vector<1x1x64xf32>
    tpu.vector_store %arg52[%c0_83, %c0_84, %c0_85], %275 {strides = array<i32>} : memref<1x1x64xf32, #tpu.memory_space<vmem>>, vector<1x1x64xf32>,
    %c0_86 = arith.constant 0 : index
    %c0_87 = arith.constant 0 : index
    %c0_88 = arith.constant 0 : index
    %276 = vector.load %arg49[%c0_86, %c0_87, %c0_88] : memref<1x4x16xf32, #tpu.memory_space<vmem>>, vector<1x4x16xf32>
    %277 = vector.shape_cast %276 : vector<1x4x16xf32> to vector<4x16xf32>
    %278 = vector.extract_strided_slice %259 {offsets = [0, 0], sizes = [4, 16], strides = [1, 1]} : vector<8x16xf32> to vector<4x16xf32>
    %279 = vector.extract_strided_slice %259 {offsets = [4, 0], sizes = [4, 16], strides = [1, 1]} : vector<8x16xf32> to vector<4x16xf32>
    %cst_89 = arith.constant 5.000000e-01 : f32
    %280 = vector.broadcast %cst_89 : f32 to vector<4x16xf32>
    %281 = arith.mulf %280, %279 : vector<4x16xf32>
    %282 = math.exp %281 : vector<4x16xf32>
    %283 = arith.mulf %277, %282 : vector<4x16xf32>
    %284 = arith.addf %278, %283 : vector<4x16xf32>
    %285 = vector.extract_strided_slice %284 {offsets = [0, 0], sizes = [1, 8], strides = [1, 1]} : vector<4x16xf32> to vector<1x8xf32>
    %286 = vector.extract_strided_slice %284 {offsets = [0, 8], sizes = [1, 8], strides = [1, 1]} : vector<4x16xf32> to vector<1x8xf32>
    %287 = vector.extract_strided_slice %284 {offsets = [1, 0], sizes = [1, 8], strides = [1, 1]} : vector<4x16xf32> to vector<1x8xf32>
    %288 = vector.extract_strided_slice %284 {offsets = [1, 8], sizes = [1, 8], strides = [1, 1]} : vector<4x16xf32> to vector<1x8xf32>
    %289 = vector.extract_strided_slice %284 {offsets = [2, 0], sizes = [1, 8], strides = [1, 1]} : vector<4x16xf32> to vector<1x8xf32>
    %290 = vector.extract_strided_slice %284 {offsets = [2, 8], sizes = [1, 8], strides = [1, 1]} : vector<4x16xf32> to vector<1x8xf32>
    %291 = vector.extract_strided_slice %284 {offsets = [3, 0], sizes = [1, 8], strides = [1, 1]} : vector<4x16xf32> to vector<1x8xf32>
    %292 = vector.extract_strided_slice %284 {offsets = [3, 8], sizes = [1, 8], strides = [1, 1]} : vector<4x16xf32> to vector<1x8xf32>
    %293 = tpu.concatenate %285, %286, %287, %288, %289, %290, %291, %292 in 0 : vector<1x8xf32>, vector<1x8xf32>, vector<1x8xf32>, vector<1x8xf32>, vector<1x8xf32>, vector<1x8xf32>, vector<1x8xf32>, vector<1x8xf32> -> vector<8x8xf32>
    %294 = arith.truncf %264 : vector<1x64xf32> to vector<1x64xbf16>
    %c0_90 = arith.constant 0 : index
    %c0_91 = arith.constant 0 : index
    %295 = vector.load %arg46[%c0_90, %c0_91] : memref<64x32xbf16, #tpu.memory_space<vmem>>, vector<64x32xbf16>
    %cst_92 = arith.constant dense<0.000000e+00> : vector<1x32xf32>
    %296 = tpu.matmul %294, %295, %cst_92 {dimension_numbers = #tpu.dot_dimension_numbers<[1], [0], [0], [1], [0, 0, 1, 1], [], []>} : vector<1x64xbf16>, vector<64x32xbf16>, vector<1x32xf32> -> vector<1x32xf32>
    %c0_93 = arith.constant 0 : index
    %c0_94 = arith.constant 0 : index
    %297 = vector.load %arg45[%c0_93, %c0_94] : memref<1x32xf32, #tpu.memory_space<vmem>>, vector<1x32xf32>
    %298 = arith.addf %296, %297 : vector<1x32xf32>
    %cst_95 = arith.constant 0.000000e+00 : f32
    %299 = vector.broadcast %cst_95 : f32 to vector<1x32xf32>
    %300 = arith.maximumf %298, %299 : vector<1x32xf32>
    %301 = arith.truncf %300 : vector<1x32xf32> to vector<1x32xbf16>
    %c0_96 = arith.constant 0 : index
    %c0_97 = arith.constant 0 : index
    %302 = vector.load %arg48[%c0_96, %c0_97] : memref<32x2xbf16, #tpu.memory_space<vmem>>, vector<32x2xbf16>
    %cst_98 = arith.constant dense<0.000000e+00> : vector<1x2xf32>
    %303 = tpu.matmul %301, %302, %cst_98 {dimension_numbers = #tpu.dot_dimension_numbers<[1], [0], [0], [1], [0, 0, 1, 1], [], []>} : vector<1x32xbf16>, vector<32x2xbf16>, vector<1x2xf32> -> vector<1x2xf32>
    %c0_99 = arith.constant 0 : index
    %c0_100 = arith.constant 0 : index
    %304 = vector.load %arg47[%c0_99, %c0_100] : memref<1x2xf32, #tpu.memory_space<vmem>>, vector<1x2xf32>
    %305 = arith.addf %303, %304 : vector<1x2xf32>
    %306 = math.tanh %305 : vector<1x2xf32>
    %c0_101 = arith.constant 0 : index
    %c0_102 = arith.constant 0 : index
    %c0_103 = arith.constant 0 : index
    %307 = vector.load %arg53[%c0_101, %c0_102, %c0_103] : memref<1x1x2xf32, #tpu.memory_space<vmem>>, vector<1x1x2xf32>
    %308 = vector.shape_cast %307 : vector<1x1x2xf32> to vector<1x2xf32>
    %309 = vector.shape_cast %306 : vector<1x2xf32> to vector<1x1x2xf32>
    tpu.vector_store %arg53[%c0_101, %c0_102, %c0_103], %309 {strides = array<i32>} : memref<1x1x2xf32, #tpu.memory_space<vmem>>, vector<1x1x2xf32>,
    %310 = arith.truncf %293 : vector<8x8xf32> to vector<8x8xbf16>
    %c0_104 = arith.constant 0 : index
    %c0_105 = arith.constant 0 : index
    %311 = vector.load %arg18[%c0_104, %c0_105] : memref<8x16xbf16, #tpu.memory_space<vmem>>, vector<8x16xbf16>
    %cst_106 = arith.constant dense<0.000000e+00> : vector<8x16xf32>
    %312 = tpu.matmul %310, %311, %cst_106 {dimension_numbers = #tpu.dot_dimension_numbers<[1], [0], [0], [1], [0, 0, 1, 1], [], []>} : vector<8x8xbf16>, vector<8x16xbf16>, vector<8x16xf32> -> vector<8x16xf32>
    %c0_107 = arith.constant 0 : index
    %c0_108 = arith.constant 0 : index
    %313 = vector.load %arg17[%c0_107, %c0_108] : memref<1x16xf32, #tpu.memory_space<vmem>>, vector<1x16xf32>
    %314 = vector.broadcast %313 : vector<1x16xf32> to vector<8x16xf32>
    %315 = arith.addf %312, %314 : vector<8x16xf32>
    %cst_109 = arith.constant 0.000000e+00 : f32
    %316 = vector.broadcast %cst_109 : f32 to vector<8x16xf32>
    %317 = arith.maximumf %315, %316 : vector<8x16xf32>
    %318 = arith.truncf %317 : vector<8x16xf32> to vector<8x16xbf16>
    %c0_110 = arith.constant 0 : index
    %c0_111 = arith.constant 0 : index
    %319 = vector.load %arg20[%c0_110, %c0_111] : memref<16x32xbf16, #tpu.memory_space<vmem>>, vector<16x32xbf16>
    %cst_112 = arith.constant dense<0.000000e+00> : vector<8x32xf32>
    %320 = tpu.matmul %318, %319, %cst_112 {dimension_numbers = #tpu.dot_dimension_numbers<[1], [0], [0], [1], [0, 0, 1, 1], [], []>} : vector<8x16xbf16>, vector<16x32xbf16>, vector<8x32xf32> -> vector<8x32xf32>
    %c0_113 = arith.constant 0 : index
    %c0_114 = arith.constant 0 : index
    %321 = vector.load %arg19[%c0_113, %c0_114] : memref<1x32xf32, #tpu.memory_space<vmem>>, vector<1x32xf32>
    %322 = vector.broadcast %321 : vector<1x32xf32> to vector<8x32xf32>
    %323 = arith.addf %320, %322 : vector<8x32xf32>
    %c0_115 = arith.constant 0 : index
    %c0_116 = arith.constant 0 : index
    %324 = vector.load %arg16[%c0_115, %c0_116] : memref<8x32xf32, #tpu.memory_space<vmem>>, vector<8x32xf32>
    %325 = arith.addf %323, %324 : vector<8x32xf32>
    %cst_117 = arith.constant dense<0.000000e+00> : vector<8xf32>
    %326 = vector.multi_reduction <add>, %325, %cst_117 [1] : vector<8x32xf32> to vector<8xf32>
    %327 = vector.shape_cast %326 : vector<8xf32> to vector<8x1xf32>
    %cst_118 = arith.constant 3.200000e+01 : f32
    %328 = vector.broadcast %cst_118 : f32 to vector<8x1xf32>
    %329 = arith.divf %327, %328 : vector<8x1xf32>
    %330 = vector.broadcast %329 : vector<8x1xf32> to vector<8x32xf32>
    %331 = arith.subf %325, %330 : vector<8x32xf32>
    %332 = arith.mulf %331, %331 : vector<8x32xf32>
    %cst_119 = arith.constant dense<0.000000e+00> : vector<8xf32>
    %333 = vector.multi_reduction <add>, %332, %cst_119 [1] : vector<8x32xf32> to vector<8xf32>
    %334 = vector.shape_cast %333 : vector<8xf32> to vector<8x1xf32>
    %cst_120 = arith.constant 3.200000e+01 : f32
    %335 = vector.broadcast %cst_120 : f32 to vector<8x1xf32>
    %336 = arith.divf %334, %335 : vector<8x1xf32>
    %337 = vector.broadcast %329 : vector<8x1xf32> to vector<8x32xf32>
    %338 = arith.subf %325, %337 : vector<8x32xf32>
    %cst_121 = arith.constant 9.99999974E-6 : f32
    %339 = vector.broadcast %cst_121 : f32 to vector<8x1xf32>
    %340 = arith.addf %336, %339 : vector<8x1xf32>
    %341 = math.rsqrt %340 : vector<8x1xf32>
    %342 = vector.broadcast %341 : vector<8x1xf32> to vector<8x32xf32>
    %343 = arith.mulf %338, %342 : vector<8x32xf32>
    %c0_122 = arith.constant 0 : index
    %c0_123 = arith.constant 0 : index
    %344 = vector.load %arg7[%c0_122, %c0_123] : memref<1x32xf32, #tpu.memory_space<vmem>>, vector<1x32xf32>
    %345 = vector.broadcast %344 : vector<1x32xf32> to vector<8x32xf32>
    %346 = arith.mulf %343, %345 : vector<8x32xf32>
    %c0_124 = arith.constant 0 : index
    %c0_125 = arith.constant 0 : index
    %347 = vector.load %arg6[%c0_124, %c0_125] : memref<1x32xf32, #tpu.memory_space<vmem>>, vector<1x32xf32>
    %348 = vector.broadcast %347 : vector<1x32xf32> to vector<8x32xf32>
    %349 = arith.addf %346, %348 : vector<8x32xf32>
    %350 = arith.truncf %349 : vector<8x32xf32> to vector<8x32xbf16>
    %c0_126 = arith.constant 0 : index
    %c0_127 = arith.constant 0 : index
    %351 = vector.load %arg13[%c0_126, %c0_127] : memref<32x96xbf16, #tpu.memory_space<vmem>>, vector<32x96xbf16>
    %cst_128 = arith.constant dense<0.000000e+00> : vector<8x96xf32>
    %352 = tpu.matmul %350, %351, %cst_128 {dimension_numbers = #tpu.dot_dimension_numbers<[1], [0], [0], [1], [0, 0, 1, 1], [], []>} : vector<8x32xbf16>, vector<32x96xbf16>, vector<8x96xf32> -> vector<8x96xf32>
    %c0_129 = arith.constant 0 : index
    %c0_130 = arith.constant 0 : index
    %353 = vector.load %arg5[%c0_129, %c0_130] : memref<1x96xf32, #tpu.memory_space<vmem>>, vector<1x96xf32>
    %354 = vector.broadcast %353 : vector<1x96xf32> to vector<8x96xf32>
    %355 = arith.addf %352, %354 : vector<8x96xf32>
    %356 = vector.extract_strided_slice %355 {offsets = [0, 0], sizes = [8, 32], strides = [1, 1]} : vector<8x96xf32> to vector<8x32xf32>
    %357 = vector.extract_strided_slice %355 {offsets = [0, 32], sizes = [8, 32], strides = [1, 1]} : vector<8x96xf32> to vector<8x32xf32>
    %358 = vector.extract_strided_slice %355 {offsets = [0, 64], sizes = [8, 32], strides = [1, 1]} : vector<8x96xf32> to vector<8x32xf32>
    %359 = vector.extract_strided_slice %356 {offsets = [0, 0], sizes = [8, 8], strides = [1, 1]} : vector<8x32xf32> to vector<8x8xf32>
    %360 = arith.truncf %359 : vector<8x8xf32> to vector<8x8xbf16>
    %361 = vector.extract_strided_slice %357 {offsets = [0, 0], sizes = [8, 8], strides = [1, 1]} : vector<8x32xf32> to vector<8x8xf32>
    %362 = arith.truncf %361 : vector<8x8xf32> to vector<8x8xbf16>
    %363 = vector.extract_strided_slice %358 {offsets = [0, 0], sizes = [8, 8], strides = [1, 1]} : vector<8x32xf32> to vector<8x8xf32>
    %364 = arith.truncf %363 : vector<8x8xf32> to vector<8x8xbf16>
    %cst_131 = arith.constant dense<0.000000e+00> : vector<8x8xf32>
    %365 = tpu.matmul %360, %362, %cst_131 {dimension_numbers = #tpu.dot_dimension_numbers<[1], [1], [0], [0], [0, 0, 1, 0], [], []>} : vector<8x8xbf16>, vector<8x8xbf16>, vector<8x8xf32> -> vector<8x8xf32>
    %cst_132 = arith.constant 0.353553385 : f32
    %366 = vector.broadcast %cst_132 : f32 to vector<8x8xf32>
    %367 = arith.mulf %365, %366 : vector<8x8xf32>
    %cst_133 = arith.constant dense<0xFF800000> : vector<8xf32>
    %368 = vector.multi_reduction <maximumf>, %367, %cst_133 [1] : vector<8x8xf32> to vector<8xf32>
    %369 = vector.shape_cast %368 : vector<8xf32> to vector<8x1xf32>
    %370 = vector.broadcast %369 : vector<8x1xf32> to vector<8x8xf32>
    %371 = arith.subf %367, %370 : vector<8x8xf32>
    %372 = math.exp %371 : vector<8x8xf32>
    %cst_134 = arith.constant dense<0.000000e+00> : vector<8xf32>
    %373 = vector.multi_reduction <add>, %372, %cst_134 [1] : vector<8x8xf32> to vector<8xf32>
    %374 = vector.shape_cast %373 : vector<8xf32> to vector<8x1xf32>
    %375 = tpu.reciprocal %374 {approx = true} : vector<8x1xf32> -> vector<8x1xf32>
    %376 = vector.broadcast %375 : vector<8x1xf32> to vector<8x8xf32>
    %377 = arith.mulf %372, %376 : vector<8x8xf32>
    %378 = arith.truncf %377 : vector<8x8xf32> to vector<8x8xbf16>
    %cst_135 = arith.constant dense<0.000000e+00> : vector<8x8xf32>
    %379 = tpu.matmul %378, %364, %cst_135 {dimension_numbers = #tpu.dot_dimension_numbers<[1], [0], [0], [1], [0, 0, 1, 1], [], []>} : vector<8x8xbf16>, vector<8x8xbf16>, vector<8x8xf32> -> vector<8x8xf32>
    %380 = vector.extract_strided_slice %356 {offsets = [0, 8], sizes = [8, 8], strides = [1, 1]} : vector<8x32xf32> to vector<8x8xf32>
    %381 = arith.truncf %380 : vector<8x8xf32> to vector<8x8xbf16>
    %382 = vector.extract_strided_slice %357 {offsets = [0, 8], sizes = [8, 8], strides = [1, 1]} : vector<8x32xf32> to vector<8x8xf32>
    %383 = arith.truncf %382 : vector<8x8xf32> to vector<8x8xbf16>
    %384 = vector.extract_strided_slice %358 {offsets = [0, 8], sizes = [8, 8], strides = [1, 1]} : vector<8x32xf32> to vector<8x8xf32>
    %385 = arith.truncf %384 : vector<8x8xf32> to vector<8x8xbf16>
    %cst_136 = arith.constant dense<0.000000e+00> : vector<8x8xf32>
    %386 = tpu.matmul %381, %383, %cst_136 {dimension_numbers = #tpu.dot_dimension_numbers<[1], [1], [0], [0], [0, 0, 1, 0], [], []>} : vector<8x8xbf16>, vector<8x8xbf16>, vector<8x8xf32> -> vector<8x8xf32>
    %cst_137 = arith.constant 0.353553385 : f32
    %387 = vector.broadcast %cst_137 : f32 to vector<8x8xf32>
    %388 = arith.mulf %386, %387 : vector<8x8xf32>
    %cst_138 = arith.constant dense<0xFF800000> : vector<8xf32>
    %389 = vector.multi_reduction <maximumf>, %388, %cst_138 [1] : vector<8x8xf32> to vector<8xf32>
    %390 = vector.shape_cast %389 : vector<8xf32> to vector<8x1xf32>
    %391 = vector.broadcast %390 : vector<8x1xf32> to vector<8x8xf32>
    %392 = arith.subf %388, %391 : vector<8x8xf32>
    %393 = math.exp %392 : vector<8x8xf32>
    %cst_139 = arith.constant dense<0.000000e+00> : vector<8xf32>
    %394 = vector.multi_reduction <add>, %393, %cst_139 [1] : vector<8x8xf32> to vector<8xf32>
    %395 = vector.shape_cast %394 : vector<8xf32> to vector<8x1xf32>
    %396 = tpu.reciprocal %395 {approx = true} : vector<8x1xf32> -> vector<8x1xf32>
    %397 = vector.broadcast %396 : vector<8x1xf32> to vector<8x8xf32>
    %398 = arith.mulf %393, %397 : vector<8x8xf32>
    %399 = arith.truncf %398 : vector<8x8xf32> to vector<8x8xbf16>
    %cst_140 = arith.constant dense<0.000000e+00> : vector<8x8xf32>
    %400 = tpu.matmul %399, %385, %cst_140 {dimension_numbers = #tpu.dot_dimension_numbers<[1], [0], [0], [1], [0, 0, 1, 1], [], []>} : vector<8x8xbf16>, vector<8x8xbf16>, vector<8x8xf32> -> vector<8x8xf32>
    %401 = vector.extract_strided_slice %356 {offsets = [0, 16], sizes = [8, 8], strides = [1, 1]} : vector<8x32xf32> to vector<8x8xf32>
    %402 = arith.truncf %401 : vector<8x8xf32> to vector<8x8xbf16>
    %403 = vector.extract_strided_slice %357 {offsets = [0, 16], sizes = [8, 8], strides = [1, 1]} : vector<8x32xf32> to vector<8x8xf32>
    %404 = arith.truncf %403 : vector<8x8xf32> to vector<8x8xbf16>
    %405 = vector.extract_strided_slice %358 {offsets = [0, 16], sizes = [8, 8], strides = [1, 1]} : vector<8x32xf32> to vector<8x8xf32>
    %406 = arith.truncf %405 : vector<8x8xf32> to vector<8x8xbf16>
    %cst_141 = arith.constant dense<0.000000e+00> : vector<8x8xf32>
    %407 = tpu.matmul %402, %404, %cst_141 {dimension_numbers = #tpu.dot_dimension_numbers<[1], [1], [0], [0], [0, 0, 1, 0], [], []>} : vector<8x8xbf16>, vector<8x8xbf16>, vector<8x8xf32> -> vector<8x8xf32>
    %cst_142 = arith.constant 0.353553385 : f32
    %408 = vector.broadcast %cst_142 : f32 to vector<8x8xf32>
    %409 = arith.mulf %407, %408 : vector<8x8xf32>
    %cst_143 = arith.constant dense<0xFF800000> : vector<8xf32>
    %410 = vector.multi_reduction <maximumf>, %409, %cst_143 [1] : vector<8x8xf32> to vector<8xf32>
    %411 = vector.shape_cast %410 : vector<8xf32> to vector<8x1xf32>
    %412 = vector.broadcast %411 : vector<8x1xf32> to vector<8x8xf32>
    %413 = arith.subf %409, %412 : vector<8x8xf32>
    %414 = math.exp %413 : vector<8x8xf32>
    %cst_144 = arith.constant dense<0.000000e+00> : vector<8xf32>
    %415 = vector.multi_reduction <add>, %414, %cst_144 [1] : vector<8x8xf32> to vector<8xf32>
    %416 = vector.shape_cast %415 : vector<8xf32> to vector<8x1xf32>
    %417 = tpu.reciprocal %416 {approx = true} : vector<8x1xf32> -> vector<8x1xf32>
    %418 = vector.broadcast %417 : vector<8x1xf32> to vector<8x8xf32>
    %419 = arith.mulf %414, %418 : vector<8x8xf32>
    %420 = arith.truncf %419 : vector<8x8xf32> to vector<8x8xbf16>
    %cst_145 = arith.constant dense<0.000000e+00> : vector<8x8xf32>
    %421 = tpu.matmul %420, %406, %cst_145 {dimension_numbers = #tpu.dot_dimension_numbers<[1], [0], [0], [1], [0, 0, 1, 1], [], []>} : vector<8x8xbf16>, vector<8x8xbf16>, vector<8x8xf32> -> vector<8x8xf32>
    %422 = vector.extract_strided_slice %356 {offsets = [0, 24], sizes = [8, 8], strides = [1, 1]} : vector<8x32xf32> to vector<8x8xf32>
    %423 = arith.truncf %422 : vector<8x8xf32> to vector<8x8xbf16>
    %424 = vector.extract_strided_slice %357 {offsets = [0, 24], sizes = [8, 8], strides = [1, 1]} : vector<8x32xf32> to vector<8x8xf32>
    %425 = arith.truncf %424 : vector<8x8xf32> to vector<8x8xbf16>
    %426 = vector.extract_strided_slice %358 {offsets = [0, 24], sizes = [8, 8], strides = [1, 1]} : vector<8x32xf32> to vector<8x8xf32>
    %427 = arith.truncf %426 : vector<8x8xf32> to vector<8x8xbf16>
    %cst_146 = arith.constant dense<0.000000e+00> : vector<8x8xf32>
    %428 = tpu.matmul %423, %425, %cst_146 {dimension_numbers = #tpu.dot_dimension_numbers<[1], [1], [0], [0], [0, 0, 1, 0], [], []>} : vector<8x8xbf16>, vector<8x8xbf16>, vector<8x8xf32> -> vector<8x8xf32>
    %cst_147 = arith.constant 0.353553385 : f32
    %429 = vector.broadcast %cst_147 : f32 to vector<8x8xf32>
    %430 = arith.mulf %428, %429 : vector<8x8xf32>
    %cst_148 = arith.constant dense<0xFF800000> : vector<8xf32>
    %431 = vector.multi_reduction <maximumf>, %430, %cst_148 [1] : vector<8x8xf32> to vector<8xf32>
    %432 = vector.shape_cast %431 : vector<8xf32> to vector<8x1xf32>
    %433 = vector.broadcast %432 : vector<8x1xf32> to vector<8x8xf32>
    %434 = arith.subf %430, %433 : vector<8x8xf32>
    %435 = math.exp %434 : vector<8x8xf32>
    %cst_149 = arith.constant dense<0.000000e+00> : vector<8xf32>
    %436 = vector.multi_reduction <add>, %435, %cst_149 [1] : vector<8x8xf32> to vector<8xf32>
    %437 = vector.shape_cast %436 : vector<8xf32> to vector<8x1xf32>
    %438 = tpu.reciprocal %437 {approx = true} : vector<8x1xf32> -> vector<8x1xf32>
    %439 = vector.broadcast %438 : vector<8x1xf32> to vector<8x8xf32>
    %440 = arith.mulf %435, %439 : vector<8x8xf32>
    %441 = arith.truncf %440 : vector<8x8xf32> to vector<8x8xbf16>
    %cst_150 = arith.constant dense<0.000000e+00> : vector<8x8xf32>
    %442 = tpu.matmul %441, %427, %cst_150 {dimension_numbers = #tpu.dot_dimension_numbers<[1], [0], [0], [1], [0, 0, 1, 1], [], []>} : vector<8x8xbf16>, vector<8x8xbf16>, vector<8x8xf32> -> vector<8x8xf32>
    %443 = tpu.concatenate %379, %400, %421, %442 in 1 : vector<8x8xf32>, vector<8x8xf32>, vector<8x8xf32>, vector<8x8xf32> -> vector<8x32xf32>
    %444 = arith.truncf %443 : vector<8x32xf32> to vector<8x32xbf16>
    %c0_151 = arith.constant 0 : index
    %c0_152 = arith.constant 0 : index
    %445 = vector.load %arg12[%c0_151, %c0_152] : memref<32x32xbf16, #tpu.memory_space<vmem>>, vector<32x32xbf16>
    %cst_153 = arith.constant dense<0.000000e+00> : vector<8x32xf32>
    %446 = tpu.matmul %444, %445, %cst_153 {dimension_numbers = #tpu.dot_dimension_numbers<[1], [0], [0], [1], [0, 0, 1, 1], [], []>} : vector<8x32xbf16>, vector<32x32xbf16>, vector<8x32xf32> -> vector<8x32xf32>
    %c0_154 = arith.constant 0 : index
    %c0_155 = arith.constant 0 : index
    %447 = vector.load %arg4[%c0_154, %c0_155] : memref<1x32xf32, #tpu.memory_space<vmem>>, vector<1x32xf32>
    %448 = vector.broadcast %447 : vector<1x32xf32> to vector<8x32xf32>
    %449 = arith.addf %446, %448 : vector<8x32xf32>
    %450 = arith.addf %325, %449 : vector<8x32xf32>
    %cst_156 = arith.constant dense<0.000000e+00> : vector<8xf32>
    %451 = vector.multi_reduction <add>, %450, %cst_156 [1] : vector<8x32xf32> to vector<8xf32>
    %452 = vector.shape_cast %451 : vector<8xf32> to vector<8x1xf32>
    %cst_157 = arith.constant 3.200000e+01 : f32
    %453 = vector.broadcast %cst_157 : f32 to vector<8x1xf32>
    %454 = arith.divf %452, %453 : vector<8x1xf32>
    %455 = vector.broadcast %454 : vector<8x1xf32> to vector<8x32xf32>
    %456 = arith.subf %450, %455 : vector<8x32xf32>
    %457 = arith.mulf %456, %456 : vector<8x32xf32>
    %cst_158 = arith.constant dense<0.000000e+00> : vector<8xf32>
    %458 = vector.multi_reduction <add>, %457, %cst_158 [1] : vector<8x32xf32> to vector<8xf32>
    %459 = vector.shape_cast %458 : vector<8xf32> to vector<8x1xf32>
    %cst_159 = arith.constant 3.200000e+01 : f32
    %460 = vector.broadcast %cst_159 : f32 to vector<8x1xf32>
    %461 = arith.divf %459, %460 : vector<8x1xf32>
    %462 = vector.broadcast %454 : vector<8x1xf32> to vector<8x32xf32>
    %463 = arith.subf %450, %462 : vector<8x32xf32>
    %cst_160 = arith.constant 9.99999974E-6 : f32
    %464 = vector.broadcast %cst_160 : f32 to vector<8x1xf32>
    %465 = arith.addf %461, %464 : vector<8x1xf32>
    %466 = math.rsqrt %465 : vector<8x1xf32>
    %467 = vector.broadcast %466 : vector<8x1xf32> to vector<8x32xf32>
    %468 = arith.mulf %463, %467 : vector<8x32xf32>
    %c0_161 = arith.constant 0 : index
    %c0_162 = arith.constant 0 : index
    %469 = vector.load %arg9[%c0_161, %c0_162] : memref<1x32xf32, #tpu.memory_space<vmem>>, vector<1x32xf32>
    %470 = vector.broadcast %469 : vector<1x32xf32> to vector<8x32xf32>
    %471 = arith.mulf %468, %470 : vector<8x32xf32>
    %c0_163 = arith.constant 0 : index
    %c0_164 = arith.constant 0 : index
    %472 = vector.load %arg8[%c0_163, %c0_164] : memref<1x32xf32, #tpu.memory_space<vmem>>, vector<1x32xf32>
    %473 = vector.broadcast %472 : vector<1x32xf32> to vector<8x32xf32>
    %474 = arith.addf %471, %473 : vector<8x32xf32>
    %475 = arith.truncf %474 : vector<8x32xf32> to vector<8x32xbf16>
    %c0_165 = arith.constant 0 : index
    %c0_166 = arith.constant 0 : index
    %476 = vector.load %arg10[%c0_165, %c0_166] : memref<32x128xbf16, #tpu.memory_space<vmem>>, vector<32x128xbf16>
    %cst_167 = arith.constant dense<0.000000e+00> : vector<8x128xf32>
    %477 = tpu.matmul %475, %476, %cst_167 {dimension_numbers = #tpu.dot_dimension_numbers<[1], [0], [0], [1], [0, 0, 1, 1], [], []>} : vector<8x32xbf16>, vector<32x128xbf16>, vector<8x128xf32> -> vector<8x128xf32>
    %c0_168 = arith.constant 0 : index
    %c0_169 = arith.constant 0 : index
    %478 = vector.load %arg2[%c0_168, %c0_169] : memref<1x128xf32, #tpu.memory_space<vmem>>, vector<1x128xf32>
    %479 = vector.broadcast %478 : vector<1x128xf32> to vector<8x128xf32>
    %480 = arith.addf %477, %479 : vector<8x128xf32>
    %481 = arith.mulf %480, %480 : vector<8x128xf32>
    %482 = arith.mulf %480, %481 : vector<8x128xf32>
    %cst_170 = arith.constant 4.471500e-02 : f32
    %483 = vector.broadcast %cst_170 : f32 to vector<8x128xf32>
    %484 = arith.mulf %483, %482 : vector<8x128xf32>
    %485 = arith.addf %480, %484 : vector<8x128xf32>
    %cst_171 = arith.constant 0.797884583 : f32
    %486 = vector.broadcast %cst_171 : f32 to vector<8x128xf32>
    %487 = arith.mulf %486, %485 : vector<8x128xf32>
    %488 = math.tanh %487 : vector<8x128xf32>
    %cst_172 = arith.constant 1.000000e+00 : f32
    %489 = vector.broadcast %cst_172 : f32 to vector<8x128xf32>
    %490 = arith.addf %489, %488 : vector<8x128xf32>
    %cst_173 = arith.constant 5.000000e-01 : f32
    %491 = vector.broadcast %cst_173 : f32 to vector<8x128xf32>
    %492 = arith.mulf %491, %490 : vector<8x128xf32>
    %493 = arith.mulf %480, %492 : vector<8x128xf32>
    %494 = arith.truncf %493 : vector<8x128xf32> to vector<8x128xbf16>
    %c0_174 = arith.constant 0 : index
    %c0_175 = arith.constant 0 : index
    %495 = vector.load %arg11[%c0_174, %c0_175] : memref<128x32xbf16, #tpu.memory_space<vmem>>, vector<128x32xbf16>
    %cst_176 = arith.constant dense<0.000000e+00> : vector<8x32xf32>
    %496 = tpu.matmul %494, %495, %cst_176 {dimension_numbers = #tpu.dot_dimension_numbers<[1], [0], [0], [1], [0, 0, 1, 1], [], []>} : vector<8x128xbf16>, vector<128x32xbf16>, vector<8x32xf32> -> vector<8x32xf32>
    %c0_177 = arith.constant 0 : index
    %c0_178 = arith.constant 0 : index
    %497 = vector.load %arg3[%c0_177, %c0_178] : memref<1x32xf32, #tpu.memory_space<vmem>>, vector<1x32xf32>
    %498 = vector.broadcast %497 : vector<1x32xf32> to vector<8x32xf32>
    %499 = arith.addf %496, %498 : vector<8x32xf32>
    %500 = arith.addf %450, %499 : vector<8x32xf32>
    %cst_179 = arith.constant dense<0.000000e+00> : vector<8xf32>
    %501 = vector.multi_reduction <add>, %500, %cst_179 [1] : vector<8x32xf32> to vector<8xf32>
    %502 = vector.shape_cast %501 : vector<8xf32> to vector<8x1xf32>
    %cst_180 = arith.constant 3.200000e+01 : f32
    %503 = vector.broadcast %cst_180 : f32 to vector<8x1xf32>
    %504 = arith.divf %502, %503 : vector<8x1xf32>
    %505 = vector.broadcast %504 : vector<8x1xf32> to vector<8x32xf32>
    %506 = arith.subf %500, %505 : vector<8x32xf32>
    %507 = arith.mulf %506, %506 : vector<8x32xf32>
    %cst_181 = arith.constant dense<0.000000e+00> : vector<8xf32>
    %508 = vector.multi_reduction <add>, %507, %cst_181 [1] : vector<8x32xf32> to vector<8xf32>
    %509 = vector.shape_cast %508 : vector<8xf32> to vector<8x1xf32>
    %cst_182 = arith.constant 3.200000e+01 : f32
    %510 = vector.broadcast %cst_182 : f32 to vector<8x1xf32>
    %511 = arith.divf %509, %510 : vector<8x1xf32>
    %512 = vector.broadcast %504 : vector<8x1xf32> to vector<8x32xf32>
    %513 = arith.subf %500, %512 : vector<8x32xf32>
    %cst_183 = arith.constant 9.99999974E-6 : f32
    %514 = vector.broadcast %cst_183 : f32 to vector<8x1xf32>
    %515 = arith.addf %511, %514 : vector<8x1xf32>
    %516 = math.rsqrt %515 : vector<8x1xf32>
    %517 = vector.broadcast %516 : vector<8x1xf32> to vector<8x32xf32>
    %518 = arith.mulf %513, %517 : vector<8x32xf32>
    %c0_184 = arith.constant 0 : index
    %c0_185 = arith.constant 0 : index
    %519 = vector.load %arg15[%c0_184, %c0_185] : memref<1x32xf32, #tpu.memory_space<vmem>>, vector<1x32xf32>
    %520 = vector.broadcast %519 : vector<1x32xf32> to vector<8x32xf32>
    %521 = arith.mulf %518, %520 : vector<8x32xf32>
    %c0_186 = arith.constant 0 : index
    %c0_187 = arith.constant 0 : index
    %522 = vector.load %arg14[%c0_186, %c0_187] : memref<1x32xf32, #tpu.memory_space<vmem>>, vector<1x32xf32>
    %523 = vector.broadcast %522 : vector<1x32xf32> to vector<8x32xf32>
    %524 = arith.addf %521, %523 : vector<8x32xf32>
    %525 = arith.truncf %524 : vector<8x32xf32> to vector<8x32xbf16>
    %c0_188 = arith.constant 0 : index
    %c0_189 = arith.constant 0 : index
    %526 = vector.load %arg40[%c0_188, %c0_189] : memref<32x32xbf16, #tpu.memory_space<vmem>>, vector<32x32xbf16>
    %cst_190 = arith.constant dense<0.000000e+00> : vector<8x32xf32>
    %527 = tpu.matmul %525, %526, %cst_190 {dimension_numbers = #tpu.dot_dimension_numbers<[1], [0], [0], [1], [0, 0, 1, 1], [], []>} : vector<8x32xbf16>, vector<32x32xbf16>, vector<8x32xf32> -> vector<8x32xf32>
    %c0_191 = arith.constant 0 : index
    %c0_192 = arith.constant 0 : index
    %528 = vector.load %arg39[%c0_191, %c0_192] : memref<1x32xf32, #tpu.memory_space<vmem>>, vector<1x32xf32>
    %529 = vector.broadcast %528 : vector<1x32xf32> to vector<8x32xf32>
    %530 = arith.addf %527, %529 : vector<8x32xf32>
    %531 = arith.mulf %530, %530 : vector<8x32xf32>
    %532 = arith.mulf %530, %531 : vector<8x32xf32>
    %cst_193 = arith.constant 4.471500e-02 : f32
    %533 = vector.broadcast %cst_193 : f32 to vector<8x32xf32>
    %534 = arith.mulf %533, %532 : vector<8x32xf32>
    %535 = arith.addf %530, %534 : vector<8x32xf32>
    %cst_194 = arith.constant 0.797884583 : f32
    %536 = vector.broadcast %cst_194 : f32 to vector<8x32xf32>
    %537 = arith.mulf %536, %535 : vector<8x32xf32>
    %538 = math.tanh %537 : vector<8x32xf32>
    %cst_195 = arith.constant 1.000000e+00 : f32
    %539 = vector.broadcast %cst_195 : f32 to vector<8x32xf32>
    %540 = arith.addf %539, %538 : vector<8x32xf32>
    %cst_196 = arith.constant 5.000000e-01 : f32
    %541 = vector.broadcast %cst_196 : f32 to vector<8x32xf32>
    %542 = arith.mulf %541, %540 : vector<8x32xf32>
    %543 = arith.mulf %530, %542 : vector<8x32xf32>
    %cst_197 = arith.constant dense<0.000000e+00> : vector<8xf32>
    %544 = vector.multi_reduction <add>, %543, %cst_197 [1] : vector<8x32xf32> to vector<8xf32>
    %545 = vector.shape_cast %544 : vector<8xf32> to vector<8x1xf32>
    %cst_198 = arith.constant 3.200000e+01 : f32
    %546 = vector.broadcast %cst_198 : f32 to vector<8x1xf32>
    %547 = arith.divf %545, %546 : vector<8x1xf32>
    %548 = vector.broadcast %547 : vector<8x1xf32> to vector<8x32xf32>
    %549 = arith.subf %543, %548 : vector<8x32xf32>
    %550 = arith.mulf %549, %549 : vector<8x32xf32>
    %cst_199 = arith.constant dense<0.000000e+00> : vector<8xf32>
    %551 = vector.multi_reduction <add>, %550, %cst_199 [1] : vector<8x32xf32> to vector<8xf32>
    %552 = vector.shape_cast %551 : vector<8xf32> to vector<8x1xf32>
    %cst_200 = arith.constant 3.200000e+01 : f32
    %553 = vector.broadcast %cst_200 : f32 to vector<8x1xf32>
    %554 = arith.divf %552, %553 : vector<8x1xf32>
    %555 = vector.broadcast %547 : vector<8x1xf32> to vector<8x32xf32>
    %556 = arith.subf %543, %555 : vector<8x32xf32>
    %cst_201 = arith.constant 9.99999974E-6 : f32
    %557 = vector.broadcast %cst_201 : f32 to vector<8x1xf32>
    %558 = arith.addf %554, %557 : vector<8x1xf32>
    %559 = math.rsqrt %558 : vector<8x1xf32>
    %560 = vector.broadcast %559 : vector<8x1xf32> to vector<8x32xf32>
    %561 = arith.mulf %556, %560 : vector<8x32xf32>
    %c0_202 = arith.constant 0 : index
    %c0_203 = arith.constant 0 : index
    %562 = vector.load %arg42[%c0_202, %c0_203] : memref<1x32xf32, #tpu.memory_space<vmem>>, vector<1x32xf32>
    %563 = vector.broadcast %562 : vector<1x32xf32> to vector<8x32xf32>
    %564 = arith.mulf %561, %563 : vector<8x32xf32>
    %c0_204 = arith.constant 0 : index
    %c0_205 = arith.constant 0 : index
    %565 = vector.load %arg41[%c0_204, %c0_205] : memref<1x32xf32, #tpu.memory_space<vmem>>, vector<1x32xf32>
    %566 = vector.broadcast %565 : vector<1x32xf32> to vector<8x32xf32>
    %567 = arith.addf %564, %566 : vector<8x32xf32>
    %568 = arith.truncf %567 : vector<8x32xf32> to vector<8x32xbf16>
    %c0_206 = arith.constant 0 : index
    %c0_207 = arith.constant 0 : index
    %569 = vector.load %arg44[%c0_206, %c0_207] : memref<32x64xbf16, #tpu.memory_space<vmem>>, vector<32x64xbf16>
    %cst_208 = arith.constant dense<0.000000e+00> : vector<8x64xf32>
    %570 = tpu.matmul %568, %569, %cst_208 {dimension_numbers = #tpu.dot_dimension_numbers<[1], [0], [0], [1], [0, 0, 1, 1], [], []>} : vector<8x32xbf16>, vector<32x64xbf16>, vector<8x64xf32> -> vector<8x64xf32>
    %c0_209 = arith.constant 0 : index
    %c0_210 = arith.constant 0 : index
    %571 = vector.load %arg43[%c0_209, %c0_210] : memref<1x64xf32, #tpu.memory_space<vmem>>, vector<1x64xf32>
    %572 = vector.broadcast %571 : vector<1x64xf32> to vector<8x64xf32>
    %573 = arith.addf %570, %572 : vector<8x64xf32>
    %c0_211 = arith.constant 0 : index
    %c0_212 = arith.constant 0 : index
    %c0_213 = arith.constant 0 : index
    %574 = vector.load %arg50[%c0_211, %c0_212, %c0_213] : memref<1x8x64xf32, #tpu.memory_space<vmem>>, vector<1x8x64xf32>
    %575 = vector.shape_cast %574 : vector<1x8x64xf32> to vector<8x64xf32>
    %576 = vector.shape_cast %573 : vector<8x64xf32> to vector<1x8x64xf32>
    tpu.vector_store %arg50[%c0_211, %c0_212, %c0_213], %576 {strides = array<i32>} : memref<1x8x64xf32, #tpu.memory_space<vmem>>, vector<1x8x64xf32>,
    return
  }
  func.func @transform_0(%arg0: i32, %arg1: memref<2x8xi32, #tpu.memory_space<smem>>) -> (i32, i32) {
    %c0_i32 = arith.constant 0 : i32
    %c0_i32_0 = arith.constant 0 : i32
    %c0_i32_1 = arith.constant 0 : i32
    return %c0_i32, %c0_i32_0 : i32, i32
  }
  func.func @transform_1(%arg0: i32, %arg1: memref<2x8xi32, #tpu.memory_space<smem>>) -> (i32, i32) {
    %c0_i32 = arith.constant 0 : i32
    %c0_i32_0 = arith.constant 0 : i32
    %c0_i32_1 = arith.constant 0 : i32
    return %c0_i32, %c0_i32_0 : i32, i32
  }
  func.func @transform_2(%arg0: i32, %arg1: memref<2x8xi32, #tpu.memory_space<smem>>) -> (i32, i32) {
    %c0_i32 = arith.constant 0 : i32
    %c0_i32_0 = arith.constant 0 : i32
    %c0_i32_1 = arith.constant 0 : i32
    return %c0_i32, %c0_i32_0 : i32, i32
  }
  func.func @transform_3(%arg0: i32, %arg1: memref<2x8xi32, #tpu.memory_space<smem>>) -> (i32, i32) {
    %c0_i32 = arith.constant 0 : i32
    %c0_i32_0 = arith.constant 0 : i32
    %c0_i32_1 = arith.constant 0 : i32
    return %c0_i32, %c0_i32_0 : i32, i32
  }
  func.func @transform_4(%arg0: i32, %arg1: memref<2x8xi32, #tpu.memory_space<smem>>) -> (i32, i32) {
    %c0_i32 = arith.constant 0 : i32
    %c0_i32_0 = arith.constant 0 : i32
    %c0_i32_1 = arith.constant 0 : i32
    return %c0_i32, %c0_i32_0 : i32, i32
  }
  func.func @transform_5(%arg0: i32, %arg1: memref<2x8xi32, #tpu.memory_space<smem>>) -> (i32, i32) {
    %c0_i32 = arith.constant 0 : i32
    %c0_i32_0 = arith.constant 0 : i32
    %c0_i32_1 = arith.constant 0 : i32
    return %c0_i32, %c0_i32_0 : i32, i32
  }
  func.func @transform_6(%arg0: i32, %arg1: memref<2x8xi32, #tpu.memory_space<smem>>) -> (i32, i32) {
    %c0_i32 = arith.constant 0 : i32
    %c0_i32_0 = arith.constant 0 : i32
    %c0_i32_1 = arith.constant 0 : i32
    return %c0_i32, %c0_i32_0 : i32, i32
  }
  func.func @transform_7(%arg0: i32, %arg1: memref<2x8xi32, #tpu.memory_space<smem>>) -> (i32, i32) {
    %c0_i32 = arith.constant 0 : i32
    %c0_i32_0 = arith.constant 0 : i32
    %c0_i32_1 = arith.constant 0 : i32
    return %c0_i32, %c0_i32_0 : i32, i32
  }
  func.func @transform_8(%arg0: i32, %arg1: memref<2x8xi32, #tpu.memory_space<smem>>) -> (i32, i32) {
    %c0_i32 = arith.constant 0 : i32
    %c0_i32_0 = arith.constant 0 : i32
    %c0_i32_1 = arith.constant 0 : i32
    return %c0_i32, %c0_i32_0 : i32, i32
  }
  func.func @transform_9(%arg0: i32, %arg1: memref<2x8xi32, #tpu.memory_space<smem>>) -> (i32, i32) {
    %c0_i32 = arith.constant 0 : i32
    %c0_i32_0 = arith.constant 0 : i32
    %c0_i32_1 = arith.constant 0 : i32
    return %c0_i32, %c0_i32_0 : i32, i32
  }
  func.func @transform_10(%arg0: i32, %arg1: memref<2x8xi32, #tpu.memory_space<smem>>) -> (i32, i32) {
    %c0_i32 = arith.constant 0 : i32
    %c0_i32_0 = arith.constant 0 : i32
    %c0_i32_1 = arith.constant 0 : i32
    return %c0_i32, %c0_i32_0 : i32, i32
  }
  func.func @transform_11(%arg0: i32, %arg1: memref<2x8xi32, #tpu.memory_space<smem>>) -> (i32, i32) {
    %c0_i32 = arith.constant 0 : i32
    %c0_i32_0 = arith.constant 0 : i32
    %c0_i32_1 = arith.constant 0 : i32
    return %c0_i32, %c0_i32_0 : i32, i32
  }
  func.func @transform_12(%arg0: i32, %arg1: memref<2x8xi32, #tpu.memory_space<smem>>) -> (i32, i32) {
    %c0_i32 = arith.constant 0 : i32
    %c0_i32_0 = arith.constant 0 : i32
    %c0_i32_1 = arith.constant 0 : i32
    return %c0_i32, %c0_i32_0 : i32, i32
  }
  func.func @transform_13(%arg0: i32, %arg1: memref<2x8xi32, #tpu.memory_space<smem>>) -> (i32, i32) {
    %c0_i32 = arith.constant 0 : i32
    %c0_i32_0 = arith.constant 0 : i32
    %c0_i32_1 = arith.constant 0 : i32
    return %c0_i32, %c0_i32_0 : i32, i32
  }
  func.func @transform_14(%arg0: i32, %arg1: memref<2x8xi32, #tpu.memory_space<smem>>) -> (i32, i32) {
    %c0_i32 = arith.constant 0 : i32
    %c0_i32_0 = arith.constant 0 : i32
    %c0_i32_1 = arith.constant 0 : i32
    return %c0_i32, %c0_i32_0 : i32, i32
  }
  func.func @transform_15(%arg0: i32, %arg1: memref<2x8xi32, #tpu.memory_space<smem>>) -> (i32, i32) {
    %c0_i32 = arith.constant 0 : i32
    %c0_i32_0 = arith.constant 0 : i32
    %c0_i32_1 = arith.constant 0 : i32
    return %c0_i32, %c0_i32_0 : i32, i32
  }
  func.func @transform_16(%arg0: i32, %arg1: memref<2x8xi32, #tpu.memory_space<smem>>) -> (i32, i32) {
    %c0_i32 = arith.constant 0 : i32
    %c0_i32_0 = arith.constant 0 : i32
    %c0_i32_1 = arith.constant 0 : i32
    return %c0_i32, %c0_i32_0 : i32, i32
  }
  func.func @transform_17(%arg0: i32, %arg1: memref<2x8xi32, #tpu.memory_space<smem>>) -> (i32, i32) {
    %c0_i32 = arith.constant 0 : i32
    %c0_i32_0 = arith.constant 0 : i32
    %c0_i32_1 = arith.constant 0 : i32
    return %c0_i32, %c0_i32_0 : i32, i32
  }
  func.func @transform_18(%arg0: i32, %arg1: memref<2x8xi32, #tpu.memory_space<smem>>) -> (i32, i32) {
    %c0_i32 = arith.constant 0 : i32
    %c0_i32_0 = arith.constant 0 : i32
    %c0_i32_1 = arith.constant 0 : i32
    return %c0_i32, %c0_i32_0 : i32, i32
  }
  func.func @transform_19(%arg0: i32, %arg1: memref<2x8xi32, #tpu.memory_space<smem>>) -> (i32, i32) {
    %c0_i32 = arith.constant 0 : i32
    %c0_i32_0 = arith.constant 0 : i32
    %c0_i32_1 = arith.constant 0 : i32
    return %c0_i32, %c0_i32_0 : i32, i32
  }
  func.func @transform_20(%arg0: i32, %arg1: memref<2x8xi32, #tpu.memory_space<smem>>) -> (i32, i32) {
    %c0_i32 = arith.constant 0 : i32
    %c0_i32_0 = arith.constant 0 : i32
    %c0_i32_1 = arith.constant 0 : i32
    return %c0_i32, %c0_i32_0 : i32, i32
  }
  func.func @transform_21(%arg0: i32, %arg1: memref<2x8xi32, #tpu.memory_space<smem>>) -> (i32, i32) {
    %c0_i32 = arith.constant 0 : i32
    %c0_i32_0 = arith.constant 0 : i32
    %c0_i32_1 = arith.constant 0 : i32
    return %c0_i32, %c0_i32_0 : i32, i32
  }
  func.func @transform_22(%arg0: i32, %arg1: memref<2x8xi32, #tpu.memory_space<smem>>) -> (i32, i32) {
    %c0_i32 = arith.constant 0 : i32
    %c0_i32_0 = arith.constant 0 : i32
    %c0_i32_1 = arith.constant 0 : i32
    return %c0_i32, %c0_i32_0 : i32, i32
  }
  func.func @transform_23(%arg0: i32, %arg1: memref<2x8xi32, #tpu.memory_space<smem>>) -> (i32, i32) {
    %c0_i32 = arith.constant 0 : i32
    %c0_i32_0 = arith.constant 0 : i32
    %c0_i32_1 = arith.constant 0 : i32
    return %c0_i32, %c0_i32_0 : i32, i32
  }
  func.func @transform_24(%arg0: i32, %arg1: memref<2x8xi32, #tpu.memory_space<smem>>) -> (i32, i32) {
    %c0_i32 = arith.constant 0 : i32
    %c0_i32_0 = arith.constant 0 : i32
    %c0_i32_1 = arith.constant 0 : i32
    return %c0_i32, %c0_i32_0 : i32, i32
  }
  func.func @transform_25(%arg0: i32, %arg1: memref<2x8xi32, #tpu.memory_space<smem>>) -> (i32, i32) {
    %c0_i32 = arith.constant 0 : i32
    %c0_i32_0 = arith.constant 0 : i32
    %c0_i32_1 = arith.constant 0 : i32
    return %c0_i32, %c0_i32_0 : i32, i32
  }
  func.func @transform_26(%arg0: i32, %arg1: memref<2x8xi32, #tpu.memory_space<smem>>) -> (i32, i32) {
    %c0_i32 = arith.constant 0 : i32
    %c0_i32_0 = arith.constant 0 : i32
    %c0_i32_1 = arith.constant 0 : i32
    return %c0_i32, %c0_i32_0 : i32, i32
  }
  func.func @transform_27(%arg0: i32, %arg1: memref<2x8xi32, #tpu.memory_space<smem>>) -> (i32, i32) {
    %c0_i32 = arith.constant 0 : i32
    %c0_i32_0 = arith.constant 0 : i32
    %c0_i32_1 = arith.constant 0 : i32
    return %c0_i32, %c0_i32_0 : i32, i32
  }
  func.func @transform_28(%arg0: i32, %arg1: memref<2x8xi32, #tpu.memory_space<smem>>) -> (i32, i32) {
    %c0_i32 = arith.constant 0 : i32
    %c0_i32_0 = arith.constant 0 : i32
    %c0_i32_1 = arith.constant 0 : i32
    return %c0_i32, %c0_i32_0 : i32, i32
  }
  func.func @transform_29(%arg0: i32, %arg1: memref<2x8xi32, #tpu.memory_space<smem>>) -> (i32, i32) {
    %c0_i32 = arith.constant 0 : i32
    %c0_i32_0 = arith.constant 0 : i32
    %c0_i32_1 = arith.constant 0 : i32
    return %c0_i32, %c0_i32_0 : i32, i32
  }
  func.func @transform_30(%arg0: i32, %arg1: memref<2x8xi32, #tpu.memory_space<smem>>) -> (i32, i32) {
    %c0_i32 = arith.constant 0 : i32
    %c0_i32_0 = arith.constant 0 : i32
    %c0_i32_1 = arith.constant 0 : i32
    return %c0_i32, %c0_i32_0 : i32, i32
  }
  func.func @transform_31(%arg0: i32, %arg1: memref<2x8xi32, #tpu.memory_space<smem>>) -> (i32, i32) {
    %c0_i32 = arith.constant 0 : i32
    %c0_i32_0 = arith.constant 0 : i32
    %c0_i32_1 = arith.constant 0 : i32
    return %c0_i32, %c0_i32_0 : i32, i32
  }
  func.func @transform_32(%arg0: i32, %arg1: memref<2x8xi32, #tpu.memory_space<smem>>) -> (i32, i32) {
    %c0_i32 = arith.constant 0 : i32
    %c0_i32_0 = arith.constant 0 : i32
    %c0_i32_1 = arith.constant 0 : i32
    return %c0_i32, %c0_i32_0 : i32, i32
  }
  func.func @transform_33(%arg0: i32, %arg1: memref<2x8xi32, #tpu.memory_space<smem>>) -> (i32, i32) {
    %c0_i32 = arith.constant 0 : i32
    %c0_i32_0 = arith.constant 0 : i32
    %c0_i32_1 = arith.constant 0 : i32
    return %c0_i32, %c0_i32_0 : i32, i32
  }
  func.func @transform_34(%arg0: i32, %arg1: memref<2x8xi32, #tpu.memory_space<smem>>) -> (i32, i32) {
    %c0_i32 = arith.constant 0 : i32
    %c0_i32_0 = arith.constant 0 : i32
    %c0_i32_1 = arith.constant 0 : i32
    return %c0_i32, %c0_i32_0 : i32, i32
  }
  func.func @transform_35(%arg0: i32, %arg1: memref<2x8xi32, #tpu.memory_space<smem>>) -> (i32, i32) {
    %c0_i32 = arith.constant 0 : i32
    %c0_i32_0 = arith.constant 0 : i32
    %c0_i32_1 = arith.constant 0 : i32
    return %c0_i32, %c0_i32_0 : i32, i32
  }
  func.func @transform_36(%arg0: i32, %arg1: memref<2x8xi32, #tpu.memory_space<smem>>) -> (i32, i32) {
    %c0_i32 = arith.constant 0 : i32
    %c0_i32_0 = arith.constant 0 : i32
    %c0_i32_1 = arith.constant 0 : i32
    return %c0_i32, %c0_i32_0 : i32, i32
  }
  func.func @transform_37(%arg0: i32, %arg1: memref<2x8xi32, #tpu.memory_space<smem>>) -> (i32, i32) {
    %c0_i32 = arith.constant 0 : i32
    %c0_i32_0 = arith.constant 0 : i32
    %c0_i32_1 = arith.constant 0 : i32
    return %c0_i32, %c0_i32_0 : i32, i32
  }
  func.func @transform_38(%arg0: i32, %arg1: memref<2x8xi32, #tpu.memory_space<smem>>) -> (i32, i32) {
    %c0_i32 = arith.constant 0 : i32
    %c0_i32_0 = arith.constant 0 : i32
    %c0_i32_1 = arith.constant 0 : i32
    return %c0_i32, %c0_i32_0 : i32, i32
  }
  func.func @transform_39(%arg0: i32, %arg1: memref<2x8xi32, #tpu.memory_space<smem>>) -> (i32, i32) {
    %c0_i32 = arith.constant 0 : i32
    %c0_i32_0 = arith.constant 0 : i32
    %c0_i32_1 = arith.constant 0 : i32
    return %c0_i32, %c0_i32_0 : i32, i32
  }
  func.func @transform_40(%arg0: i32, %arg1: memref<2x8xi32, #tpu.memory_space<smem>>) -> (i32, i32) {
    %c0_i32 = arith.constant 0 : i32
    %c0_i32_0 = arith.constant 0 : i32
    %c0_i32_1 = arith.constant 0 : i32
    return %c0_i32, %c0_i32_0 : i32, i32
  }
  func.func @transform_41(%arg0: i32, %arg1: memref<2x8xi32, #tpu.memory_space<smem>>) -> (i32, i32) {
    %c0_i32 = arith.constant 0 : i32
    %c0_i32_0 = arith.constant 0 : i32
    %c0_i32_1 = arith.constant 0 : i32
    return %c0_i32, %c0_i32_0 : i32, i32
  }
  func.func @transform_42(%arg0: i32, %arg1: memref<2x8xi32, #tpu.memory_space<smem>>) -> (i32, i32) {
    %c0_i32 = arith.constant 0 : i32
    %c0_i32_0 = arith.constant 0 : i32
    %c0_i32_1 = arith.constant 0 : i32
    return %c0_i32, %c0_i32_0 : i32, i32
  }
  func.func @transform_43(%arg0: i32, %arg1: memref<2x8xi32, #tpu.memory_space<smem>>) -> (i32, i32) {
    %c0_i32 = arith.constant 0 : i32
    %c0_i32_0 = arith.constant 0 : i32
    %c0_i32_1 = arith.constant 0 : i32
    return %c0_i32, %c0_i32_0 : i32, i32
  }
  func.func @transform_44(%arg0: i32, %arg1: memref<2x8xi32, #tpu.memory_space<smem>>) -> (i32, i32) {
    %c0_i32 = arith.constant 0 : i32
    %c0_i32_0 = arith.constant 0 : i32
    %c0_i32_1 = arith.constant 0 : i32
    return %c0_i32, %c0_i32_0 : i32, i32
  }
  func.func @transform_45(%arg0: i32, %arg1: memref<2x8xi32, #tpu.memory_space<smem>>) -> (i32, i32) {
    %c0_i32 = arith.constant 0 : i32
    %c0_i32_0 = arith.constant 0 : i32
    %c0_i32_1 = arith.constant 0 : i32
    return %c0_i32, %c0_i32_0 : i32, i32
  }
  func.func @transform_46(%arg0: i32, %arg1: memref<2x8xi32, #tpu.memory_space<smem>>) -> (i32, i32) {
    %c0_i32 = arith.constant 0 : i32
    %c0_i32_0 = arith.constant 0 : i32
    %c0_i32_1 = arith.constant 0 : i32
    return %c0_i32, %c0_i32_0 : i32, i32
  }
  func.func @transform_47(%arg0: i32, %arg1: memref<2x8xi32, #tpu.memory_space<smem>>) -> (i32, i32, i32) {
    %c0_i32 = arith.constant 0 : i32
    %c0_i32_0 = arith.constant 0 : i32
    %c0_i32_1 = arith.constant 0 : i32
    return %arg0, %c0_i32, %c0_i32_0 : i32, i32, i32
  }
  func.func @transform_48(%arg0: i32, %arg1: memref<2x8xi32, #tpu.memory_space<smem>>) -> (i32, i32, i32) {
    %c0_i32 = arith.constant 0 : i32
    %c0_i32_0 = arith.constant 0 : i32
    %c0_i32_1 = arith.constant 0 : i32
    return %arg0, %c0_i32, %c0_i32_0 : i32, i32, i32
  }
  func.func @transform_49(%arg0: i32, %arg1: memref<2x8xi32, #tpu.memory_space<smem>>) -> (i32, i32, i32) {
    %c0_i32 = arith.constant 0 : i32
    %c0_i32_0 = arith.constant 0 : i32
    %c0_i32_1 = arith.constant 0 : i32
    return %arg0, %c0_i32, %c0_i32_0 : i32, i32, i32
  }
  func.func @transform_50(%arg0: i32, %arg1: memref<2x8xi32, #tpu.memory_space<smem>>) -> (i32, i32, i32) {
    %c0_i32 = arith.constant 0 : i32
    %c0_i32_0 = arith.constant 0 : i32
    %c0_i32_1 = arith.constant 0 : i32
    return %arg0, %c0_i32, %c0_i32_0 : i32, i32, i32
  }
  func.func @transform_51(%arg0: i32, %arg1: memref<2x8xi32, #tpu.memory_space<smem>>) -> (i32, i32, i32) {
    %c0_i32 = arith.constant 0 : i32
    %c0_i32_0 = arith.constant 0 : i32
    %c0_i32_1 = arith.constant 0 : i32
    return %arg0, %c0_i32, %c0_i32_0 : i32, i32, i32
  }
}

</mosaic_0001>

<llo_original>
// kernel: forward.1
$region0: #{forward.1}
  #allocation0 [shape = 'u32[]', space=smem, size = 0x4, offset = 0x4, fixed_abs, tag = 'smem constant byte address 0x4 - core index']
  #allocation1 [shape = 'u32[72,128]{1,0:T(1,128)}', space=vmem, size = 0x9000, scoped, tag = 'internal scratch']
  #allocation2 [shape = 's32[1]{0}', space=sflag, size = 0x4, scoped, tag = 'scoped memory for forward.1']
  #allocation3 [shape = 'u8[1024]{0}', space=smem, size = 0x400, scoped, tag = 'prefetched SMEM operand 0']
  %s0 = inlined_call_operand.smem [shape: u32[53], index: -1, kind: input, shape index: {}]
  %s1 = sld [smem:[%s0]]
  %s2 = scalar_lea.smem %s0, 1
  %s3 = sld [smem:[%s2]]
  %s4 = scalar_lea.smem %s0, 2
  %s5 = sld [smem:[%s4]]
  %s6 = scalar_lea.smem %s0, 3
  %s7 = sld [smem:[%s6]]
  %s8 = scalar_lea.smem %s0, 4
  %s9 = sld [smem:[%s8]]
  %s10 = scalar_lea.smem %s0, 5
  %s11 = sld [smem:[%s10]]
  %s12 = scalar_lea.smem %s0, 6
  %s13 = sld [smem:[%s12]]
  %s14 = scalar_lea.smem %s0, 7
  %s15 = sld [smem:[%s14]]
  %s16 = scalar_lea.smem %s0, 8
  %s17 = sld [smem:[%s16]]
  %s18 = scalar_lea.smem %s0, 9
  %s19 = sld [smem:[%s18]]
  %s20 = scalar_lea.smem %s0, 10
  %s21 = sld [smem:[%s20]]
  %s22 = scalar_lea.smem %s0, 11
  %s23 = sld [smem:[%s22]]
  %s24 = scalar_lea.smem %s0, 12
  %s25 = sld [smem:[%s24]]
  %s26 = scalar_lea.smem %s0, 13
  %s27 = sld [smem:[%s26]]
  %s28 = scalar_lea.smem %s0, 14
  %s29 = sld [smem:[%s28]]
  %s30 = scalar_lea.smem %s0, 15
  %s31 = sld [smem:[%s30]]
  %s32 = scalar_lea.smem %s0, 16
  %s33 = sld [smem:[%s32]]
  %s34 = scalar_lea.smem %s0, 17
  %s35 = sld [smem:[%s34]]
  %s36 = scalar_lea.smem %s0, 18
  %s37 = sld [smem:[%s36]]
  %s38 = scalar_lea.smem %s0, 19
  %s39 = sld [smem:[%s38]]
  %s40 = scalar_lea.smem %s0, 20
  %s41 = sld [smem:[%s40]]
  %s42 = scalar_lea.smem %s0, 21
  %s43 = sld [smem:[%s42]]
  %s44 = scalar_lea.smem %s0, 22
  %s45 = sld [smem:[%s44]]
  %s46 = scalar_lea.smem %s0, 23
  %s47 = sld [smem:[%s46]]
  %s48 = scalar_lea.smem %s0, 24
  %s49 = sld [smem:[%s48]]
  %s50 = scalar_lea.smem %s0, 25
  %s51 = sld [smem:[%s50]]
  %s52 = scalar_lea.smem %s0, 26
  %s53 = sld [smem:[%s52]]
  %s54 = scalar_lea.smem %s0, 27
  %s55 = sld [smem:[%s54]]
  %s56 = scalar_lea.smem %s0, 28
  %s57 = sld [smem:[%s56]]
  %s58 = scalar_lea.smem %s0, 29
  %s59 = sld [smem:[%s58]]
  %s60 = scalar_lea.smem %s0, 30
  %s61 = sld [smem:[%s60]]
  %s62 = scalar_lea.smem %s0, 31
  %s63 = sld [smem:[%s62]]
  %s64 = scalar_lea.smem %s0, 32
  %s65 = sld [smem:[%s64]]
  %s66 = scalar_lea.smem %s0, 33
  %s67 = sld [smem:[%s66]]
  %s68 = scalar_lea.smem %s0, 34
  %s69 = sld [smem:[%s68]]
  %s70 = scalar_lea.smem %s0, 35
  %s71 = sld [smem:[%s70]]
  %s72 = scalar_lea.smem %s0, 36
  %s73 = sld [smem:[%s72]]
  %s74 = scalar_lea.smem %s0, 37
  %s75 = sld [smem:[%s74]]
  %s76 = scalar_lea.smem %s0, 38
  %s77 = sld [smem:[%s76]]
  %s78 = scalar_lea.smem %s0, 39
  %s79 = sld [smem:[%s78]]
  %s80 = scalar_lea.smem %s0, 40
  %s81 = sld [smem:[%s80]]
  %s82 = scalar_lea.smem %s0, 41
  %s83 = sld [smem:[%s82]]
  %s84 = scalar_lea.smem %s0, 42
  %s85 = sld [smem:[%s84]]
  %s86 = scalar_lea.smem %s0, 43
  %s87 = sld [smem:[%s86]]
  %s88 = scalar_lea.smem %s0, 44
  %s89 = sld [smem:[%s88]]
  %s90 = scalar_lea.smem %s0, 45
  %s91 = sld [smem:[%s90]]
  %s92 = scalar_lea.smem %s0, 46
  %s93 = sld [smem:[%s92]]
  %s94 = scalar_lea.smem %s0, 47
  %s95 = sld [smem:[%s94]]
  %s96 = scalar_lea.smem %s0, 48
  %s97 = sld [smem:[%s96]]
  %s98 = scalar_lea.smem %s0, 49
  %s99 = sld [smem:[%s98]]
  %s100 = scalar_lea.smem %s0, 50
  %s101 = sld [smem:[%s100]]
  %s102 = scalar_lea.smem %s0, 51
  %s103 = sld [smem:[%s102]]
  %s104 = scalar_lea.smem %s0, 52
  %s105 = sld [smem:[%s104]]
  %106 = xla_tuple %s99, %s101, %s103, %s105
  %s107 = sld [smem:[#allocation0]]
  $region313: #{forward.1} parent=0
    _
  %s109 = ssub.s32 1, %s107
  %s110 = scalar_select 0, %s109, %s107
  %s112 = sshll.u32 %s1, 4
  %s113 = int_to_ptr.vmem [resolvable:$true] %s112
  %115 = dma.vmem_to_smem %s113, 32, [#allocation3], [#allocation2]
  %117 = dma.done [#allocation2], 32
  %118 = sfence
  $region1: #{forward.1} parent=0
    #allocation4 [shape = 'u8[8192]{0}', space=vmem, size = 0x2000, scoped, tag = 'input window, operand 9, single buffered']
    #allocation5 [shape = 's32[2]{0}', space=sflag, size = 0x8, scoped, tag = 'scoped memory for forward.1']
    #allocation6 [shape = 's32[2]{0}', space=sflag, size = 0x8, scoped, tag = 'scoped memory for forward.1']
    #allocation7 [shape = 'u8[32768]{0}', space=vmem, size = 0x8000, scoped, tag = 'input window, operand 10, single buffered']
    #allocation8 [shape = 's32[1]{0}', space=sflag, size = 0x4, scoped, tag = 'scoped memory for forward.1']
    #allocation9 [shape = 'u8[8192]{0}', space=vmem, size = 0x2000, scoped, tag = 'input window, operand 11, single buffered']
    #allocation10 [shape = 'u8[8192]{0}', space=vmem, size = 0x2000, scoped, tag = 'input window, operand 12, single buffered']
    #allocation11 [shape = 's32[1]{0}', space=sflag, size = 0x4, scoped, tag = 'scoped memory for forward.1']
    #allocation12 [shape = 'u8[4096]{0}', space=vmem, size = 0x1000, scoped, tag = 'input window, operand 15, single buffered']
    #allocation13 [shape = 'u8[2048]{0}', space=vmem, size = 0x800, scoped, tag = 'input window, operand 17, single buffered']
    #allocation14 [shape = 's32[1]{0}', space=sflag, size = 0x4, scoped, tag = 'scoped memory for forward.1']
    #allocation15 [shape = 'u8[4096]{0}', space=vmem, size = 0x1000, scoped, tag = 'input window, operand 19, single buffered']
    #allocation16 [shape = 'u8[16384]{0}', space=vmem, size = 0x4000, scoped, tag = 'input window, operand 20, single buffered']
    #allocation17 [shape = 's32[1]{0}', space=sflag, size = 0x4, scoped, tag = 'scoped memory for forward.1']
    #allocation18 [shape = 'u8[8192]{0}', space=vmem, size = 0x2000, scoped, tag = 'input window, operand 29, single buffered']
    #allocation19 [shape = 'u8[32768]{0}', space=vmem, size = 0x8000, scoped, tag = 'input window, operand 30, single buffered']
    #allocation20 [shape = 's32[1]{0}', space=sflag, size = 0x4, scoped, tag = 'scoped memory for forward.1']
    #allocation21 [shape = 'u8[8192]{0}', space=vmem, size = 0x2000, scoped, tag = 'input window, operand 31, single buffered']
    #allocation22 [shape = 'u8[8192]{0}', space=vmem, size = 0x2000, scoped, tag = 'input window, operand 32, single buffered']
    #allocation23 [shape = 's32[1]{0}', space=sflag, size = 0x4, scoped, tag = 'scoped memory for forward.1']
    #allocation24 [shape = 'u8[8192]{0}', space=vmem, size = 0x2000, scoped, tag = 'input window, operand 37, single buffered']
    #allocation25 [shape = 'u8[8192]{0}', space=vmem, size = 0x2000, scoped, tag = 'input window, operand 39, single buffered']
    #allocation26 [shape = 's32[1]{0}', space=sflag, size = 0x4, scoped, tag = 'scoped memory for forward.1']
    #allocation27 [shape = 'u8[8192]{0}', space=vmem, size = 0x2000, scoped, tag = 'input window, operand 43, single buffered']
    #allocation28 [shape = 'u8[8192]{0}', space=vmem, size = 0x2000, scoped, tag = 'input window, operand 47, single buffered']
    #allocation29 [shape = 's32[1]{0}', space=sflag, size = 0x4, scoped, tag = 'scoped memory for forward.1']
    #allocation30 [shape = 'u8[8192]{0}', space=vmem, size = 0x2000, scoped, tag = 'output window, operand 0']
    #allocation31 [shape = 'u8[1024]{0}', space=vmem, size = 0x400, scoped, tag = 'output window, operand 1']
    #allocation32 [shape = 's32[2]{0}', space=sflag, size = 0x8, scoped, tag = 'scoped memory for forward.1']
    #allocation33 [shape = 'u8[1024]{0}', space=vmem, size = 0x400, scoped, tag = 'output window, operand 2']
    %119 = vsyncpa [#allocation5], 0
    %120 = vsyncpa [#allocation8], 0
    %121 = vsyncpa [#allocation11], 0
    %122 = vsyncpa [#allocation14], 0
    %123 = vsyncpa [#allocation17], 0
    %124 = vsyncpa [#allocation20], 0
    %125 = vsyncpa [#allocation23], 0
    %126 = vsyncpa [#allocation26], 0
    %127 = vsyncpa [#allocation29], 0
    %128 = vsyncpa [#allocation6], 0
    %s129 = scalar_lea.sflag [#allocation6], 1
    %130 = vsyncpa %s129, 0
    %131 = vsyncpa [#allocation32], 0
    %s132 = scalar_lea.sflag [#allocation32], 1
    %133 = vsyncpa %s132, 0
    loop: start=0, step=1, limit=4
    $region2: #{forward.1} parent=1 // loop_pre_header
      _
    $region3: #{forward.1} parent=1 // loop_header
      %s135 = sphi 0, %s139
      %p136 = scmp.ge.s32.totalorder %s135, 4
      %s143 = sphi 0, %s143
      %s145 = sphi 0, %s143
      %s146 = sphi 0, %s145
      %s160 = sphi 0, %s146
      %s164 = sphi 0, %s164
      %s166 = sphi 0, %s164
      %s167 = sphi 0, %s166
      %s181 = sphi 0, %s167
      %s185 = sphi 0, %s185
      %s187 = sphi 0, %s185
      %s188 = sphi 0, %s187
      %s202 = sphi 0, %s188
      %s206 = sphi 0, %s206
      %s208 = sphi 0, %s206
      %s209 = sphi 0, %s208
      %s223 = sphi 0, %s209
      %s227 = sphi 0, %s227
      %s229 = sphi 0, %s227
      %s230 = sphi 0, %s229
      %s244 = sphi 0, %s230
      %s248 = sphi 0, %s248
      %s250 = sphi 0, %s248
      %s251 = sphi 0, %s250
      %s265 = sphi 0, %s251
      %s269 = sphi 0, %s269
      %s271 = sphi 0, %s269
      %s272 = sphi 0, %s271
      %s286 = sphi 0, %s272
      %s290 = sphi 0, %s290
      %s292 = sphi 0, %s290
      %s293 = sphi 0, %s292
      %s307 = sphi 0, %s293
      %s311 = sphi 0, %s311
      %s313 = sphi 0, %s311
      %s314 = sphi 0, %s313
      %s328 = sphi 0, %s314
      %s332 = sphi 0, %s332
      %s334 = sphi 0, %s332
      %s335 = sphi 0, %s334
      %s349 = sphi 0, %s335
      %s353 = sphi 0, %s353
      %s355 = sphi 0, %s353
      %s356 = sphi 0, %s355
      %s370 = sphi 0, %s356
      %s374 = sphi 0, %s374
      %s376 = sphi 0, %s374
      %s377 = sphi 0, %s376
      %s391 = sphi 0, %s377
      %s395 = sphi 0, %s395
      %s397 = sphi 0, %s395
      %s398 = sphi 0, %s397
      %s412 = sphi 0, %s398
      %s416 = sphi 0, %s416
      %s418 = sphi 0, %s416
      %s419 = sphi 0, %s418
      %s433 = sphi 0, %s419
      %s437 = sphi 0, %s437
      %s439 = sphi 0, %s437
      %s440 = sphi 0, %s439
      %s454 = sphi 0, %s440
      %s458 = sphi 0, %s458
      %s460 = sphi 0, %s458
      %s461 = sphi 0, %s460
      %s475 = sphi 0, %s461
      %s479 = sphi 0, %s479
      %s481 = sphi 0, %s479
      %s482 = sphi 0, %s481
      %s496 = sphi 0, %s482
      %s500 = sphi 0, %s500
      %s502 = sphi 0, %s500
      %s503 = sphi 0, %s502
      %s517 = sphi 0, %s503
      %s521 = sphi 0, %s521
      %s523 = sphi 0, %s521
      %s524 = sphi 0, %s523
      %s538 = sphi 0, %s524
      %s542 = sphi 0, %s542
      %s544 = sphi 0, %s542
      %s545 = sphi 0, %s544
      %s559 = sphi 0, %s545
      %s563 = sphi 0, %s563
      %s565 = sphi 0, %s563
      %s566 = sphi 0, %s565
      %s580 = sphi 0, %s566
      %s584 = sphi 0, %s584
      %s586 = sphi 0, %s584
      %s587 = sphi 0, %s586
      %s601 = sphi 0, %s587
      %s605 = sphi 0, %s605
      %s607 = sphi 0, %s605
      %s608 = sphi 0, %s607
      %s622 = sphi 0, %s608
      %s626 = sphi 0, %s626
      %s628 = sphi 0, %s626
      %s629 = sphi 0, %s628
      %s643 = sphi 0, %s629
      %s647 = sphi 0, %s647
      %s649 = sphi 0, %s647
      %s650 = sphi 0, %s649
      %s664 = sphi 0, %s650
      %s668 = sphi 0, %s668
      %s670 = sphi 0, %s668
      %s671 = sphi 0, %s670
      %s685 = sphi 0, %s671
      %s689 = sphi 0, %s689
      %s691 = sphi 0, %s689
      %s692 = sphi 0, %s691
      %s706 = sphi 0, %s692
      %s710 = sphi 0, %s710
      %s712 = sphi 0, %s710
      %s713 = sphi 0, %s712
      %s727 = sphi 0, %s713
      %s731 = sphi 0, %s731
      %s733 = sphi 0, %s731
      %s734 = sphi 0, %s733
      %s748 = sphi 0, %s734
      %s752 = sphi 0, %s752
      %s754 = sphi 0, %s752
      %s755 = sphi 0, %s754
      %s769 = sphi 0, %s755
      %s773 = sphi 0, %s773
      %s775 = sphi 0, %s773
      %s776 = sphi 0, %s775
      %s790 = sphi 0, %s776
      %s794 = sphi 0, %s794
      %s796 = sphi 0, %s794
      %s797 = sphi 0, %s796
      %s811 = sphi 0, %s797
      %s815 = sphi 0, %s815
      %s817 = sphi 0, %s815
      %s818 = sphi 0, %s817
      %s832 = sphi 0, %s818
      %s836 = sphi 0, %s836
      %s838 = sphi 0, %s836
      %s839 = sphi 0, %s838
      %s853 = sphi 0, %s839
      %s857 = sphi 0, %s857
      %s859 = sphi 0, %s857
      %s860 = sphi 0, %s859
      %s874 = sphi 0, %s860
      %s878 = sphi 0, %s878
      %s880 = sphi 0, %s878
      %s881 = sphi 0, %s880
      %s895 = sphi 0, %s881
      %s899 = sphi 0, %s899
      %s901 = sphi 0, %s899
      %s902 = sphi 0, %s901
      %s916 = sphi 0, %s902
      %s920 = sphi 0, %s920
      %s922 = sphi 0, %s920
      %s923 = sphi 0, %s922
      %s937 = sphi 0, %s923
      %s941 = sphi 0, %s941
      %s943 = sphi 0, %s941
      %s944 = sphi 0, %s943
      %s958 = sphi 0, %s944
      %s962 = sphi 0, %s962
      %s964 = sphi 0, %s962
      %s965 = sphi 0, %s964
      %s979 = sphi 0, %s965
      %s983 = sphi 0, %s983
      %s985 = sphi 0, %s983
      %s986 = sphi 0, %s985
      %s1000 = sphi 0, %s986
      %s1004 = sphi 0, %s1004
      %s1006 = sphi 0, %s1004
      %s1007 = sphi 0, %s1006
      %s1021 = sphi 0, %s1007
      %s1025 = sphi 0, %s1025
      %s1027 = sphi 0, %s1025
      %s1028 = sphi 0, %s1027
      %s1042 = sphi 0, %s1028
      %s1046 = sphi 0, %s1046
      %s1048 = sphi 0, %s1046
      %s1049 = sphi 0, %s1048
      %s1063 = sphi 0, %s1049
      %s1067 = sphi 0, %s1067
      %s1069 = sphi 0, %s1067
      %s1070 = sphi 0, %s1069
      %s1084 = sphi 0, %s1070
      %s1088 = sphi 0, %s1088
      %s1090 = sphi 0, %s1088
      %s1091 = sphi 0, %s1090
      %s1105 = sphi 0, %s1091
      %s1109 = sphi 0, %s1109
      %s1111 = sphi 0, %s1109
      %s1112 = sphi 0, %s1111
      %s1126 = sphi 0, %s1112
      %s1132 = sphi 0, %s1134
      %s1135 = sphi 0, %s1132
      %s1136 = sphi 0, %s1135
      %s1152 = sphi 0, %s1136
      %s1158 = sphi 0, %s1160
      %s1161 = sphi 0, %s1158
      %s1162 = sphi 0, %s1161
      %s1178 = sphi 0, %s1162
      %s1184 = sphi 0, %s1186
      %s1187 = sphi 0, %s1184
      %s1188 = sphi 0, %s1187
      %s1204 = sphi 0, %s1188
      %s1210 = sphi 0, %s1212
      %s1213 = sphi 0, %s1210
      %s1214 = sphi 0, %s1213
      %s1230 = sphi 0, %s1214
      %s1236 = sphi 0, %s1238
      %s1239 = sphi 0, %s1236
      %s1240 = sphi 0, %s1239
      %s1256 = sphi 0, %s1240
    $region4: #{forward.1} parent=1 // loop_header_branch
      %138 = sbr.rel (%p136) target = $region8
    $region5: #{forward.1} parent=1 // loop_body
      %s140 = ssub.s32 %s135, 1
      %s141 = ssub.s32 %s135, 2
      %s142 = sadd.s32 %s135, 1
      %s144 = sadd.s32 %s143, 1
      %p147 = scmp.eq.s32.totalorder %s135, 1
      %p148 = scmp.ne.s32.totalorder %s143, %s145
      %p149 = scmp.eq.s32.totalorder %s135, 0
      %p150 = por %p148, %p149
      %p151 = scmp.ne.s32.totalorder %s143, %s145
      %p152 = scmp.eq.s32.totalorder %s140, 1
      %p153 = por %p151, %p152
      %p154 = scmp.ne.s32.totalorder %s145, %s146
      %p155 = scmp.eq.s32.totalorder %s140, 0
      %p156 = por %p154, %p155
      %p157 = scmp.ne.s32.totalorder %s145, %s146
      %p158 = scmp.eq.s32.totalorder %s141, 1
      %p159 = por %p157, %p158
      %p161 = scmp.ne.s32.totalorder %s146, %s160
      %p162 = scmp.eq.s32.totalorder %s141, 0
      %p163 = por %p161, %p162
      %s165 = sadd.s32 %s164, 1
      %p168 = scmp.eq.s32.totalorder %s135, 1
      %p169 = scmp.ne.s32.totalorder %s164, %s166
      %p170 = scmp.eq.s32.totalorder %s135, 0
      %p171 = por %p169, %p170
      %p172 = scmp.ne.s32.totalorder %s164, %s166
      %p173 = scmp.eq.s32.totalorder %s140, 1
      %p174 = por %p172, %p173
      %p175 = scmp.ne.s32.totalorder %s166, %s167
      %p176 = scmp.eq.s32.totalorder %s140, 0
      %p177 = por %p175, %p176
      %p178 = scmp.ne.s32.totalorder %s166, %s167
      %p179 = scmp.eq.s32.totalorder %s141, 1
      %p180 = por %p178, %p179
      %p182 = scmp.ne.s32.totalorder %s167, %s181
      %p183 = scmp.eq.s32.totalorder %s141, 0
      %p184 = por %p182, %p183
      %s186 = sadd.s32 %s185, 1
      %p189 = scmp.eq.s32.totalorder %s135, 1
      %p190 = scmp.ne.s32.totalorder %s185, %s187
      %p191 = scmp.eq.s32.totalorder %s135, 0
      %p192 = por %p190, %p191
      %p193 = scmp.ne.s32.totalorder %s185, %s187
      %p194 = scmp.eq.s32.totalorder %s140, 1
      %p195 = por %p193, %p194
      %p196 = scmp.ne.s32.totalorder %s187, %s188
      %p197 = scmp.eq.s32.totalorder %s140, 0
      %p198 = por %p196, %p197
      %p199 = scmp.ne.s32.totalorder %s187, %s188
      %p200 = scmp.eq.s32.totalorder %s141, 1
      %p201 = por %p199, %p200
      %p203 = scmp.ne.s32.totalorder %s188, %s202
      %p204 = scmp.eq.s32.totalorder %s141, 0
      %p205 = por %p203, %p204
      %s207 = sadd.s32 %s206, 1
      %p210 = scmp.eq.s32.totalorder %s135, 1
      %p211 = scmp.ne.s32.totalorder %s206, %s208
      %p212 = scmp.eq.s32.totalorder %s135, 0
      %p213 = por %p211, %p212
      %p214 = scmp.ne.s32.totalorder %s206, %s208
      %p215 = scmp.eq.s32.totalorder %s140, 1
      %p216 = por %p214, %p215
      %p217 = scmp.ne.s32.totalorder %s208, %s209
      %p218 = scmp.eq.s32.totalorder %s140, 0
      %p219 = por %p217, %p218
      %p220 = scmp.ne.s32.totalorder %s208, %s209
      %p221 = scmp.eq.s32.totalorder %s141, 1
      %p222 = por %p220, %p221
      %p224 = scmp.ne.s32.totalorder %s209, %s223
      %p225 = scmp.eq.s32.totalorder %s141, 0
      %p226 = por %p224, %p225
      %s228 = sadd.s32 %s227, 1
      %p231 = scmp.eq.s32.totalorder %s135, 1
      %p232 = scmp.ne.s32.totalorder %s227, %s229
      %p233 = scmp.eq.s32.totalorder %s135, 0
      %p234 = por %p232, %p233
      %p235 = scmp.ne.s32.totalorder %s227, %s229
      %p236 = scmp.eq.s32.totalorder %s140, 1
      %p237 = por %p235, %p236
      %p238 = scmp.ne.s32.totalorder %s229, %s230
      %p239 = scmp.eq.s32.totalorder %s140, 0
      %p240 = por %p238, %p239
      %p241 = scmp.ne.s32.totalorder %s229, %s230
      %p242 = scmp.eq.s32.totalorder %s141, 1
      %p243 = por %p241, %p242
      %p245 = scmp.ne.s32.totalorder %s230, %s244
      %p246 = scmp.eq.s32.totalorder %s141, 0
      %p247 = por %p245, %p246
      %s249 = sadd.s32 %s248, 1
      %p252 = scmp.eq.s32.totalorder %s135, 1
      %p253 = scmp.ne.s32.totalorder %s248, %s250
      %p254 = scmp.eq.s32.totalorder %s135, 0
      %p255 = por %p253, %p254
      %p256 = scmp.ne.s32.totalorder %s248, %s250
      %p257 = scmp.eq.s32.totalorder %s140, 1
      %p258 = por %p256, %p257
      %p259 = scmp.ne.s32.totalorder %s250, %s251
      %p260 = scmp.eq.s32.totalorder %s140, 0
      %p261 = por %p259, %p260
      %p262 = scmp.ne.s32.totalorder %s250, %s251
      %p263 = scmp.eq.s32.totalorder %s141, 1
      %p264 = por %p262, %p263
      %p266 = scmp.ne.s32.totalorder %s251, %s265
      %p267 = scmp.eq.s32.totalorder %s141, 0
      %p268 = por %p266, %p267
      %s270 = sadd.s32 %s269, 1
      %p273 = scmp.eq.s32.totalorder %s135, 1
      %p274 = scmp.ne.s32.totalorder %s269, %s271
      %p275 = scmp.eq.s32.totalorder %s135, 0
      %p276 = por %p274, %p275
      %p277 = scmp.ne.s32.totalorder %s269, %s271
      %p278 = scmp.eq.s32.totalorder %s140, 1
      %p279 = por %p277, %p278
      %p280 = scmp.ne.s32.totalorder %s271, %s272
      %p281 = scmp.eq.s32.totalorder %s140, 0
      %p282 = por %p280, %p281
      %p283 = scmp.ne.s32.totalorder %s271, %s272
      %p284 = scmp.eq.s32.totalorder %s141, 1
      %p285 = por %p283, %p284
      %p287 = scmp.ne.s32.totalorder %s272, %s286
      %p288 = scmp.eq.s32.totalorder %s141, 0
      %p289 = por %p287, %p288
      %s291 = sadd.s32 %s290, 1
      %p294 = scmp.eq.s32.totalorder %s135, 1
      %p295 = scmp.ne.s32.totalorder %s290, %s292
      %p296 = scmp.eq.s32.totalorder %s135, 0
      %p297 = por %p295, %p296
      %p298 = scmp.ne.s32.totalorder %s290, %s292
      %p299 = scmp.eq.s32.totalorder %s140, 1
      %p300 = por %p298, %p299
      %p301 = scmp.ne.s32.totalorder %s292, %s293
      %p302 = scmp.eq.s32.totalorder %s140, 0
      %p303 = por %p301, %p302
      %p304 = scmp.ne.s32.totalorder %s292, %s293
      %p305 = scmp.eq.s32.totalorder %s141, 1
      %p306 = por %p304, %p305
      %p308 = scmp.ne.s32.totalorder %s293, %s307
      %p309 = scmp.eq.s32.totalorder %s141, 0
      %p310 = por %p308, %p309
      %s312 = sadd.s32 %s311, 1
      %p315 = scmp.eq.s32.totalorder %s135, 1
      %p316 = scmp.ne.s32.totalorder %s311, %s313
      %p317 = scmp.eq.s32.totalorder %s135, 0
      %p318 = por %p316, %p317
      %p319 = scmp.ne.s32.totalorder %s311, %s313
      %p320 = scmp.eq.s32.totalorder %s140, 1
      %p321 = por %p319, %p320
      %p322 = scmp.ne.s32.totalorder %s313, %s314
      %p323 = scmp.eq.s32.totalorder %s140, 0
      %p324 = por %p322, %p323
      %p325 = scmp.ne.s32.totalorder %s313, %s314
      %p326 = scmp.eq.s32.totalorder %s141, 1
      %p327 = por %p325, %p326
      %p329 = scmp.ne.s32.totalorder %s314, %s328
      %p330 = scmp.eq.s32.totalorder %s141, 0
      %p331 = por %p329, %p330
      %s333 = sadd.s32 %s332, 1
      %p336 = scmp.eq.s32.totalorder %s135, 1
      %p337 = scmp.ne.s32.totalorder %s332, %s334
      %p338 = scmp.eq.s32.totalorder %s135, 0
      %p339 = por %p337, %p338
      %p340 = scmp.ne.s32.totalorder %s332, %s334
      %p341 = scmp.eq.s32.totalorder %s140, 1
      %p342 = por %p340, %p341
      %p343 = scmp.ne.s32.totalorder %s334, %s335
      %p344 = scmp.eq.s32.totalorder %s140, 0
      %p345 = por %p343, %p344
      %p346 = scmp.ne.s32.totalorder %s334, %s335
      %p347 = scmp.eq.s32.totalorder %s141, 1
      %p348 = por %p346, %p347
      %p350 = scmp.ne.s32.totalorder %s335, %s349
      %p351 = scmp.eq.s32.totalorder %s141, 0
      %p352 = por %p350, %p351
      %s354 = sadd.s32 %s353, 1
      %p357 = scmp.eq.s32.totalorder %s135, 1
      %p358 = scmp.ne.s32.totalorder %s353, %s355
      %p359 = scmp.eq.s32.totalorder %s135, 0
      %p360 = por %p358, %p359
      %p361 = scmp.ne.s32.totalorder %s353, %s355
      %p362 = scmp.eq.s32.totalorder %s140, 1
      %p363 = por %p361, %p362
      %p364 = scmp.ne.s32.totalorder %s355, %s356
      %p365 = scmp.eq.s32.totalorder %s140, 0
      %p366 = por %p364, %p365
      %p367 = scmp.ne.s32.totalorder %s355, %s356
      %p368 = scmp.eq.s32.totalorder %s141, 1
      %p369 = por %p367, %p368
      %p371 = scmp.ne.s32.totalorder %s356, %s370
      %p372 = scmp.eq.s32.totalorder %s141, 0
      %p373 = por %p371, %p372
      %s375 = sadd.s32 %s374, 1
      %p378 = scmp.eq.s32.totalorder %s135, 1
      %p379 = scmp.ne.s32.totalorder %s374, %s376
      %p380 = scmp.eq.s32.totalorder %s135, 0
      %p381 = por %p379, %p380
      %p382 = scmp.ne.s32.totalorder %s374, %s376
      %p383 = scmp.eq.s32.totalorder %s140, 1
      %p384 = por %p382, %p383
      %p385 = scmp.ne.s32.totalorder %s376, %s377
      %p386 = scmp.eq.s32.totalorder %s140, 0
      %p387 = por %p385, %p386
      %p388 = scmp.ne.s32.totalorder %s376, %s377
      %p389 = scmp.eq.s32.totalorder %s141, 1
      %p390 = por %p388, %p389
      %p392 = scmp.ne.s32.totalorder %s377, %s391
      %p393 = scmp.eq.s32.totalorder %s141, 0
      %p394 = por %p392, %p393
      %s396 = sadd.s32 %s395, 1
      %p399 = scmp.eq.s32.totalorder %s135, 1
      %p400 = scmp.ne.s32.totalorder %s395, %s397
      %p401 = scmp.eq.s32.totalorder %s135, 0
      %p402 = por %p400, %p401
      %p403 = scmp.ne.s32.totalorder %s395, %s397
      %p404 = scmp.eq.s32.totalorder %s140, 1
      %p405 = por %p403, %p404
      %p406 = scmp.ne.s32.totalorder %s397, %s398
      %p407 = scmp.eq.s32.totalorder %s140, 0
      %p408 = por %p406, %p407
      %p409 = scmp.ne.s32.totalorder %s397, %s398
      %p410 = scmp.eq.s32.totalorder %s141, 1
      %p411 = por %p409, %p410
      %p413 = scmp.ne.s32.totalorder %s398, %s412
      %p414 = scmp.eq.s32.totalorder %s141, 0
      %p415 = por %p413, %p414
      %s417 = sadd.s32 %s416, 1
      %p420 = scmp.eq.s32.totalorder %s135, 1
      %p421 = scmp.ne.s32.totalorder %s416, %s418
      %p422 = scmp.eq.s32.totalorder %s135, 0
      %p423 = por %p421, %p422
      %p424 = scmp.ne.s32.totalorder %s416, %s418
      %p425 = scmp.eq.s32.totalorder %s140, 1
      %p426 = por %p424, %p425
      %p427 = scmp.ne.s32.totalorder %s418, %s419
      %p428 = scmp.eq.s32.totalorder %s140, 0
      %p429 = por %p427, %p428
      %p430 = scmp.ne.s32.totalorder %s418, %s419
      %p431 = scmp.eq.s32.totalorder %s141, 1
      %p432 = por %p430, %p431
      %p434 = scmp.ne.s32.totalorder %s419, %s433
      %p435 = scmp.eq.s32.totalorder %s141, 0
      %p436 = por %p434, %p435
      %s438 = sadd.s32 %s437, 1
      %p441 = scmp.eq.s32.totalorder %s135, 1
      %p442 = scmp.ne.s32.totalorder %s437, %s439
      %p443 = scmp.eq.s32.totalorder %s135, 0
      %p444 = por %p442, %p443
      %p445 = scmp.ne.s32.totalorder %s437, %s439
      %p446 = scmp.eq.s32.totalorder %s140, 1
      %p447 = por %p445, %p446
      %p448 = scmp.ne.s32.totalorder %s439, %s440
      %p449 = scmp.eq.s32.totalorder %s140, 0
      %p450 = por %p448, %p449
      %p451 = scmp.ne.s32.totalorder %s439, %s440
      %p452 = scmp.eq.s32.totalorder %s141, 1
      %p453 = por %p451, %p452
      %p455 = scmp.ne.s32.totalorder %s440, %s454
      %p456 = scmp.eq.s32.totalorder %s141, 0
      %p457 = por %p455, %p456
      %s459 = sadd.s32 %s458, 1
      %p462 = scmp.eq.s32.totalorder %s135, 1
      %p463 = scmp.ne.s32.totalorder %s458, %s460
      %p464 = scmp.eq.s32.totalorder %s135, 0
      %p465 = por %p463, %p464
      %p466 = scmp.ne.s32.totalorder %s458, %s460
      %p467 = scmp.eq.s32.totalorder %s140, 1
      %p468 = por %p466, %p467
      %p469 = scmp.ne.s32.totalorder %s460, %s461
      %p470 = scmp.eq.s32.totalorder %s140, 0
      %p471 = por %p469, %p470
      %p472 = scmp.ne.s32.totalorder %s460, %s461
      %p473 = scmp.eq.s32.totalorder %s141, 1
      %p474 = por %p472, %p473
      %p476 = scmp.ne.s32.totalorder %s461, %s475
      %p477 = scmp.eq.s32.totalorder %s141, 0
      %p478 = por %p476, %p477
      %s480 = sadd.s32 %s479, 1
      %p483 = scmp.eq.s32.totalorder %s135, 1
      %p484 = scmp.ne.s32.totalorder %s479, %s481
      %p485 = scmp.eq.s32.totalorder %s135, 0
      %p486 = por %p484, %p485
      %p487 = scmp.ne.s32.totalorder %s479, %s481
      %p488 = scmp.eq.s32.totalorder %s140, 1
      %p489 = por %p487, %p488
      %p490 = scmp.ne.s32.totalorder %s481, %s482
      %p491 = scmp.eq.s32.totalorder %s140, 0
      %p492 = por %p490, %p491
      %p493 = scmp.ne.s32.totalorder %s481, %s482
      %p494 = scmp.eq.s32.totalorder %s141, 1
      %p495 = por %p493, %p494
      %p497 = scmp.ne.s32.totalorder %s482, %s496
      %p498 = scmp.eq.s32.totalorder %s141, 0
      %p499 = por %p497, %p498
      %s501 = sadd.s32 %s500, 1
      %p504 = scmp.eq.s32.totalorder %s135, 1
      %p505 = scmp.ne.s32.totalorder %s500, %s502
      %p506 = scmp.eq.s32.totalorder %s135, 0
      %p507 = por %p505, %p506
      %p508 = scmp.ne.s32.totalorder %s500, %s502
      %p509 = scmp.eq.s32.totalorder %s140, 1
      %p510 = por %p508, %p509
      %p511 = scmp.ne.s32.totalorder %s502, %s503
      %p512 = scmp.eq.s32.totalorder %s140, 0
      %p513 = por %p511, %p512
      %p514 = scmp.ne.s32.totalorder %s502, %s503
      %p515 = scmp.eq.s32.totalorder %s141, 1
      %p516 = por %p514, %p515
      %p518 = scmp.ne.s32.totalorder %s503, %s517
      %p519 = scmp.eq.s32.totalorder %s141, 0
      %p520 = por %p518, %p519
      %s522 = sadd.s32 %s521, 1
      %p525 = scmp.eq.s32.totalorder %s135, 1
      %p526 = scmp.ne.s32.totalorder %s521, %s523
      %p527 = scmp.eq.s32.totalorder %s135, 0
      %p528 = por %p526, %p527
      %p529 = scmp.ne.s32.totalorder %s521, %s523
      %p530 = scmp.eq.s32.totalorder %s140, 1
      %p531 = por %p529, %p530
      %p532 = scmp.ne.s32.totalorder %s523, %s524
      %p533 = scmp.eq.s32.totalorder %s140, 0
      %p534 = por %p532, %p533
      %p535 = scmp.ne.s32.totalorder %s523, %s524
      %p536 = scmp.eq.s32.totalorder %s141, 1
      %p537 = por %p535, %p536
      %p539 = scmp.ne.s32.totalorder %s524, %s538
      %p540 = scmp.eq.s32.totalorder %s141, 0
      %p541 = por %p539, %p540
      %s543 = sadd.s32 %s542, 1
      %p546 = scmp.eq.s32.totalorder %s135, 1
      %p547 = scmp.ne.s32.totalorder %s542, %s544
      %p548 = scmp.eq.s32.totalorder %s135, 0
      %p549 = por %p547, %p548
      %p550 = scmp.ne.s32.totalorder %s542, %s544
      %p551 = scmp.eq.s32.totalorder %s140, 1
      %p552 = por %p550, %p551
      %p553 = scmp.ne.s32.totalorder %s544, %s545
      %p554 = scmp.eq.s32.totalorder %s140, 0
      %p555 = por %p553, %p554
      %p556 = scmp.ne.s32.totalorder %s544, %s545
      %p557 = scmp.eq.s32.totalorder %s141, 1
      %p558 = por %p556, %p557
      %p560 = scmp.ne.s32.totalorder %s545, %s559
      %p561 = scmp.eq.s32.totalorder %s141, 0
      %p562 = por %p560, %p561
      %s564 = sadd.s32 %s563, 1
      %p567 = scmp.eq.s32.totalorder %s135, 1
      %p568 = scmp.ne.s32.totalorder %s563, %s565
      %p569 = scmp.eq.s32.totalorder %s135, 0
      %p570 = por %p568, %p569
      %p571 = scmp.ne.s32.totalorder %s563, %s565
      %p572 = scmp.eq.s32.totalorder %s140, 1
      %p573 = por %p571, %p572
      %p574 = scmp.ne.s32.totalorder %s565, %s566
      %p575 = scmp.eq.s32.totalorder %s140, 0
      %p576 = por %p574, %p575
      %p577 = scmp.ne.s32.totalorder %s565, %s566
      %p578 = scmp.eq.s32.totalorder %s141, 1
      %p579 = por %p577, %p578
      %p581 = scmp.ne.s32.totalorder %s566, %s580
      %p582 = scmp.eq.s32.totalorder %s141, 0
      %p583 = por %p581, %p582
      %s585 = sadd.s32 %s584, 1
      %p588 = scmp.eq.s32.totalorder %s135, 1
      %p589 = scmp.ne.s32.totalorder %s584, %s586
      %p590 = scmp.eq.s32.totalorder %s135, 0
      %p591 = por %p589, %p590
      %p592 = scmp.ne.s32.totalorder %s584, %s586
      %p593 = scmp.eq.s32.totalorder %s140, 1
      %p594 = por %p592, %p593
      %p595 = scmp.ne.s32.totalorder %s586, %s587
      %p596 = scmp.eq.s32.totalorder %s140, 0
      %p597 = por %p595, %p596
      %p598 = scmp.ne.s32.totalorder %s586, %s587
      %p599 = scmp.eq.s32.totalorder %s141, 1
      %p600 = por %p598, %p599
      %p602 = scmp.ne.s32.totalorder %s587, %s601
      %p603 = scmp.eq.s32.totalorder %s141, 0
      %p604 = por %p602, %p603
      %s606 = sadd.s32 %s605, 1
      %p609 = scmp.eq.s32.totalorder %s135, 1
      %p610 = scmp.ne.s32.totalorder %s605, %s607
      %p611 = scmp.eq.s32.totalorder %s135, 0
      %p612 = por %p610, %p611
      %p613 = scmp.ne.s32.totalorder %s605, %s607
      %p614 = scmp.eq.s32.totalorder %s140, 1
      %p615 = por %p613, %p614
      %p616 = scmp.ne.s32.totalorder %s607, %s608
      %p617 = scmp.eq.s32.totalorder %s140, 0
      %p618 = por %p616, %p617
      %p619 = scmp.ne.s32.totalorder %s607, %s608
      %p620 = scmp.eq.s32.totalorder %s141, 1
      %p621 = por %p619, %p620
      %p623 = scmp.ne.s32.totalorder %s608, %s622
      %p624 = scmp.eq.s32.totalorder %s141, 0
      %p625 = por %p623, %p624
      %s627 = sadd.s32 %s626, 1
      %p630 = scmp.eq.s32.totalorder %s135, 1
      %p631 = scmp.ne.s32.totalorder %s626, %s628
      %p632 = scmp.eq.s32.totalorder %s135, 0
      %p633 = por %p631, %p632
      %p634 = scmp.ne.s32.totalorder %s626, %s628
      %p635 = scmp.eq.s32.totalorder %s140, 1
      %p636 = por %p634, %p635
      %p637 = scmp.ne.s32.totalorder %s628, %s629
      %p638 = scmp.eq.s32.totalorder %s140, 0
      %p639 = por %p637, %p638
      %p640 = scmp.ne.s32.totalorder %s628, %s629
      %p641 = scmp.eq.s32.totalorder %s141, 1
      %p642 = por %p640, %p641
      %p644 = scmp.ne.s32.totalorder %s629, %s643
      %p645 = scmp.eq.s32.totalorder %s141, 0
      %p646 = por %p644, %p645
      %s648 = sadd.s32 %s647, 1
      %p651 = scmp.eq.s32.totalorder %s135, 1
      %p652 = scmp.ne.s32.totalorder %s647, %s649
      %p653 = scmp.eq.s32.totalorder %s135, 0
      %p654 = por %p652, %p653
      %p655 = scmp.ne.s32.totalorder %s647, %s649
      %p656 = scmp.eq.s32.totalorder %s140, 1
      %p657 = por %p655, %p656
      %p658 = scmp.ne.s32.totalorder %s649, %s650
      %p659 = scmp.eq.s32.totalorder %s140, 0
      %p660 = por %p658, %p659
      %p661 = scmp.ne.s32.totalorder %s649, %s650
      %p662 = scmp.eq.s32.totalorder %s141, 1
      %p663 = por %p661, %p662
      %p665 = scmp.ne.s32.totalorder %s650, %s664
      %p666 = scmp.eq.s32.totalorder %s141, 0
      %p667 = por %p665, %p666
      %s669 = sadd.s32 %s668, 1
      %p672 = scmp.eq.s32.totalorder %s135, 1
      %p673 = scmp.ne.s32.totalorder %s668, %s670
      %p674 = scmp.eq.s32.totalorder %s135, 0
      %p675 = por %p673, %p674
      %p676 = scmp.ne.s32.totalorder %s668, %s670
      %p677 = scmp.eq.s32.totalorder %s140, 1
      %p678 = por %p676, %p677
      %p679 = scmp.ne.s32.totalorder %s670, %s671
      %p680 = scmp.eq.s32.totalorder %s140, 0
      %p681 = por %p679, %p680
      %p682 = scmp.ne.s32.totalorder %s670, %s671
      %p683 = scmp.eq.s32.totalorder %s141, 1
      %p684 = por %p682, %p683
      %p686 = scmp.ne.s32.totalorder %s671, %s685
      %p687 = scmp.eq.s32.totalorder %s141, 0
      %p688 = por %p686, %p687
      %s690 = sadd.s32 %s689, 1
      %p693 = scmp.eq.s32.totalorder %s135, 1
      %p694 = scmp.ne.s32.totalorder %s689, %s691
      %p695 = scmp.eq.s32.totalorder %s135, 0
      %p696 = por %p694, %p695
      %p697 = scmp.ne.s32.totalorder %s689, %s691
      %p698 = scmp.eq.s32.totalorder %s140, 1
      %p699 = por %p697, %p698
      %p700 = scmp.ne.s32.totalorder %s691, %s692
      %p701 = scmp.eq.s32.totalorder %s140, 0
      %p702 = por %p700, %p701
      %p703 = scmp.ne.s32.totalorder %s691, %s692
      %p704 = scmp.eq.s32.totalorder %s141, 1
      %p705 = por %p703, %p704
      %p707 = scmp.ne.s32.totalorder %s692, %s706
      %p708 = scmp.eq.s32.totalorder %s141, 0
      %p709 = por %p707, %p708
      %s711 = sadd.s32 %s710, 1
      %p714 = scmp.eq.s32.totalorder %s135, 1
      %p715 = scmp.ne.s32.totalorder %s710, %s712
      %p716 = scmp.eq.s32.totalorder %s135, 0
      %p717 = por %p715, %p716
      %p718 = scmp.ne.s32.totalorder %s710, %s712
      %p719 = scmp.eq.s32.totalorder %s140, 1
      %p720 = por %p718, %p719
      %p721 = scmp.ne.s32.totalorder %s712, %s713
      %p722 = scmp.eq.s32.totalorder %s140, 0
      %p723 = por %p721, %p722
      %p724 = scmp.ne.s32.totalorder %s712, %s713
      %p725 = scmp.eq.s32.totalorder %s141, 1
      %p726 = por %p724, %p725
      %p728 = scmp.ne.s32.totalorder %s713, %s727
      %p729 = scmp.eq.s32.totalorder %s141, 0
      %p730 = por %p728, %p729
      %s732 = sadd.s32 %s731, 1
      %p735 = scmp.eq.s32.totalorder %s135, 1
      %p736 = scmp.ne.s32.totalorder %s731, %s733
      %p737 = scmp.eq.s32.totalorder %s135, 0
      %p738 = por %p736, %p737
      %p739 = scmp.ne.s32.totalorder %s731, %s733
      %p740 = scmp.eq.s32.totalorder %s140, 1
      %p741 = por %p739, %p740
      %p742 = scmp.ne.s32.totalorder %s733, %s734
      %p743 = scmp.eq.s32.totalorder %s140, 0
      %p744 = por %p742, %p743
      %p745 = scmp.ne.s32.totalorder %s733, %s734
      %p746 = scmp.eq.s32.totalorder %s141, 1
      %p747 = por %p745, %p746
      %p749 = scmp.ne.s32.totalorder %s734, %s748
      %p750 = scmp.eq.s32.totalorder %s141, 0
      %p751 = por %p749, %p750
      %s753 = sadd.s32 %s752, 1
      %p756 = scmp.eq.s32.totalorder %s135, 1
      %p757 = scmp.ne.s32.totalorder %s752, %s754
      %p758 = scmp.eq.s32.totalorder %s135, 0
      %p759 = por %p757, %p758
      %p760 = scmp.ne.s32.totalorder %s752, %s754
      %p761 = scmp.eq.s32.totalorder %s140, 1
      %p762 = por %p760, %p761
      %p763 = scmp.ne.s32.totalorder %s754, %s755
      %p764 = scmp.eq.s32.totalorder %s140, 0
      %p765 = por %p763, %p764
      %p766 = scmp.ne.s32.totalorder %s754, %s755
      %p767 = scmp.eq.s32.totalorder %s141, 1
      %p768 = por %p766, %p767
      %p770 = scmp.ne.s32.totalorder %s755, %s769
      %p771 = scmp.eq.s32.totalorder %s141, 0
      %p772 = por %p770, %p771
      %s774 = sadd.s32 %s773, 1
      %p777 = scmp.eq.s32.totalorder %s135, 1
      %p778 = scmp.ne.s32.totalorder %s773, %s775
      %p779 = scmp.eq.s32.totalorder %s135, 0
      %p780 = por %p778, %p779
      %p781 = scmp.ne.s32.totalorder %s773, %s775
      %p782 = scmp.eq.s32.totalorder %s140, 1
      %p783 = por %p781, %p782
      %p784 = scmp.ne.s32.totalorder %s775, %s776
      %p785 = scmp.eq.s32.totalorder %s140, 0
      %p786 = por %p784, %p785
      %p787 = scmp.ne.s32.totalorder %s775, %s776
      %p788 = scmp.eq.s32.totalorder %s141, 1
      %p789 = por %p787, %p788
      %p791 = scmp.ne.s32.totalorder %s776, %s790
      %p792 = scmp.eq.s32.totalorder %s141, 0
      %p793 = por %p791, %p792
      %s795 = sadd.s32 %s794, 1
      %p798 = scmp.eq.s32.totalorder %s135, 1
      %p799 = scmp.ne.s32.totalorder %s794, %s796
      %p800 = scmp.eq.s32.totalorder %s135, 0
      %p801 = por %p799, %p800
      %p802 = scmp.ne.s32.totalorder %s794, %s796
      %p803 = scmp.eq.s32.totalorder %s140, 1
      %p804 = por %p802, %p803
      %p805 = scmp.ne.s32.totalorder %s796, %s797
      %p806 = scmp.eq.s32.totalorder %s140, 0
      %p807 = por %p805, %p806
      %p808 = scmp.ne.s32.totalorder %s796, %s797
      %p809 = scmp.eq.s32.totalorder %s141, 1
      %p810 = por %p808, %p809
      %p812 = scmp.ne.s32.totalorder %s797, %s811
      %p813 = scmp.eq.s32.totalorder %s141, 0
      %p814 = por %p812, %p813
      %s816 = sadd.s32 %s815, 1
      %p819 = scmp.eq.s32.totalorder %s135, 1
      %p820 = scmp.ne.s32.totalorder %s815, %s817
      %p821 = scmp.eq.s32.totalorder %s135, 0
      %p822 = por %p820, %p821
      %p823 = scmp.ne.s32.totalorder %s815, %s817
      %p824 = scmp.eq.s32.totalorder %s140, 1
      %p825 = por %p823, %p824
      %p826 = scmp.ne.s32.totalorder %s817, %s818
      %p827 = scmp.eq.s32.totalorder %s140, 0
      %p828 = por %p826, %p827
      %p829 = scmp.ne.s32.totalorder %s817, %s818
      %p830 = scmp.eq.s32.totalorder %s141, 1
      %p831 = por %p829, %p830
      %p833 = scmp.ne.s32.totalorder %s818, %s832
      %p834 = scmp.eq.s32.totalorder %s141, 0
      %p835 = por %p833, %p834
      %s837 = sadd.s32 %s836, 1
      %p840 = scmp.eq.s32.totalorder %s135, 1
      %p841 = scmp.ne.s32.totalorder %s836, %s838
      %p842 = scmp.eq.s32.totalorder %s135, 0
      %p843 = por %p841, %p842
      %p844 = scmp.ne.s32.totalorder %s836, %s838
      %p845 = scmp.eq.s32.totalorder %s140, 1
      %p846 = por %p844, %p845
      %p847 = scmp.ne.s32.totalorder %s838, %s839
      %p848 = scmp.eq.s32.totalorder %s140, 0
      %p849 = por %p847, %p848
      %p850 = scmp.ne.s32.totalorder %s838, %s839
      %p851 = scmp.eq.s32.totalorder %s141, 1
      %p852 = por %p850, %p851
      %p854 = scmp.ne.s32.totalorder %s839, %s853
      %p855 = scmp.eq.s32.totalorder %s141, 0
      %p856 = por %p854, %p855
      %s858 = sadd.s32 %s857, 1
      %p861 = scmp.eq.s32.totalorder %s135, 1
      %p862 = scmp.ne.s32.totalorder %s857, %s859
      %p863 = scmp.eq.s32.totalorder %s135, 0
      %p864 = por %p862, %p863
      %p865 = scmp.ne.s32.totalorder %s857, %s859
      %p866 = scmp.eq.s32.totalorder %s140, 1
      %p867 = por %p865, %p866
      %p868 = scmp.ne.s32.totalorder %s859, %s860
      %p869 = scmp.eq.s32.totalorder %s140, 0
      %p870 = por %p868, %p869
      %p871 = scmp.ne.s32.totalorder %s859, %s860
      %p872 = scmp.eq.s32.totalorder %s141, 1
      %p873 = por %p871, %p872
      %p875 = scmp.ne.s32.totalorder %s860, %s874
      %p876 = scmp.eq.s32.totalorder %s141, 0
      %p877 = por %p875, %p876
      %s879 = sadd.s32 %s878, 1
      %p882 = scmp.eq.s32.totalorder %s135, 1
      %p883 = scmp.ne.s32.totalorder %s878, %s880
      %p884 = scmp.eq.s32.totalorder %s135, 0
      %p885 = por %p883, %p884
      %p886 = scmp.ne.s32.totalorder %s878, %s880
      %p887 = scmp.eq.s32.totalorder %s140, 1
      %p888 = por %p886, %p887
      %p889 = scmp.ne.s32.totalorder %s880, %s881
      %p890 = scmp.eq.s32.totalorder %s140, 0
      %p891 = por %p889, %p890
      %p892 = scmp.ne.s32.totalorder %s880, %s881
      %p893 = scmp.eq.s32.totalorder %s141, 1
      %p894 = por %p892, %p893
      %p896 = scmp.ne.s32.totalorder %s881, %s895
      %p897 = scmp.eq.s32.totalorder %s141, 0
      %p898 = por %p896, %p897
      %s900 = sadd.s32 %s899, 1
      %p903 = scmp.eq.s32.totalorder %s135, 1
      %p904 = scmp.ne.s32.totalorder %s899, %s901
      %p905 = scmp.eq.s32.totalorder %s135, 0
      %p906 = por %p904, %p905
      %p907 = scmp.ne.s32.totalorder %s899, %s901
      %p908 = scmp.eq.s32.totalorder %s140, 1
      %p909 = por %p907, %p908
      %p910 = scmp.ne.s32.totalorder %s901, %s902
      %p911 = scmp.eq.s32.totalorder %s140, 0
      %p912 = por %p910, %p911
      %p913 = scmp.ne.s32.totalorder %s901, %s902
      %p914 = scmp.eq.s32.totalorder %s141, 1
      %p915 = por %p913, %p914
      %p917 = scmp.ne.s32.totalorder %s902, %s916
      %p918 = scmp.eq.s32.totalorder %s141, 0
      %p919 = por %p917, %p918
      %s921 = sadd.s32 %s920, 1
      %p924 = scmp.eq.s32.totalorder %s135, 1
      %p925 = scmp.ne.s32.totalorder %s920, %s922
      %p926 = scmp.eq.s32.totalorder %s135, 0
      %p927 = por %p925, %p926
      %p928 = scmp.ne.s32.totalorder %s920, %s922
      %p929 = scmp.eq.s32.totalorder %s140, 1
      %p930 = por %p928, %p929
      %p931 = scmp.ne.s32.totalorder %s922, %s923
      %p932 = scmp.eq.s32.totalorder %s140, 0
      %p933 = por %p931, %p932
      %p934 = scmp.ne.s32.totalorder %s922, %s923
      %p935 = scmp.eq.s32.totalorder %s141, 1
      %p936 = por %p934, %p935
      %p938 = scmp.ne.s32.totalorder %s923, %s937
      %p939 = scmp.eq.s32.totalorder %s141, 0
      %p940 = por %p938, %p939
      %s942 = sadd.s32 %s941, 1
      %p945 = scmp.eq.s32.totalorder %s135, 1
      %p946 = scmp.ne.s32.totalorder %s941, %s943
      %p947 = scmp.eq.s32.totalorder %s135, 0
      %p948 = por %p946, %p947
      %p949 = scmp.ne.s32.totalorder %s941, %s943
      %p950 = scmp.eq.s32.totalorder %s140, 1
      %p951 = por %p949, %p950
      %p952 = scmp.ne.s32.totalorder %s943, %s944
      %p953 = scmp.eq.s32.totalorder %s140, 0
      %p954 = por %p952, %p953
      %p955 = scmp.ne.s32.totalorder %s943, %s944
      %p956 = scmp.eq.s32.totalorder %s141, 1
      %p957 = por %p955, %p956
      %p959 = scmp.ne.s32.totalorder %s944, %s958
      %p960 = scmp.eq.s32.totalorder %s141, 0
      %p961 = por %p959, %p960
      %s963 = sadd.s32 %s962, 1
      %p966 = scmp.eq.s32.totalorder %s135, 1
      %p967 = scmp.ne.s32.totalorder %s962, %s964
      %p968 = scmp.eq.s32.totalorder %s135, 0
      %p969 = por %p967, %p968
      %p970 = scmp.ne.s32.totalorder %s962, %s964
      %p971 = scmp.eq.s32.totalorder %s140, 1
      %p972 = por %p970, %p971
      %p973 = scmp.ne.s32.totalorder %s964, %s965
      %p974 = scmp.eq.s32.totalorder %s140, 0
      %p975 = por %p973, %p974
      %p976 = scmp.ne.s32.totalorder %s964, %s965
      %p977 = scmp.eq.s32.totalorder %s141, 1
      %p978 = por %p976, %p977
      %p980 = scmp.ne.s32.totalorder %s965, %s979
      %p981 = scmp.eq.s32.totalorder %s141, 0
      %p982 = por %p980, %p981
      %s984 = sadd.s32 %s983, 1
      %p987 = scmp.eq.s32.totalorder %s135, 1
      %p988 = scmp.ne.s32.totalorder %s983, %s985
      %p989 = scmp.eq.s32.totalorder %s135, 0
      %p990 = por %p988, %p989
      %p991 = scmp.ne.s32.totalorder %s983, %s985
      %p992 = scmp.eq.s32.totalorder %s140, 1
      %p993 = por %p991, %p992
      %p994 = scmp.ne.s32.totalorder %s985, %s986
      %p995 = scmp.eq.s32.totalorder %s140, 0
      %p996 = por %p994, %p995
      %p997 = scmp.ne.s32.totalorder %s985, %s986
      %p998 = scmp.eq.s32.totalorder %s141, 1
      %p999 = por %p997, %p998
      %p1001 = scmp.ne.s32.totalorder %s986, %s1000
      %p1002 = scmp.eq.s32.totalorder %s141, 0
      %p1003 = por %p1001, %p1002
      %s1005 = sadd.s32 %s1004, 1
      %p1008 = scmp.eq.s32.totalorder %s135, 1
      %p1009 = scmp.ne.s32.totalorder %s1004, %s1006
      %p1010 = scmp.eq.s32.totalorder %s135, 0
      %p1011 = por %p1009, %p1010
      %p1012 = scmp.ne.s32.totalorder %s1004, %s1006
      %p1013 = scmp.eq.s32.totalorder %s140, 1
      %p1014 = por %p1012, %p1013
      %p1015 = scmp.ne.s32.totalorder %s1006, %s1007
      %p1016 = scmp.eq.s32.totalorder %s140, 0
      %p1017 = por %p1015, %p1016
      %p1018 = scmp.ne.s32.totalorder %s1006, %s1007
      %p1019 = scmp.eq.s32.totalorder %s141, 1
      %p1020 = por %p1018, %p1019
      %p1022 = scmp.ne.s32.totalorder %s1007, %s1021
      %p1023 = scmp.eq.s32.totalorder %s141, 0
      %p1024 = por %p1022, %p1023
      %s1026 = sadd.s32 %s1025, 1
      %p1029 = scmp.eq.s32.totalorder %s135, 1
      %p1030 = scmp.ne.s32.totalorder %s1025, %s1027
      %p1031 = scmp.eq.s32.totalorder %s135, 0
      %p1032 = por %p1030, %p1031
      %p1033 = scmp.ne.s32.totalorder %s1025, %s1027
      %p1034 = scmp.eq.s32.totalorder %s140, 1
      %p1035 = por %p1033, %p1034
      %p1036 = scmp.ne.s32.totalorder %s1027, %s1028
      %p1037 = scmp.eq.s32.totalorder %s140, 0
      %p1038 = por %p1036, %p1037
      %p1039 = scmp.ne.s32.totalorder %s1027, %s1028
      %p1040 = scmp.eq.s32.totalorder %s141, 1
      %p1041 = por %p1039, %p1040
      %p1043 = scmp.ne.s32.totalorder %s1028, %s1042
      %p1044 = scmp.eq.s32.totalorder %s141, 0
      %p1045 = por %p1043, %p1044
      %s1047 = sadd.s32 %s1046, 1
      %p1050 = scmp.eq.s32.totalorder %s135, 1
      %p1051 = scmp.ne.s32.totalorder %s1046, %s1048
      %p1052 = scmp.eq.s32.totalorder %s135, 0
      %p1053 = por %p1051, %p1052
      %p1054 = scmp.ne.s32.totalorder %s1046, %s1048
      %p1055 = scmp.eq.s32.totalorder %s140, 1
      %p1056 = por %p1054, %p1055
      %p1057 = scmp.ne.s32.totalorder %s1048, %s1049
      %p1058 = scmp.eq.s32.totalorder %s140, 0
      %p1059 = por %p1057, %p1058
      %p1060 = scmp.ne.s32.totalorder %s1048, %s1049
      %p1061 = scmp.eq.s32.totalorder %s141, 1
      %p1062 = por %p1060, %p1061
      %p1064 = scmp.ne.s32.totalorder %s1049, %s1063
      %p1065 = scmp.eq.s32.totalorder %s141, 0
      %p1066 = por %p1064, %p1065
      %s1068 = sadd.s32 %s1067, 1
      %p1071 = scmp.eq.s32.totalorder %s135, 1
      %p1072 = scmp.ne.s32.totalorder %s1067, %s1069
      %p1073 = scmp.eq.s32.totalorder %s135, 0
      %p1074 = por %p1072, %p1073
      %p1075 = scmp.ne.s32.totalorder %s1067, %s1069
      %p1076 = scmp.eq.s32.totalorder %s140, 1
      %p1077 = por %p1075, %p1076
      %p1078 = scmp.ne.s32.totalorder %s1069, %s1070
      %p1079 = scmp.eq.s32.totalorder %s140, 0
      %p1080 = por %p1078, %p1079
      %p1081 = scmp.ne.s32.totalorder %s1069, %s1070
      %p1082 = scmp.eq.s32.totalorder %s141, 1
      %p1083 = por %p1081, %p1082
      %p1085 = scmp.ne.s32.totalorder %s1070, %s1084
      %p1086 = scmp.eq.s32.totalorder %s141, 0
      %p1087 = por %p1085, %p1086
      %s1089 = sadd.s32 %s1088, 1
      %p1092 = scmp.eq.s32.totalorder %s135, 1
      %p1093 = scmp.ne.s32.totalorder %s1088, %s1090
      %p1094 = scmp.eq.s32.totalorder %s135, 0
      %p1095 = por %p1093, %p1094
      %p1096 = scmp.ne.s32.totalorder %s1088, %s1090
      %p1097 = scmp.eq.s32.totalorder %s140, 1
      %p1098 = por %p1096, %p1097
      %p1099 = scmp.ne.s32.totalorder %s1090, %s1091
      %p1100 = scmp.eq.s32.totalorder %s140, 0
      %p1101 = por %p1099, %p1100
      %p1102 = scmp.ne.s32.totalorder %s1090, %s1091
      %p1103 = scmp.eq.s32.totalorder %s141, 1
      %p1104 = por %p1102, %p1103
      %p1106 = scmp.ne.s32.totalorder %s1091, %s1105
      %p1107 = scmp.eq.s32.totalorder %s141, 0
      %p1108 = por %p1106, %p1107
      %s1110 = sadd.s32 %s1109, 1
      %p1113 = scmp.eq.s32.totalorder %s135, 1
      %p1114 = scmp.ne.s32.totalorder %s1109, %s1111
      %p1115 = scmp.eq.s32.totalorder %s135, 0
      %p1116 = por %p1114, %p1115
      %p1117 = scmp.ne.s32.totalorder %s1109, %s1111
      %p1118 = scmp.eq.s32.totalorder %s140, 1
      %p1119 = por %p1117, %p1118
      %p1120 = scmp.ne.s32.totalorder %s1111, %s1112
      %p1121 = scmp.eq.s32.totalorder %s140, 0
      %p1122 = por %p1120, %p1121
      %p1123 = scmp.ne.s32.totalorder %s1111, %s1112
      %p1124 = scmp.eq.s32.totalorder %s141, 1
      %p1125 = por %p1123, %p1124
      %p1127 = scmp.ne.s32.totalorder %s1112, %s1126
      %p1128 = scmp.eq.s32.totalorder %s141, 0
      %p1129 = por %p1127, %p1128
      %s1130 = ssub.s32 %s135, %s142
      %p1131 = scmp.eq.s32.totalorder %s1130, 0
      %s1133 = sadd.s32 %s1132, 1
      %s1134 = scalar_select %p1131, %s1132, %s1133
      %p1137 = pneg %p1131
      %p1138 = scmp.eq.s32.totalorder %s135, 1
      %p1139 = por %p1137, %p1138
      %p1140 = scmp.ne.s32.totalorder %s1132, %s1135
      %p1141 = scmp.eq.s32.totalorder %s135, 0
      %p1142 = por %p1140, %p1141
      %p1143 = scmp.ne.s32.totalorder %s1132, %s1135
      %p1144 = scmp.eq.s32.totalorder %s140, 1
      %p1145 = por %p1143, %p1144
      %p1146 = scmp.ne.s32.totalorder %s1135, %s1136
      %p1147 = scmp.eq.s32.totalorder %s140, 0
      %p1148 = por %p1146, %p1147
      %p1149 = scmp.ne.s32.totalorder %s1135, %s1136
      %p1150 = scmp.eq.s32.totalorder %s141, 1
      %p1151 = por %p1149, %p1150
      %p1153 = scmp.ne.s32.totalorder %s1136, %s1152
      %p1154 = scmp.eq.s32.totalorder %s141, 0
      %p1155 = por %p1153, %p1154
      %s1156 = ssub.s32 %s135, %s142
      %p1157 = scmp.eq.s32.totalorder %s1156, 0
      %s1159 = sadd.s32 %s1158, 1
      %s1160 = scalar_select %p1157, %s1158, %s1159
      %p1163 = pneg %p1157
      %p1164 = scmp.eq.s32.totalorder %s135, 1
      %p1165 = por %p1163, %p1164
      %p1166 = scmp.ne.s32.totalorder %s1158, %s1161
      %p1167 = scmp.eq.s32.totalorder %s135, 0
      %p1168 = por %p1166, %p1167
      %p1169 = scmp.ne.s32.totalorder %s1158, %s1161
      %p1170 = scmp.eq.s32.totalorder %s140, 1
      %p1171 = por %p1169, %p1170
      %p1172 = scmp.ne.s32.totalorder %s1161, %s1162
      %p1173 = scmp.eq.s32.totalorder %s140, 0
      %p1174 = por %p1172, %p1173
      %p1175 = scmp.ne.s32.totalorder %s1161, %s1162
      %p1176 = scmp.eq.s32.totalorder %s141, 1
      %p1177 = por %p1175, %p1176
      %p1179 = scmp.ne.s32.totalorder %s1162, %s1178
      %p1180 = scmp.eq.s32.totalorder %s141, 0
      %p1181 = por %p1179, %p1180
      %s1182 = ssub.s32 %s135, %s142
      %p1183 = scmp.eq.s32.totalorder %s1182, 0
      %s1185 = sadd.s32 %s1184, 1
      %s1186 = scalar_select %p1183, %s1184, %s1185
      %p1189 = pneg %p1183
      %p1190 = scmp.eq.s32.totalorder %s135, 1
      %p1191 = por %p1189, %p1190
      %p1192 = scmp.ne.s32.totalorder %s1184, %s1187
      %p1193 = scmp.eq.s32.totalorder %s135, 0
      %p1194 = por %p1192, %p1193
      %p1195 = scmp.ne.s32.totalorder %s1184, %s1187
      %p1196 = scmp.eq.s32.totalorder %s140, 1
      %p1197 = por %p1195, %p1196
      %p1198 = scmp.ne.s32.totalorder %s1187, %s1188
      %p1199 = scmp.eq.s32.totalorder %s140, 0
      %p1200 = por %p1198, %p1199
      %p1201 = scmp.ne.s32.totalorder %s1187, %s1188
      %p1202 = scmp.eq.s32.totalorder %s141, 1
      %p1203 = por %p1201, %p1202
      %p1205 = scmp.ne.s32.totalorder %s1188, %s1204
      %p1206 = scmp.eq.s32.totalorder %s141, 0
      %p1207 = por %p1205, %p1206
      %s1208 = ssub.s32 %s135, %s142
      %p1209 = scmp.eq.s32.totalorder %s1208, 0
      %s1211 = sadd.s32 %s1210, 1
      %s1212 = scalar_select %p1209, %s1210, %s1211
      %p1215 = pneg %p1209
      %p1216 = scmp.eq.s32.totalorder %s135, 1
      %p1217 = por %p1215, %p1216
      %p1218 = scmp.ne.s32.totalorder %s1210, %s1213
      %p1219 = scmp.eq.s32.totalorder %s135, 0
      %p1220 = por %p1218, %p1219
      %p1221 = scmp.ne.s32.totalorder %s1210, %s1213
      %p1222 = scmp.eq.s32.totalorder %s140, 1
      %p1223 = por %p1221, %p1222
      %p1224 = scmp.ne.s32.totalorder %s1213, %s1214
      %p1225 = scmp.eq.s32.totalorder %s140, 0
      %p1226 = por %p1224, %p1225
      %p1227 = scmp.ne.s32.totalorder %s1213, %s1214
      %p1228 = scmp.eq.s32.totalorder %s141, 1
      %p1229 = por %p1227, %p1228
      %p1231 = scmp.ne.s32.totalorder %s1214, %s1230
      %p1232 = scmp.eq.s32.totalorder %s141, 0
      %p1233 = por %p1231, %p1232
      %s1234 = ssub.s32 %s135, %s142
      %p1235 = scmp.eq.s32.totalorder %s1234, 0
      %s1237 = sadd.s32 %s1236, 1
      %s1238 = scalar_select %p1235, %s1236, %s1237
      %p1241 = pneg %p1235
      %p1242 = scmp.eq.s32.totalorder %s135, 1
      %p1243 = por %p1241, %p1242
      %p1244 = scmp.ne.s32.totalorder %s1236, %s1239
      %p1245 = scmp.eq.s32.totalorder %s135, 0
      %p1246 = por %p1244, %p1245
      %p1247 = scmp.ne.s32.totalorder %s1236, %s1239
      %p1248 = scmp.eq.s32.totalorder %s140, 1
      %p1249 = por %p1247, %p1248
      %p1250 = scmp.ne.s32.totalorder %s1239, %s1240
      %p1251 = scmp.eq.s32.totalorder %s140, 0
      %p1252 = por %p1250, %p1251
      %p1253 = scmp.ne.s32.totalorder %s1239, %s1240
      %p1254 = scmp.eq.s32.totalorder %s141, 1
      %p1255 = por %p1253, %p1254
      %p1257 = scmp.ne.s32.totalorder %s1240, %s1256
      %p1258 = scmp.eq.s32.totalorder %s141, 0
      %p1259 = por %p1257, %p1258
      %p1260 = scmp.le.s32.totalorder 1, %s135
      %p1261 = scmp.lt.s32.totalorder %s135, 3
      %p1262 = pnand %p1260, %p1261
      %p1263 = pneg %p1262
      // Predicated region
      $region9: #{forward.1} parent=5 // pred_check
        _
      $region10: #{forward.1} parent=5 // pred_check_branch
        %1265 = sbr.rel (%p1262) target = $region12
      $region11: #{forward.1} parent=5 // pred_region
        %s1266 = ssub.s32 %s135, 1
        // Predicated region
        $region13: #{forward.1} parent=11 // pred_check
          %p1267 = pneg %p156
        $region14: #{forward.1} parent=11 // pred_check_branch
          %1269 = sbr.rel (%p1267) target = $region16
        $region15: #{forward.1} parent=11 // pred_region
          _
        $region16: #{forward.1} parent=11 // pred_fallthru
          _
        // Predicated region
        $region17: #{forward.1} parent=11 // pred_check
          %p1270 = pneg %p177
        $region18: #{forward.1} parent=11 // pred_check_branch
          %1272 = sbr.rel (%p1270) target = $region20
        $region19: #{forward.1} parent=11 // pred_region
          _
        $region20: #{forward.1} parent=11 // pred_fallthru
          _
        // Predicated region
        $region21: #{forward.1} parent=11 // pred_check
          %p1273 = pneg %p198
        $region22: #{forward.1} parent=11 // pred_check_branch
          %1275 = sbr.rel (%p1273) target = $region24
        $region23: #{forward.1} parent=11 // pred_region
          _
        $region24: #{forward.1} parent=11 // pred_fallthru
          _
        // Predicated region
        $region25: #{forward.1} parent=11 // pred_check
          %p1276 = pneg %p219
        $region26: #{forward.1} parent=11 // pred_check_branch
          %1278 = sbr.rel (%p1276) target = $region28
        $region27: #{forward.1} parent=11 // pred_region
          _
        $region28: #{forward.1} parent=11 // pred_fallthru
          _
        // Predicated region
        $region29: #{forward.1} parent=11 // pred_check
          %p1279 = pneg %p240
        $region30: #{forward.1} parent=11 // pred_check_branch
          %1281 = sbr.rel (%p1279) target = $region32
        $region31: #{forward.1} parent=11 // pred_region
          _
        $region32: #{forward.1} parent=11 // pred_fallthru
          _
        // Predicated region
        $region33: #{forward.1} parent=11 // pred_check
          %p1282 = pneg %p261
        $region34: #{forward.1} parent=11 // pred_check_branch
          %1284 = sbr.rel (%p1282) target = $region36
        $region35: #{forward.1} parent=11 // pred_region
          _
        $region36: #{forward.1} parent=11 // pred_fallthru
          _
        // Predicated region
        $region37: #{forward.1} parent=11 // pred_check
          %p1285 = pneg %p282
        $region38: #{forward.1} parent=11 // pred_check_branch
          %1287 = sbr.rel (%p1285) target = $region40
        $region39: #{forward.1} parent=11 // pred_region
          _
        $region40: #{forward.1} parent=11 // pred_fallthru
          _
        // Predicated region
        $region41: #{forward.1} parent=11 // pred_check
          %p1288 = pneg %p303
        $region42: #{forward.1} parent=11 // pred_check_branch
          %1290 = sbr.rel (%p1288) target = $region44
        $region43: #{forward.1} parent=11 // pred_region
          _
        $region44: #{forward.1} parent=11 // pred_fallthru
          _
        // Predicated region
        $region45: #{forward.1} parent=11 // pred_check
          %p1291 = pneg %p324
        $region46: #{forward.1} parent=11 // pred_check_branch
          %1293 = sbr.rel (%p1291) target = $region48
        $region47: #{forward.1} parent=11 // pred_region
          %1295 = vsyncadd [#allocation5], 0
          %s1296 = sshll.u32 %s19, 4
          %s1297 = int_to_ptr.hbm [resolvable:$true] %s1296
          %s1298 = sshll.u32 [#allocation4], 4
          %s1299 = int_to_ptr.vmem [resolvable:$true] %s1298
          %1304 = dma.hbm_to_vmem [thread:$0]  %s1297, 256, %s1299, [#allocation5], 64, 64, 4
        $region48: #{forward.1} parent=11 // pred_fallthru
          _
        // Predicated region
        $region49: #{forward.1} parent=11 // pred_check
          %p1305 = pneg %p345
        $region50: #{forward.1} parent=11 // pred_check_branch
          %1307 = sbr.rel (%p1305) target = $region52
        $region51: #{forward.1} parent=11 // pred_region
          %1309 = vsyncadd [#allocation8], 0
          %s1310 = sshll.u32 %s21, 4
          %s1311 = int_to_ptr.hbm [resolvable:$true] %s1310
          %s1312 = sshll.u32 [#allocation7], 4
          %s1313 = int_to_ptr.vmem [resolvable:$true] %s1312
          %1318 = dma.hbm_to_vmem [thread:$0]  %s1311, 1024, %s1313, [#allocation8], 64, 64, 4
        $region52: #{forward.1} parent=11 // pred_fallthru
          _
        // Predicated region
        $region53: #{forward.1} parent=11 // pred_check
          %p1319 = pneg %p366
        $region54: #{forward.1} parent=11 // pred_check_branch
          %1321 = sbr.rel (%p1319) target = $region56
        $region55: #{forward.1} parent=11 // pred_region
          %1323 = vsyncadd [#allocation8], 0
          %s1324 = sshll.u32 %s23, 4
          %s1325 = int_to_ptr.hbm [resolvable:$true] %s1324
          %s1326 = sshll.u32 [#allocation9], 4
          %s1327 = int_to_ptr.vmem [resolvable:$true] %s1326
          %1332 = dma.hbm_to_vmem [thread:$0]  %s1325, 256, %s1327, [#allocation8], 64, 64, 4
        $region56: #{forward.1} parent=11 // pred_fallthru
          _
        // Predicated region
        $region57: #{forward.1} parent=11 // pred_check
          %p1333 = pneg %p387
        $region58: #{forward.1} parent=11 // pred_check_branch
          %1335 = sbr.rel (%p1333) target = $region60
        $region59: #{forward.1} parent=11 // pred_region
          %1337 = vsyncadd [#allocation11], 0
          %s1338 = sshll.u32 %s25, 4
          %s1339 = int_to_ptr.hbm [resolvable:$true] %s1338
          %s1340 = sshll.u32 [#allocation10], 4
          %s1341 = int_to_ptr.vmem [resolvable:$true] %s1340
          %1346 = dma.hbm_to_vmem [thread:$0]  %s1339, 256, %s1341, [#allocation11], 64, 64, 4
        $region60: #{forward.1} parent=11 // pred_fallthru
          _
        // Predicated region
        $region61: #{forward.1} parent=11 // pred_check
          %p1347 = pneg %p408
        $region62: #{forward.1} parent=11 // pred_check_branch
          %1349 = sbr.rel (%p1347) target = $region64
        $region63: #{forward.1} parent=11 // pred_region
          _
        $region64: #{forward.1} parent=11 // pred_fallthru
          _
        // Predicated region
        $region65: #{forward.1} parent=11 // pred_check
          %p1350 = pneg %p429
        $region66: #{forward.1} parent=11 // pred_check_branch
          %1352 = sbr.rel (%p1350) target = $region68
        $region67: #{forward.1} parent=11 // pred_region
          _
        $region68: #{forward.1} parent=11 // pred_fallthru
          _
        // Predicated region
        $region69: #{forward.1} parent=11 // pred_check
          %p1353 = pneg %p450
        $region70: #{forward.1} parent=11 // pred_check_branch
          %1355 = sbr.rel (%p1353) target = $region72
        $region71: #{forward.1} parent=11 // pred_region
          %1357 = vsyncadd [#allocation11], 0
          %s1359 = sshll.u32 %s31, 4
          %s1360 = int_to_ptr.hbm [resolvable:$true] %s1359
          %s1361 = sshll.u32 [#allocation12], 4
          %s1362 = int_to_ptr.vmem [resolvable:$true] %s1361
          %1364 = dma.hbm_to_vmem [thread:$0]  %s1360, 128, %s1362, [#allocation11]
        $region72: #{forward.1} parent=11 // pred_fallthru
          _
        // Predicated region
        $region73: #{forward.1} parent=11 // pred_check
          %p1365 = pneg %p471
        $region74: #{forward.1} parent=11 // pred_check_branch
          %1367 = sbr.rel (%p1365) target = $region76
        $region75: #{forward.1} parent=11 // pred_region
          _
        $region76: #{forward.1} parent=11 // pred_fallthru
          _
        // Predicated region
        $region77: #{forward.1} parent=11 // pred_check
          %p1368 = pneg %p492
        $region78: #{forward.1} parent=11 // pred_check_branch
          %1370 = sbr.rel (%p1368) target = $region80
        $region79: #{forward.1} parent=11 // pred_region
          %1372 = vsyncadd [#allocation14], 0
          %s1374 = sshll.u32 %s35, 4
          %s1375 = int_to_ptr.hbm [resolvable:$true] %s1374
          %s1376 = sshll.u32 [#allocation13], 4
          %s1377 = int_to_ptr.vmem [resolvable:$true] %s1376
          %1379 = dma.hbm_to_vmem [thread:$0]  %s1375, 64, %s1377, [#allocation14]
        $region80: #{forward.1} parent=11 // pred_fallthru
          _
        // Predicated region
        $region81: #{forward.1} parent=11 // pred_check
          %p1380 = pneg %p513
        $region82: #{forward.1} parent=11 // pred_check_branch
          %1382 = sbr.rel (%p1380) target = $region84
        $region83: #{forward.1} parent=11 // pred_region
          _
        $region84: #{forward.1} parent=11 // pred_fallthru
          _
        // Predicated region
        $region85: #{forward.1} parent=11 // pred_check
          %p1383 = pneg %p534
        $region86: #{forward.1} parent=11 // pred_check_branch
          %1385 = sbr.rel (%p1383) target = $region88
        $region87: #{forward.1} parent=11 // pred_region
          %1387 = vsyncadd [#allocation14], 0
          %s1388 = sshll.u32 %s39, 4
          %s1389 = int_to_ptr.hbm [resolvable:$true] %s1388
          %s1390 = sshll.u32 [#allocation15], 4
          %s1391 = int_to_ptr.vmem [resolvable:$true] %s1390
          %1396 = dma.hbm_to_vmem [thread:$0]  %s1389, 128, %s1391, [#allocation14], 64, 64, 4
        $region88: #{forward.1} parent=11 // pred_fallthru
          _
        // Predicated region
        $region89: #{forward.1} parent=11 // pred_check
          %p1397 = pneg %p555
        $region90: #{forward.1} parent=11 // pred_check_branch
          %1399 = sbr.rel (%p1397) target = $region92
        $region91: #{forward.1} parent=11 // pred_region
          %1401 = vsyncadd [#allocation17], 0
          %s1402 = sshll.u32 %s41, 4
          %s1403 = int_to_ptr.hbm [resolvable:$true] %s1402
          %s1404 = sshll.u32 [#allocation16], 4
          %s1405 = int_to_ptr.vmem [resolvable:$true] %s1404
          %1410 = dma.hbm_to_vmem [thread:$0]  %s1403, 512, %s1405, [#allocation17], 64, 64, 4
        $region92: #{forward.1} parent=11 // pred_fallthru
          _
        // Predicated region
        $region93: #{forward.1} parent=11 // pred_check
          %p1411 = pneg %p576
        $region94: #{forward.1} parent=11 // pred_check_branch
          %1413 = sbr.rel (%p1411) target = $region96
        $region95: #{forward.1} parent=11 // pred_region
          _
        $region96: #{forward.1} parent=11 // pred_fallthru
          _
        // Predicated region
        $region97: #{forward.1} parent=11 // pred_check
          %p1414 = pneg %p597
        $region98: #{forward.1} parent=11 // pred_check_branch
          %1416 = sbr.rel (%p1414) target = $region100
        $region99: #{forward.1} parent=11 // pred_region
          _
        $region100: #{forward.1} parent=11 // pred_fallthru
          _
        // Predicated region
        $region101: #{forward.1} parent=11 // pred_check
          %p1417 = pneg %p618
        $region102: #{forward.1} parent=11 // pred_check_branch
          %1419 = sbr.rel (%p1417) target = $region104
        $region103: #{forward.1} parent=11 // pred_region
          _
        $region104: #{forward.1} parent=11 // pred_fallthru
          _
        // Predicated region
        $region105: #{forward.1} parent=11 // pred_check
          %p1420 = pneg %p639
        $region106: #{forward.1} parent=11 // pred_check_branch
          %1422 = sbr.rel (%p1420) target = $region108
        $region107: #{forward.1} parent=11 // pred_region
          _
        $region108: #{forward.1} parent=11 // pred_fallthru
          _
        // Predicated region
        $region109: #{forward.1} parent=11 // pred_check
          %p1423 = pneg %p660
        $region110: #{forward.1} parent=11 // pred_check_branch
          %1425 = sbr.rel (%p1423) target = $region112
        $region111: #{forward.1} parent=11 // pred_region
          _
        $region112: #{forward.1} parent=11 // pred_fallthru
          _
        // Predicated region
        $region113: #{forward.1} parent=11 // pred_check
          %p1426 = pneg %p681
        $region114: #{forward.1} parent=11 // pred_check_branch
          %1428 = sbr.rel (%p1426) target = $region116
        $region115: #{forward.1} parent=11 // pred_region
          _
        $region116: #{forward.1} parent=11 // pred_fallthru
          _
        // Predicated region
        $region117: #{forward.1} parent=11 // pred_check
          %p1429 = pneg %p702
        $region118: #{forward.1} parent=11 // pred_check_branch
          %1431 = sbr.rel (%p1429) target = $region120
        $region119: #{forward.1} parent=11 // pred_region
          _
        $region120: #{forward.1} parent=11 // pred_fallthru
          _
        // Predicated region
        $region121: #{forward.1} parent=11 // pred_check
          %p1432 = pneg %p723
        $region122: #{forward.1} parent=11 // pred_check_branch
          %1434 = sbr.rel (%p1432) target = $region124
        $region123: #{forward.1} parent=11 // pred_region
          _
        $region124: #{forward.1} parent=11 // pred_fallthru
          _
        // Predicated region
        $region125: #{forward.1} parent=11 // pred_check
          %p1435 = pneg %p744
        $region126: #{forward.1} parent=11 // pred_check_branch
          %1437 = sbr.rel (%p1435) target = $region128
        $region127: #{forward.1} parent=11 // pred_region
          %1439 = vsyncadd [#allocation17], 0
          %s1440 = sshll.u32 %s59, 4
          %s1441 = int_to_ptr.hbm [resolvable:$true] %s1440
          %s1442 = sshll.u32 [#allocation18], 4
          %s1443 = int_to_ptr.vmem [resolvable:$true] %s1442
          %1448 = dma.hbm_to_vmem [thread:$0]  %s1441, 256, %s1443, [#allocation17], 64, 64, 4
        $region128: #{forward.1} parent=11 // pred_fallthru
          _
        // Predicated region
        $region129: #{forward.1} parent=11 // pred_check
          %p1449 = pneg %p765
        $region130: #{forward.1} parent=11 // pred_check_branch
          %1451 = sbr.rel (%p1449) target = $region132
        $region131: #{forward.1} parent=11 // pred_region
          %1453 = vsyncadd [#allocation20], 0
          %s1454 = sshll.u32 %s61, 4
          %s1455 = int_to_ptr.hbm [resolvable:$true] %s1454
          %s1456 = sshll.u32 [#allocation19], 4
          %s1457 = int_to_ptr.vmem [resolvable:$true] %s1456
          %1462 = dma.hbm_to_vmem [thread:$0]  %s1455, 1024, %s1457, [#allocation20], 64, 64, 4
        $region132: #{forward.1} parent=11 // pred_fallthru
          _
        // Predicated region
        $region133: #{forward.1} parent=11 // pred_check
          %p1463 = pneg %p786
        $region134: #{forward.1} parent=11 // pred_check_branch
          %1465 = sbr.rel (%p1463) target = $region136
        $region135: #{forward.1} parent=11 // pred_region
          %1467 = vsyncadd [#allocation20], 0
          %s1468 = sshll.u32 %s63, 4
          %s1469 = int_to_ptr.hbm [resolvable:$true] %s1468
          %s1470 = sshll.u32 [#allocation21], 4
          %s1471 = int_to_ptr.vmem [resolvable:$true] %s1470
          %1476 = dma.hbm_to_vmem [thread:$0]  %s1469, 256, %s1471, [#allocation20], 64, 64, 4
        $region136: #{forward.1} parent=11 // pred_fallthru
          _
        // Predicated region
        $region137: #{forward.1} parent=11 // pred_check
          %p1477 = pneg %p807
        $region138: #{forward.1} parent=11 // pred_check_branch
          %1479 = sbr.rel (%p1477) target = $region140
        $region139: #{forward.1} parent=11 // pred_region
          %1481 = vsyncadd [#allocation23], 0
          %s1482 = sshll.u32 %s65, 4
          %s1483 = int_to_ptr.hbm [resolvable:$true] %s1482
          %s1484 = sshll.u32 [#allocation22], 4
          %s1485 = int_to_ptr.vmem [resolvable:$true] %s1484
          %1490 = dma.hbm_to_vmem [thread:$0]  %s1483, 256, %s1485, [#allocation23], 64, 64, 4
        $region140: #{forward.1} parent=11 // pred_fallthru
          _
        // Predicated region
        $region141: #{forward.1} parent=11 // pred_check
          %p1491 = pneg %p828
        $region142: #{forward.1} parent=11 // pred_check_branch
          %1493 = sbr.rel (%p1491) target = $region144
        $region143: #{forward.1} parent=11 // pred_region
          _
        $region144: #{forward.1} parent=11 // pred_fallthru
          _
        // Predicated region
        $region145: #{forward.1} parent=11 // pred_check
          %p1494 = pneg %p849
        $region146: #{forward.1} parent=11 // pred_check_branch
          %1496 = sbr.rel (%p1494) target = $region148
        $region147: #{forward.1} parent=11 // pred_region
          _
        $region148: #{forward.1} parent=11 // pred_fallthru
          _
        // Predicated region
        $region149: #{forward.1} parent=11 // pred_check
          %p1497 = pneg %p870
        $region150: #{forward.1} parent=11 // pred_check_branch
          %1499 = sbr.rel (%p1497) target = $region152
        $region151: #{forward.1} parent=11 // pred_region
          _
        $region152: #{forward.1} parent=11 // pred_fallthru
          _
        // Predicated region
        $region153: #{forward.1} parent=11 // pred_check
          %p1500 = pneg %p891
        $region154: #{forward.1} parent=11 // pred_check_branch
          %1502 = sbr.rel (%p1500) target = $region156
        $region155: #{forward.1} parent=11 // pred_region
          _
        $region156: #{forward.1} parent=11 // pred_fallthru
          _
        // Predicated region
        $region157: #{forward.1} parent=11 // pred_check
          %p1503 = pneg %p912
        $region158: #{forward.1} parent=11 // pred_check_branch
          %1505 = sbr.rel (%p1503) target = $region160
        $region159: #{forward.1} parent=11 // pred_region
          %1507 = vsyncadd [#allocation23], 0
          %s1508 = sshll.u32 %s75, 4
          %s1509 = int_to_ptr.hbm [resolvable:$true] %s1508
          %s1510 = sshll.u32 [#allocation24], 4
          %s1511 = int_to_ptr.vmem [resolvable:$true] %s1510
          %1516 = dma.hbm_to_vmem [thread:$0]  %s1509, 256, %s1511, [#allocation23], 64, 64, 4
        $region160: #{forward.1} parent=11 // pred_fallthru
          _
        // Predicated region
        $region161: #{forward.1} parent=11 // pred_check
          %p1517 = pneg %p933
        $region162: #{forward.1} parent=11 // pred_check_branch
          %1519 = sbr.rel (%p1517) target = $region164
        $region163: #{forward.1} parent=11 // pred_region
          _
        $region164: #{forward.1} parent=11 // pred_fallthru
          _
        // Predicated region
        $region165: #{forward.1} parent=11 // pred_check
          %p1520 = pneg %p954
        $region166: #{forward.1} parent=11 // pred_check_branch
          %1522 = sbr.rel (%p1520) target = $region168
        $region167: #{forward.1} parent=11 // pred_region
          %1524 = vsyncadd [#allocation26], 0
          %s1525 = sshll.u32 %s79, 4
          %s1526 = int_to_ptr.hbm [resolvable:$true] %s1525
          %s1527 = sshll.u32 [#allocation25], 4
          %s1528 = int_to_ptr.vmem [resolvable:$true] %s1527
          %1533 = dma.hbm_to_vmem [thread:$0]  %s1526, 256, %s1528, [#allocation26], 64, 64, 4
        $region168: #{forward.1} parent=11 // pred_fallthru
          _
        // Predicated region
        $region169: #{forward.1} parent=11 // pred_check
          %p1534 = pneg %p975
        $region170: #{forward.1} parent=11 // pred_check_branch
          %1536 = sbr.rel (%p1534) target = $region172
        $region171: #{forward.1} parent=11 // pred_region
          _
        $region172: #{forward.1} parent=11 // pred_fallthru
          _
        // Predicated region
        $region173: #{forward.1} parent=11 // pred_check
          %p1537 = pneg %p996
        $region174: #{forward.1} parent=11 // pred_check_branch
          %1539 = sbr.rel (%p1537) target = $region176
        $region175: #{forward.1} parent=11 // pred_region
          _
        $region176: #{forward.1} parent=11 // pred_fallthru
          _
        // Predicated region
        $region177: #{forward.1} parent=11 // pred_check
          %p1540 = pneg %p1017
        $region178: #{forward.1} parent=11 // pred_check_branch
          %1542 = sbr.rel (%p1540) target = $region180
        $region179: #{forward.1} parent=11 // pred_region
          _
        $region180: #{forward.1} parent=11 // pred_fallthru
          _
        // Predicated region
        $region181: #{forward.1} parent=11 // pred_check
          %p1543 = pneg %p1038
        $region182: #{forward.1} parent=11 // pred_check_branch
          %1545 = sbr.rel (%p1543) target = $region184
        $region183: #{forward.1} parent=11 // pred_region
          %1547 = vsyncadd [#allocation26], 0
          %s1548 = sshll.u32 %s87, 4
          %s1549 = int_to_ptr.hbm [resolvable:$true] %s1548
          %s1550 = sshll.u32 [#allocation27], 4
          %s1551 = int_to_ptr.vmem [resolvable:$true] %s1550
          %1556 = dma.hbm_to_vmem [thread:$0]  %s1549, 256, %s1551, [#allocation26], 64, 64, 4
        $region184: #{forward.1} parent=11 // pred_fallthru
          _
        // Predicated region
        $region185: #{forward.1} parent=11 // pred_check
          %p1557 = pneg %p1059
        $region186: #{forward.1} parent=11 // pred_check_branch
          %1559 = sbr.rel (%p1557) target = $region188
        $region187: #{forward.1} parent=11 // pred_region
          _
        $region188: #{forward.1} parent=11 // pred_fallthru
          _
        // Predicated region
        $region189: #{forward.1} parent=11 // pred_check
          %p1560 = pneg %p1080
        $region190: #{forward.1} parent=11 // pred_check_branch
          %1562 = sbr.rel (%p1560) target = $region192
        $region191: #{forward.1} parent=11 // pred_region
          _
        $region192: #{forward.1} parent=11 // pred_fallthru
          _
        // Predicated region
        $region193: #{forward.1} parent=11 // pred_check
          %p1563 = pneg %p1101
        $region194: #{forward.1} parent=11 // pred_check_branch
          %1565 = sbr.rel (%p1563) target = $region196
        $region195: #{forward.1} parent=11 // pred_region
          _
        $region196: #{forward.1} parent=11 // pred_fallthru
          _
        // Predicated region
        $region197: #{forward.1} parent=11 // pred_check
          %p1566 = pneg %p1122
        $region198: #{forward.1} parent=11 // pred_check_branch
          %1568 = sbr.rel (%p1566) target = $region200
        $region199: #{forward.1} parent=11 // pred_region
          %1570 = vsyncadd [#allocation29], 0
          %s1571 = sshll.u32 %s95, 4
          %s1572 = int_to_ptr.hbm [resolvable:$true] %s1571
          %s1573 = sshll.u32 [#allocation28], 4
          %s1574 = int_to_ptr.vmem [resolvable:$true] %s1573
          %1579 = dma.hbm_to_vmem [thread:$0]  %s1572, 256, %s1574, [#allocation29], 64, 64, 4
        $region200: #{forward.1} parent=11 // pred_fallthru
          _
      $region12: #{forward.1} parent=5 // pred_fallthru
        _
      %p1580 = scmp.lt.s32.totalorder %s135, 2
      // Predicated region
      $region201: #{forward.1} parent=5 // pred_check
        %p1581 = pneg %p1580
      $region202: #{forward.1} parent=5 // pred_check_branch
        %1583 = sbr.rel (%p1581) target = $region204
      $region203: #{forward.1} parent=5 // pred_region
        // Predicated region
        $region205: #{forward.1} parent=203 // pred_check
          %p1584 = pneg %p1142
        $region206: #{forward.1} parent=203 // pred_check_branch
          %1586 = sbr.rel (%p1584) target = $region208
        $region207: #{forward.1} parent=203 // pred_region
          %p1587 = scmp.lt.s32.totalorder %s135, 1
          %s1588 = scalar_select %p1587, %s135, 1
          %s1589 = smul.addr %s1588, 4
          %s1590 = scalar_lea.vmem %s97, %s1589
        $region208: #{forward.1} parent=203 // pred_fallthru
          _
      $region204: #{forward.1} parent=5 // pred_fallthru
        _
      %p1591 = scmp.le.s32.totalorder 1, %s135
      %p1592 = scmp.lt.s32.totalorder %s135, 3
      %p1593 = pnand %p1591, %p1592
      %p1594 = pneg %p1593
      // Predicated region
      $region209: #{forward.1} parent=5 // pred_check
        _
      $region210: #{forward.1} parent=5 // pred_check_branch
        %1596 = sbr.rel (%p1593) target = $region212
      $region211: #{forward.1} parent=5 // pred_region
        %s1597 = ssub.s32 %s135, 1
        // Predicated region
        $region213: #{forward.1} parent=211 // pred_check
          %p1598 = pneg %p324
        $region214: #{forward.1} parent=211 // pred_check_branch
          %1600 = sbr.rel (%p1598) target = $region216
        $region215: #{forward.1} parent=211 // pred_region
          %1602 = dma.done [#allocation5], 256
        $region216: #{forward.1} parent=211 // pred_fallthru
          _
        // Predicated region
        $region217: #{forward.1} parent=211 // pred_check
          %p1603 = pneg %p345
        $region218: #{forward.1} parent=211 // pred_check_branch
          %1605 = sbr.rel (%p1603) target = $region220
        $region219: #{forward.1} parent=211 // pred_region
          %1607 = dma.done [#allocation8], 1024
        $region220: #{forward.1} parent=211 // pred_fallthru
          _
        // Predicated region
        $region221: #{forward.1} parent=211 // pred_check
          %p1608 = pneg %p366
        $region222: #{forward.1} parent=211 // pred_check_branch
          %1610 = sbr.rel (%p1608) target = $region224
        $region223: #{forward.1} parent=211 // pred_region
          %1612 = dma.done [#allocation8], 256
        $region224: #{forward.1} parent=211 // pred_fallthru
          _
        // Predicated region
        $region225: #{forward.1} parent=211 // pred_check
          %p1613 = pneg %p387
        $region226: #{forward.1} parent=211 // pred_check_branch
          %1615 = sbr.rel (%p1613) target = $region228
        $region227: #{forward.1} parent=211 // pred_region
          %1617 = dma.done [#allocation11], 256
        $region228: #{forward.1} parent=211 // pred_fallthru
          _
        // Predicated region
        $region229: #{forward.1} parent=211 // pred_check
          %p1618 = pneg %p450
        $region230: #{forward.1} parent=211 // pred_check_branch
          %1620 = sbr.rel (%p1618) target = $region232
        $region231: #{forward.1} parent=211 // pred_region
          %1622 = dma.done [#allocation11], 128
        $region232: #{forward.1} parent=211 // pred_fallthru
          _
        // Predicated region
        $region233: #{forward.1} parent=211 // pred_check
          %p1623 = pneg %p492
        $region234: #{forward.1} parent=211 // pred_check_branch
          %1625 = sbr.rel (%p1623) target = $region236
        $region235: #{forward.1} parent=211 // pred_region
          %1627 = dma.done [#allocation14], 64
        $region236: #{forward.1} parent=211 // pred_fallthru
          _
        // Predicated region
        $region237: #{forward.1} parent=211 // pred_check
          %p1628 = pneg %p534
        $region238: #{forward.1} parent=211 // pred_check_branch
          %1630 = sbr.rel (%p1628) target = $region240
        $region239: #{forward.1} parent=211 // pred_region
          %1632 = dma.done [#allocation14], 128
        $region240: #{forward.1} parent=211 // pred_fallthru
          _
        // Predicated region
        $region241: #{forward.1} parent=211 // pred_check
          %p1633 = pneg %p555
        $region242: #{forward.1} parent=211 // pred_check_branch
          %1635 = sbr.rel (%p1633) target = $region244
        $region243: #{forward.1} parent=211 // pred_region
          %1637 = dma.done [#allocation17], 512
        $region244: #{forward.1} parent=211 // pred_fallthru
          _
        // Predicated region
        $region245: #{forward.1} parent=211 // pred_check
          %p1638 = pneg %p744
        $region246: #{forward.1} parent=211 // pred_check_branch
          %1640 = sbr.rel (%p1638) target = $region248
        $region247: #{forward.1} parent=211 // pred_region
          %1642 = dma.done [#allocation17], 256
        $region248: #{forward.1} parent=211 // pred_fallthru
          _
        // Predicated region
        $region249: #{forward.1} parent=211 // pred_check
          %p1643 = pneg %p765
        $region250: #{forward.1} parent=211 // pred_check_branch
          %1645 = sbr.rel (%p1643) target = $region252
        $region251: #{forward.1} parent=211 // pred_region
          %1647 = dma.done [#allocation20], 1024
        $region252: #{forward.1} parent=211 // pred_fallthru
          _
        // Predicated region
        $region253: #{forward.1} parent=211 // pred_check
          %p1648 = pneg %p786
        $region254: #{forward.1} parent=211 // pred_check_branch
          %1650 = sbr.rel (%p1648) target = $region256
        $region255: #{forward.1} parent=211 // pred_region
          %1652 = dma.done [#allocation20], 256
        $region256: #{forward.1} parent=211 // pred_fallthru
          _
        // Predicated region
        $region257: #{forward.1} parent=211 // pred_check
          %p1653 = pneg %p807
        $region258: #{forward.1} parent=211 // pred_check_branch
          %1655 = sbr.rel (%p1653) target = $region260
        $region259: #{forward.1} parent=211 // pred_region
          %1657 = dma.done [#allocation23], 256
        $region260: #{forward.1} parent=211 // pred_fallthru
          _
        // Predicated region
        $region261: #{forward.1} parent=211 // pred_check
          %p1658 = pneg %p912
        $region262: #{forward.1} parent=211 // pred_check_branch
          %1660 = sbr.rel (%p1658) target = $region264
        $region263: #{forward.1} parent=211 // pred_region
          %1662 = dma.done [#allocation23], 256
        $region264: #{forward.1} parent=211 // pred_fallthru
          _
        // Predicated region
        $region265: #{forward.1} parent=211 // pred_check
          %p1663 = pneg %p954
        $region266: #{forward.1} parent=211 // pred_check_branch
          %1665 = sbr.rel (%p1663) target = $region268
        $region267: #{forward.1} parent=211 // pred_region
          %1667 = dma.done [#allocation26], 256
        $region268: #{forward.1} parent=211 // pred_fallthru
          _
        // Predicated region
        $region269: #{forward.1} parent=211 // pred_check
          %p1668 = pneg %p1038
        $region270: #{forward.1} parent=211 // pred_check_branch
          %1670 = sbr.rel (%p1668) target = $region272
        $region271: #{forward.1} parent=211 // pred_region
          %1672 = dma.done [#allocation26], 256
        $region272: #{forward.1} parent=211 // pred_fallthru
          _
        // Predicated region
        $region273: #{forward.1} parent=211 // pred_check
          %p1673 = pneg %p1122
        $region274: #{forward.1} parent=211 // pred_check_branch
          %1675 = sbr.rel (%p1673) target = $region276
        $region275: #{forward.1} parent=211 // pred_region
          %1677 = dma.done [#allocation29], 256
        $region276: #{forward.1} parent=211 // pred_fallthru
          _
        %p1678 = pneg %p156
        %p1679 = pneg %p153
        %p1680 = pneg %p177
        %p1681 = pneg %p174
        %p1682 = pneg %p198
        %p1683 = pneg %p195
        %p1684 = pneg %p219
        %p1685 = pneg %p216
        %p1686 = pneg %p240
        %p1687 = pneg %p237
        %p1688 = pneg %p261
        %p1689 = pneg %p258
        %p1690 = pneg %p282
        %p1691 = pneg %p279
        %p1692 = pneg %p303
        %p1693 = pneg %p300
        %p1694 = pneg %p324
        %p1695 = pneg %p321
        %p1696 = pneg %p345
        %p1697 = pneg %p342
        %p1698 = pneg %p366
        %p1699 = pneg %p363
        %p1700 = pneg %p387
        %p1701 = pneg %p384
        %p1702 = pneg %p408
        %p1703 = pneg %p405
        %p1704 = pneg %p429
        %p1705 = pneg %p426
        %p1706 = pneg %p450
        %p1707 = pneg %p447
        %p1708 = pneg %p471
        %p1709 = pneg %p468
        %p1710 = pneg %p492
        %p1711 = pneg %p489
        %p1712 = pneg %p513
        %p1713 = pneg %p510
        %p1714 = pneg %p534
        %p1715 = pneg %p531
        %p1716 = pneg %p555
        %p1717 = pneg %p552
        %p1718 = pneg %p576
        %p1719 = pneg %p573
        %p1720 = pneg %p597
        %p1721 = pneg %p594
        %p1722 = pneg %p618
        %p1723 = pneg %p615
        %p1724 = pneg %p639
        %p1725 = pneg %p636
        %p1726 = pneg %p660
        %p1727 = pneg %p657
        %p1728 = pneg %p681
        %p1729 = pneg %p678
        %p1730 = pneg %p702
        %p1731 = pneg %p699
        %p1732 = pneg %p723
        %p1733 = pneg %p720
        %p1734 = pneg %p744
        %p1735 = pneg %p741
        %p1736 = pneg %p765
        %p1737 = pneg %p762
        %p1738 = pneg %p786
        %p1739 = pneg %p783
        %p1740 = pneg %p807
        %p1741 = pneg %p804
        %p1742 = pneg %p828
        %p1743 = pneg %p825
        %p1744 = pneg %p849
        %p1745 = pneg %p846
        %p1746 = pneg %p870
        %p1747 = pneg %p867
        %p1748 = pneg %p891
        %p1749 = pneg %p888
        %p1750 = pneg %p912
        %p1751 = pneg %p909
        %p1752 = pneg %p933
        %p1753 = pneg %p930
        %p1754 = pneg %p954
        %p1755 = pneg %p951
        %p1756 = pneg %p975
        %p1757 = pneg %p972
        %p1758 = pneg %p996
        %p1759 = pneg %p993
        %p1760 = pneg %p1017
        %p1761 = pneg %p1014
        %p1762 = pneg %p1038
        %p1763 = pneg %p1035
        %p1764 = pneg %p1059
        %p1765 = pneg %p1056
        %p1766 = pneg %p1080
        %p1767 = pneg %p1077
        %p1768 = pneg %p1101
        %p1769 = pneg %p1098
        %p1770 = pneg %p1122
        %p1771 = pneg %p1119
        %p1772 = scmp.lt.s32.totalorder %s140, 1
        %s1773 = scalar_select %p1772, %s140, 1
        %s1774 = smul.addr %s1773, 4
        %s1775 = scalar_lea.vmem %s97, %s1774
        %p1776 = pneg %p1148
        %p1777 = pneg %p1145
        %p1778 = pneg %p1174
        %p1779 = pneg %p1171
        %s1780 = sand.u32 %s1161, 1
        %s1781 = scalar_lea.sflag [#allocation6], %s1780
        %s1782 = sand.u32 %s1161, 1
        %s1783 = smul.addr %s1782, 8
        %s1784 = scalar_lea.vmem [#allocation30], %s1783
        %p1785 = pneg %p1200
        %p1786 = pneg %p1197
        %s1787 = sand.u32 %s140, 1
        %s1788 = scalar_lea.sflag [#allocation32], %s1787
        %s1789 = sand.u32 %s1187, 1
        %s1790 = scalar_lea.vmem [#allocation31], %s1789
        %p1791 = pneg %p1226
        %p1792 = pneg %p1223
        %s1793 = sand.u32 %s140, 1
        %s1794 = scalar_lea.sflag [#allocation32], %s1793
        %s1795 = sand.u32 %s1213, 1
        %s1796 = scalar_lea.vmem [#allocation33], %s1795
        %p1797 = pneg %p1252
        %p1798 = pneg %p1249
        %p1799 = scmp.lt.s32.totalorder %s140, 1
        %s1800 = scalar_select %p1799, %s140, 1
        %s1801 = scalar_lea.vmem %s105, %s1800
        %p1802 = scmp.lt.s32.totalorder %s140, 1
        %s1803 = scalar_select %p1802, %s140, 1
        %s1804 = smul.addr %s1803, 4
        %s1805 = scalar_lea.vmem %s97, %s1804
        %p1806 = scmp.lt.s32.totalorder %s140, 1
        %s1807 = scalar_select %p1806, %s140, 1
        %s1808 = scalar_lea.vmem %s105, %s1807
        %v1810 = vlaneseq
        %v1811 = vand.u32 %v1810, 127
        %s1812 = smul.u32 %s140, 128
        %s1813 = sld [smem:[#allocation3 + %s1812]]
        %v1814 = vstv %s1813
        %vm1815 = vcmp.eq.s32.totalorder %v1811, %v1814
        %v1816 = vsel %vm1815, 1, 0
        %v1817 = vcvt.s32.f32 %v1816
        %s1818 = sadd.s32 %s1812, 1
        %s1819 = sld [smem:[#allocation3 + %s1818]]
        %v1820 = vstv %s1819
        %vm1821 = vcmp.eq.s32.totalorder %v1811, %v1820
        %v1822 = vsel %vm1821, 1, 0
        %v1823 = vcvt.s32.f32 %v1822
        %s1824 = sadd.s32 %s1812, 2
        %s1825 = sld [smem:[#allocation3 + %s1824]]
        %v1826 = vstv %s1825
        %vm1827 = vcmp.eq.s32.totalorder %v1811, %v1826
        %v1828 = vsel %vm1827, 1, 0
        %v1829 = vcvt.s32.f32 %v1828
        %s1830 = sadd.s32 %s1812, 3
        %s1831 = sld [smem:[#allocation3 + %s1830]]
        %v1832 = vstv %s1831
        %vm1833 = vcmp.eq.s32.totalorder %v1811, %v1832
        %v1834 = vsel %vm1833, 1, 0
        %v1835 = vcvt.s32.f32 %v1834
        %s1836 = sadd.s32 %s1812, 4
        %s1837 = sld [smem:[#allocation3 + %s1836]]
        %v1838 = vstv %s1837
        %vm1839 = vcmp.eq.s32.totalorder %v1811, %v1838
        %v1840 = vsel %vm1839, 1, 0
        %v1841 = vcvt.s32.f32 %v1840
        %s1842 = sadd.s32 %s1812, 5
        %s1843 = sld [smem:[#allocation3 + %s1842]]
        %v1844 = vstv %s1843
        %vm1845 = vcmp.eq.s32.totalorder %v1811, %v1844
        %v1846 = vsel %vm1845, 1, 0
        %v1847 = vcvt.s32.f32 %v1846
        %s1848 = sadd.s32 %s1812, 6
        %s1849 = sld [smem:[#allocation3 + %s1848]]
        %v1850 = vstv %s1849
        %vm1851 = vcmp.eq.s32.totalorder %v1811, %v1850
        %v1852 = vsel %vm1851, 1, 0
        %v1853 = vcvt.s32.f32 %v1852
        %s1854 = sadd.s32 %s1812, 7
        %s1855 = sld [smem:[#allocation3 + %s1854]]
        %v1856 = vstv %s1855
        %vm1857 = vcmp.eq.s32.totalorder %v1811, %v1856
        %v1858 = vsel %vm1857, 1, 0
        %v1859 = vcvt.s32.f32 %v1858
        %vm1860 = vcmask 1040384
        %v1861 = vsel %vm1860, %v1817, %v1823
        %vm1862 = vcmask 1041408
        %v1863 = vsel %vm1862, %v1861, %v1829
        %vm1864 = vcmask 1042432
        %v1865 = vsel %vm1864, %v1863, %v1835
        %vm1866 = vcmask 1043456
        %v1867 = vsel %vm1866, %v1865, %v1841
        %vm1868 = vcmask 1044480
        %v1869 = vsel %vm1868, %v1867, %v1847
        %vm1870 = vcmask 1045504
        %v1871 = vsel %vm1870, %v1869, %v1853
        %vm1872 = vcmask 1046528
        %v1873 = vsel %vm1872, %v1871, %v1859
        %v1874 = vpack.c.bf16 %v1873, %v1873
        %v1875 = vld [vmem:[#allocation16] sm:$0xf]
        %v1876 = vld [vmem:[#allocation16 + $0x4] sm:$0xf]
        %v1877 = vld [vmem:[#allocation16 + $0x8] sm:$0xf]
        %v1878 = vld [vmem:[#allocation16 + $0xc] sm:$0xf]
        %v1879 = vld [vmem:[#allocation16 + $0x10] sm:$0xf]
        %v1880 = vld [vmem:[#allocation16 + $0x14] sm:$0xf]
        %v1881 = vld [vmem:[#allocation16 + $0x18] sm:$0xf]
        %v1882 = vld [vmem:[#allocation16 + $0x1c] sm:$0xf]
        %v1883 = vld [vmem:[%s71] sm:$0xff]
        %v1892 = vunpack.c.l.b16 %v1875
        %v1893 = vunpack.c.l.b16 %v1876
        %v1894 = vunpack.c.l.b16 %v1877
        %v1895 = vunpack.c.l.b16 %v1878
        %v1896 = vunpack.c.l.b16 %v1879
        %v1897 = vunpack.c.l.b16 %v1880
        %v1898 = vunpack.c.l.b16 %v1881
        %v1899 = vunpack.c.l.b16 %v1882
        %v1900 = vpack.c.b16 %v1893, %v1892
        %v1901 = vpack.c.b16 %v1895, %v1894
        %v1902 = vpack.c.b16 %v1897, %v1896
        %v1903 = vpack.c.b16 %v1899, %v1898
        %vm1908 = vcmask 523264
        %v1910 = vsel %vm1908, %v1874, 0
        %1912 = vmatpush.bf16.msra.mxu0 0
        %1913 = vmatpush.bf16.msra.mxu0 0
        %1914 = vmatpush.bf16.msra.mxu0 0
        %1915 = vmatpush.bf16.msra.mxu0 0
        %1916 = vmatpush.bf16.msra.mxu0 %v1903
        %1917 = vmatpush.bf16.msra.mxu0 %v1902
        %1918 = vmatpush.bf16.msra.mxu0 %v1901
        %1919 = vmatpush.bf16.msra.mxu0 %v1900
        %1920 = vmatmul.bf16.gmra.mxu0 %v1910
        %v1921 = vpop.f32.mrf.mxu0
        %v1922 = vadd.f32 %v1883, %v1921
        %v1923 = vpop.f32.mrf.mxu0
        %1924 = vdwg.mxu0
        %vm1925 = vcmask 261120
        %v1926 = vsel %vm1925, %v1922, 0.0
        %1927 = vadd.xlane.f32.xlu0 %v1926
        %v1928 = vpop.xlane.xlu0 %1927
        %v1929 = vrcp.pop 32.0
        %v1930 = vmul.f32 32.0, %v1929
        %v1931 = vsub.f32 1.0, %v1930
        %v1932 = vmul.f32 %v1929, %v1931
        %v1933 = vadd.f32 %v1929, %v1932
        %vm1934 = vweird.f32 %v1929
        %v1935 = vsel %vm1934, %v1929, %v1933
        %v1936 = vmul.f32 %v1928, %v1935
        %v1937 = vsub.f32 %v1922, %v1936
        %v1938 = vmul.f32 %v1937, %v1937
        %v1939 = vsel %vm1925, %v1938, 0.0
        %1940 = vadd.xlane.f32.xlu0 %v1939
        %v1941 = vpop.xlane.xlu0 %1940
        %v1942 = vmul.f32 %v1941, %v1935
        %v1943 = vadd.f32 %v1942, 1e-05
        %v1944 = vrsqrt.pop %v1943
        %v1945 = vmul.f32 %v1944, %v1943
        %v1946 = vmul.f32 %v1945, %v1944
        %v1947 = vmul.f32 0.5, %v1946
        %v1948 = vsub.f32 1.5, %v1947
        %v1949 = vmul.f32 %v1944, %v1948
        %vm1950 = vweird.f32 %v1943
        %vm1951 = vweird.f32 %v1944
        %vm1952 = vmor %vm1950, %vm1951
        %v1953 = vsel %vm1952, %v1944, %v1949
        %v1954 = vmul.f32 %v1937, %v1953
        %v1955 = vld [vmem:[%s53] sm:$0x1]
        %v1957 = vperm.slane %v1955, 0
        %v1959 = vmul.f32 %v1954, %v1957
        %v1960 = vld [vmem:[%s51] sm:$0x1]
        %v1962 = vperm.slane %v1960, 0
        %v1964 = vadd.f32 %v1959, %v1962
        %v1965 = vpack.c.bf16 %v1964, %v1964
        %v1966 = vld [vmem:[#allocation22] sm:$0xf]
        %v1967 = vld [vmem:[#allocation22 + $0x4] sm:$0xf]
        %v1968 = vld [vmem:[#allocation22 + $0x8] sm:$0xf]
        %v1969 = vld [vmem:[#allocation22 + $0xc] sm:$0xf]
        %v1970 = vld [vmem:[%s49] sm:$0x1]
        %v1972 = vperm.slane %v1970, 0
        %v1978 = vunpack.c.l.b16 %v1966
        %v1979 = vunpack.c.l.b16 %v1967
        %v1980 = vunpack.c.l.b16 %v1968
        %v1981 = vunpack.c.l.b16 %v1969
        %v1982 = vpack.c.b16 %v1979, %v1978
        %v1983 = vpack.c.b16 %v1981, %v1980
        %v1987 = vsel %vm1925, %v1965, 0
        %1989 = vmatpush.bf16.msra.mxu0 0
        %1990 = vmatpush.bf16.msra.mxu0 0
        %1991 = vmatpush.bf16.msra.mxu0 0
        %1992 = vmatpush.bf16.msra.mxu0 0
        %1993 = vmatpush.bf16.msra.mxu0 0
        %1994 = vmatpush.bf16.msra.mxu0 0
        %1995 = vmatpush.bf16.msra.mxu0 %v1983
        %1996 = vmatpush.bf16.msra.mxu0 %v1982
        %1997 = vmatmul.bf16.gmra.mxu0 %v1987
        %v1998 = vpop.f32.mrf.mxu0
        %v1999 = vadd.f32 %v1972, %v1998
        %v2000 = vpop.f32.mrf.mxu0
        %2001 = vdwg.mxu0
        %v2002 = vpack.c.bf16 %v1999, %v1999
        %2004 = vrot.lane.b32.xlu0 %v2002, 96
        %v2005 = vpop.permute.xlu0 %2004
        %vm2006 = vcmask 64512
        %v2008 = vsel %vm2006, %v2002, 0
        %v2011 = vsel %vm2006, %v2005, 0
        %2013 = vmatpush.bf16.xpose.msra.mxu0 0
        %2014 = vmatpush.bf16.xpose.msra.mxu0 0
        %2015 = vmatpush.bf16.xpose.msra.mxu0 0
        %2016 = vmatpush.bf16.xpose.msra.mxu0 0
        %2017 = vmatpush.bf16.xpose.msra.mxu0 0
        %2018 = vmatpush.bf16.xpose.msra.mxu0 0
        %2019 = vmatpush.bf16.xpose.msra.mxu0 0
        %2020 = vmatpush.bf16.xpose.msra.mxu0 %v2011
        %2021 = vmatmul.bf16.gmra.mxu0 %v2008
        %v2022 = vpop.f32.mrf.mxu0
        %v2023 = vadd.f32 0.0, %v2022
        %v2024 = vpop.f32.mrf.mxu0
        %2025 = vdwg.mxu0
        %v2026 = vmul.f32 %v2023, 0.35355338
        %v2027 = vsel %vm2006, %v2026, -inf
        %2028 = vmax.xlane.f32.xlu0 %v2027
        %v2029 = vpop.xlane.xlu0 %2028
        %v2030 = vsub.f32 %v2026, %v2029
        %v2031 = vmul.f32 %v2030, 1.442695
        %v2032 = vpow.pop %v2031
        %v2033 = vsel %vm2006, %v2032, 0.0
        %2034 = vadd.xlane.f32.xlu0 %v2033
        %v2035 = vpop.xlane.xlu0 %2034
        %v2036 = vrcp.pop %v2035
        %v2037 = vmul.f32 %v2032, %v2036
        %v2038 = vpack.c.bf16 %v2037, %v2037
        %2039 = vrot.lane.b32.xlu0 %v2002, 64
        %v2040 = vpop.permute.xlu0 %2039
        %v2042 = vsel %vm2006, %v2038, 0
        %v2045 = vsel %vm1866, %v2040, 0
        %2047 = vmatpush.bf16.msra.mxu0 0
        %2048 = vmatpush.bf16.msra.mxu0 0
        %2049 = vmatpush.bf16.msra.mxu0 0
        %2050 = vmatpush.bf16.msra.mxu0 0
        %2051 = vmatpush.bf16.msra.mxu0 0
        %2052 = vmatpush.bf16.msra.mxu0 0
        %2053 = vmatpush.bf16.msra.mxu0 0
        %2054 = vmatpush.bf16.msra.mxu0 %v2045
        %2055 = vmatmul.bf16.gmra.mxu0 %v2042
        %v2056 = vpop.f32.mrf.mxu0
        %v2057 = vadd.f32 0.0, %v2056
        %v2058 = vpop.f32.mrf.mxu0
        %2059 = vdwg.mxu0
        %2060 = vrot.lane.b32.xlu0 %v2002, 120
        %v2061 = vpop.permute.xlu0 %2060
        %2062 = vrot.lane.b32.xlu0 %v2002, 88
        %v2063 = vpop.permute.xlu0 %2062
        %v2065 = vsel %vm2006, %v2061, 0
        %v2068 = vsel %vm2006, %v2063, 0
        %2070 = vmatpush.bf16.xpose.msra.mxu0 0
        %2071 = vmatpush.bf16.xpose.msra.mxu0 0
        %2072 = vmatpush.bf16.xpose.msra.mxu0 0
        %2073 = vmatpush.bf16.xpose.msra.mxu0 0
        %2074 = vmatpush.bf16.xpose.msra.mxu0 0
        %2075 = vmatpush.bf16.xpose.msra.mxu0 0
        %2076 = vmatpush.bf16.xpose.msra.mxu0 0
        %2077 = vmatpush.bf16.xpose.msra.mxu0 %v2068
        %2078 = vmatmul.bf16.gmra.mxu0 %v2065
        %v2079 = vpop.f32.mrf.mxu0
        %v2080 = vadd.f32 0.0, %v2079
        %v2081 = vpop.f32.mrf.mxu0
        %2082 = vdwg.mxu0
        %v2083 = vmul.f32 %v2080, 0.35355338
        %v2084 = vsel %vm2006, %v2083, -inf
        %2085 = vmax.xlane.f32.xlu0 %v2084
        %v2086 = vpop.xlane.xlu0 %2085
        %v2087 = vsub.f32 %v2083, %v2086
        %v2088 = vmul.f32 %v2087, 1.442695
        %v2089 = vpow.pop %v2088
        %v2090 = vsel %vm2006, %v2089, 0.0
        %2091 = vadd.xlane.f32.xlu0 %v2090
        %v2092 = vpop.xlane.xlu0 %2091
        %v2093 = vrcp.pop %v2092
        %v2094 = vmul.f32 %v2089, %v2093
        %v2095 = vpack.c.bf16 %v2094, %v2094
        %2096 = vrot.lane.b32.xlu0 %v2002, 56
        %v2097 = vpop.permute.xlu0 %2096
        %v2099 = vsel %vm2006, %v2095, 0
        %v2102 = vsel %vm1866, %v2097, 0
        %2104 = vmatpush.bf16.msra.mxu0 0
        %2105 = vmatpush.bf16.msra.mxu0 0
        %2106 = vmatpush.bf16.msra.mxu0 0
        %2107 = vmatpush.bf16.msra.mxu0 0
        %2108 = vmatpush.bf16.msra.mxu0 0
        %2109 = vmatpush.bf16.msra.mxu0 0
        %2110 = vmatpush.bf16.msra.mxu0 0
        %2111 = vmatpush.bf16.msra.mxu0 %v2102
        %2112 = vmatmul.bf16.gmra.mxu0 %v2099
        %v2113 = vpop.f32.mrf.mxu0
        %v2114 = vadd.f32 0.0, %v2113
        %v2115 = vpop.f32.mrf.mxu0
        %2116 = vdwg.mxu0
        %2117 = vrot.lane.b32.xlu0 %v2002, 112
        %v2118 = vpop.permute.xlu0 %2117
        %2119 = vrot.lane.b32.xlu0 %v2002, 80
        %v2120 = vpop.permute.xlu0 %2119
        %v2122 = vsel %vm2006, %v2118, 0
        %v2125 = vsel %vm2006, %v2120, 0
        %2127 = vmatpush.bf16.xpose.msra.mxu0 0
        %2128 = vmatpush.bf16.xpose.msra.mxu0 0
        %2129 = vmatpush.bf16.xpose.msra.mxu0 0
        %2130 = vmatpush.bf16.xpose.msra.mxu0 0
        %2131 = vmatpush.bf16.xpose.msra.mxu0 0
        %2132 = vmatpush.bf16.xpose.msra.mxu0 0
        %2133 = vmatpush.bf16.xpose.msra.mxu0 0
        %2134 = vmatpush.bf16.xpose.msra.mxu0 %v2125
        %2135 = vmatmul.bf16.gmra.mxu0 %v2122
        %v2136 = vpop.f32.mrf.mxu0
        %v2137 = vadd.f32 0.0, %v2136
        %v2138 = vpop.f32.mrf.mxu0
        %2139 = vdwg.mxu0
        %v2140 = vmul.f32 %v2137, 0.35355338
        %v2141 = vsel %vm2006, %v2140, -inf
        %2142 = vmax.xlane.f32.xlu0 %v2141
        %v2143 = vpop.xlane.xlu0 %2142
        %v2144 = vsub.f32 %v2140, %v2143
        %v2145 = vmul.f32 %v2144, 1.442695
        %v2146 = vpow.pop %v2145
        %v2147 = vsel %vm2006, %v2146, 0.0
        %2148 = vadd.xlane.f32.xlu0 %v2147
        %v2149 = vpop.xlane.xlu0 %2148
        %v2150 = vrcp.pop %v2149
        %v2151 = vmul.f32 %v2146, %v2150
        %v2152 = vpack.c.bf16 %v2151, %v2151
        %2153 = vrot.lane.b32.xlu0 %v2002, 48
        %v2154 = vpop.permute.xlu0 %2153
        %v2156 = vsel %vm2006, %v2152, 0
        %v2159 = vsel %vm1866, %v2154, 0
        %2161 = vmatpush.bf16.msra.mxu0 0
        %2162 = vmatpush.bf16.msra.mxu0 0
        %2163 = vmatpush.bf16.msra.mxu0 0
        %2164 = vmatpush.bf16.msra.mxu0 0
        %2165 = vmatpush.bf16.msra.mxu0 0
        %2166 = vmatpush.bf16.msra.mxu0 0
        %2167 = vmatpush.bf16.msra.mxu0 0
        %2168 = vmatpush.bf16.msra.mxu0 %v2159
        %2169 = vmatmul.bf16.gmra.mxu0 %v2156
        %v2170 = vpop.f32.mrf.mxu0
        %v2171 = vadd.f32 0.0, %v2170
        %v2172 = vpop.f32.mrf.mxu0
        %2173 = vdwg.mxu0
        %2174 = vrot.lane.b32.xlu0 %v2002, 104
        %v2175 = vpop.permute.xlu0 %2174
        %2176 = vrot.lane.b32.xlu0 %v2002, 72
        %v2177 = vpop.permute.xlu0 %2176
        %v2179 = vsel %vm2006, %v2175, 0
        %v2182 = vsel %vm2006, %v2177, 0
        %2184 = vmatpush.bf16.xpose.msra.mxu0 0
        %2185 = vmatpush.bf16.xpose.msra.mxu0 0
        %2186 = vmatpush.bf16.xpose.msra.mxu0 0
        %2187 = vmatpush.bf16.xpose.msra.mxu0 0
        %2188 = vmatpush.bf16.xpose.msra.mxu0 0
        %2189 = vmatpush.bf16.xpose.msra.mxu0 0
        %2190 = vmatpush.bf16.xpose.msra.mxu0 0
        %2191 = vmatpush.bf16.xpose.msra.mxu0 %v2182
        %2192 = vmatmul.bf16.gmra.mxu0 %v2179
        %v2193 = vpop.f32.mrf.mxu0
        %v2194 = vadd.f32 0.0, %v2193
        %v2195 = vpop.f32.mrf.mxu0
        %2196 = vdwg.mxu0
        %v2197 = vmul.f32 %v2194, 0.35355338
        %v2198 = vsel %vm2006, %v2197, -inf
        %2199 = vmax.xlane.f32.xlu0 %v2198
        %v2200 = vpop.xlane.xlu0 %2199
        %v2201 = vsub.f32 %v2197, %v2200
        %v2202 = vmul.f32 %v2201, 1.442695
        %v2203 = vpow.pop %v2202
        %v2204 = vsel %vm2006, %v2203, 0.0
        %2205 = vadd.xlane.f32.xlu0 %v2204
        %v2206 = vpop.xlane.xlu0 %2205
        %v2207 = vrcp.pop %v2206
        %v2208 = vmul.f32 %v2203, %v2207
        %v2209 = vpack.c.bf16 %v2208, %v2208
        %2210 = vrot.lane.b32.xlu0 %v2002, 40
        %v2211 = vpop.permute.xlu0 %2210
        %v2213 = vsel %vm2006, %v2209, 0
        %v2216 = vsel %vm1866, %v2211, 0
        %2218 = vmatpush.bf16.msra.mxu0 0
        %2219 = vmatpush.bf16.msra.mxu0 0
        %2220 = vmatpush.bf16.msra.mxu0 0
        %2221 = vmatpush.bf16.msra.mxu0 0
        %2222 = vmatpush.bf16.msra.mxu0 0
        %2223 = vmatpush.bf16.msra.mxu0 0
        %2224 = vmatpush.bf16.msra.mxu0 0
        %2225 = vmatpush.bf16.msra.mxu0 %v2216
        %2226 = vmatmul.bf16.gmra.mxu0 %v2213
        %v2227 = vpop.f32.mrf.mxu0
        %v2228 = vadd.f32 0.0, %v2227
        %v2229 = vpop.f32.mrf.mxu0
        %2230 = vdwg.mxu0
        %2232 = vrot.lane.b32.xlu0 %v2114, 8
        %v2233 = vpop.permute.xlu0 %2232
        %2236 = vrot.lane.b32.xlu0 %v2171, 16
        %v2237 = vpop.permute.xlu0 %2236
        %2240 = vrot.lane.b32.xlu0 %v2228, 24
        %v2241 = vpop.permute.xlu0 %2240
        %v2243 = vsel %vm2006, %v2057, %v2233
        %vm2244 = vcmask 130048
        %v2245 = vsel %vm2244, %v2243, %v2237
        %vm2246 = vcmask 195584
        %v2247 = vsel %vm2246, %v2245, %v2241
        %v2248 = vpack.c.bf16 %v2247, %v2247
        %v2249 = vld [vmem:[#allocation21] sm:$0xf]
        %v2250 = vld [vmem:[#allocation21 + $0x4] sm:$0xf]
        %v2251 = vld [vmem:[#allocation21 + $0x8] sm:$0xf]
        %v2252 = vld [vmem:[#allocation21 + $0xc] sm:$0xf]
        %v2253 = vld [vmem:[%s47] sm:$0x1]
        %v2255 = vperm.slane %v2253, 0
        %v2261 = vunpack.c.l.b16 %v2249
        %v2262 = vunpack.c.l.b16 %v2250
        %v2263 = vunpack.c.l.b16 %v2251
        %v2264 = vunpack.c.l.b16 %v2252
        %v2265 = vpack.c.b16 %v2262, %v2261
        %v2266 = vpack.c.b16 %v2264, %v2263
        %v2270 = vsel %vm1925, %v2248, 0
        %2272 = vmatpush.bf16.msra.mxu0 0
        %2273 = vmatpush.bf16.msra.mxu0 0
        %2274 = vmatpush.bf16.msra.mxu0 0
        %2275 = vmatpush.bf16.msra.mxu0 0
        %2276 = vmatpush.bf16.msra.mxu0 0
        %2277 = vmatpush.bf16.msra.mxu0 0
        %2278 = vmatpush.bf16.msra.mxu0 %v2266
        %2279 = vmatpush.bf16.msra.mxu0 %v2265
        %2280 = vmatmul.bf16.gmra.mxu0 %v2270
        %v2281 = vpop.f32.mrf.mxu0
        %v2282 = vadd.f32 %v2255, %v2281
        %v2283 = vpop.f32.mrf.mxu0
        %2284 = vdwg.mxu0
        %v2285 = vadd.f32 %v1922, %v2282
        %v2286 = vsel %vm1925, %v2285, 0.0
        %2287 = vadd.xlane.f32.xlu0 %v2286
        %v2288 = vpop.xlane.xlu0 %2287
        %v2289 = vmul.f32 %v2288, %v1935
        %v2290 = vsub.f32 %v2285, %v2289
        %v2291 = vmul.f32 %v2290, %v2290
        %v2292 = vsel %vm1925, %v2291, 0.0
        %2293 = vadd.xlane.f32.xlu0 %v2292
        %v2294 = vpop.xlane.xlu0 %2293
        %v2295 = vmul.f32 %v2294, %v1935
        %v2296 = vadd.f32 %v2295, 1e-05
        %v2297 = vrsqrt.pop %v2296
        %v2298 = vmul.f32 %v2297, %v2296
        %v2299 = vmul.f32 %v2298, %v2297
        %v2300 = vmul.f32 0.5, %v2299
        %v2301 = vsub.f32 1.5, %v2300
        %v2302 = vmul.f32 %v2297, %v2301
        %vm2303 = vweird.f32 %v2296
        %vm2304 = vweird.f32 %v2297
        %vm2305 = vmor %vm2303, %vm2304
        %v2306 = vsel %vm2305, %v2297, %v2302
        %v2307 = vmul.f32 %v2290, %v2306
        %v2308 = vld [vmem:[%s57] sm:$0x1]
        %v2310 = vperm.slane %v2308, 0
        %v2312 = vmul.f32 %v2307, %v2310
        %v2313 = vld [vmem:[%s55] sm:$0x1]
        %v2315 = vperm.slane %v2313, 0
        %v2317 = vadd.f32 %v2312, %v2315
        %v2318 = vpack.c.bf16 %v2317, %v2317
        %v2319 = vld [vmem:[#allocation18] sm:$0xf]
        %v2320 = vld [vmem:[#allocation18 + $0x4] sm:$0xf]
        %v2321 = vld [vmem:[#allocation18 + $0x8] sm:$0xf]
        %v2322 = vld [vmem:[#allocation18 + $0xc] sm:$0xf]
        %v2323 = vld [vmem:[%s43] sm:$0x1]
        %v2325 = vperm.slane %v2323, 0
        %v2331 = vunpack.c.l.b16 %v2319
        %v2332 = vunpack.c.l.b16 %v2320
        %v2333 = vunpack.c.l.b16 %v2321
        %v2334 = vunpack.c.l.b16 %v2322
        %v2335 = vpack.c.b16 %v2332, %v2331
        %v2336 = vpack.c.b16 %v2334, %v2333
        %v2340 = vsel %vm1925, %v2318, 0
        %2342 = vmatpush.bf16.msra.mxu0 0
        %2343 = vmatpush.bf16.msra.mxu0 0
        %2344 = vmatpush.bf16.msra.mxu0 0
        %2345 = vmatpush.bf16.msra.mxu0 0
        %2346 = vmatpush.bf16.msra.mxu0 0
        %2347 = vmatpush.bf16.msra.mxu0 0
        %2348 = vmatpush.bf16.msra.mxu0 %v2336
        %2349 = vmatpush.bf16.msra.mxu0 %v2335
        %2350 = vmatmul.bf16.gmra.mxu0 %v2340
        %v2351 = vpop.f32.mrf.mxu0
        %v2352 = vadd.f32 %v2325, %v2351
        %v2353 = vpop.f32.mrf.mxu0
        %2354 = vdwg.mxu0
        %v2355 = vmul.f32 %v2352, %v2352
        %v2356 = vmul.f32 %v2352, %v2355
        %v2357 = vmul.f32 %v2356, 0.044715
        %v2358 = vadd.f32 %v2352, %v2357
        %v2359 = vmul.f32 %v2358, 0.7978846
        %v2360 = vtanh.pop %v2359
        %v2361 = vadd.f32 %v2360, 1.0
        %v2362 = vmul.f32 %v2361, 0.5
        %v2363 = vmul.f32 %v2352, %v2362
        %v2364 = vpack.c.bf16 %v2363, %v2363
        %v2365 = vld [vmem:[#allocation19] sm:$0xf]
        %v2366 = vld [vmem:[#allocation19 + $0x4] sm:$0xf]
        %v2367 = vld [vmem:[#allocation19 + $0x8] sm:$0xf]
        %v2368 = vld [vmem:[#allocation19 + $0xc] sm:$0xf]
        %v2369 = vld [vmem:[#allocation19 + $0x10] sm:$0xf]
        %v2370 = vld [vmem:[#allocation19 + $0x14] sm:$0xf]
        %v2371 = vld [vmem:[#allocation19 + $0x18] sm:$0xf]
        %v2372 = vld [vmem:[#allocation19 + $0x1c] sm:$0xf]
        %v2373 = vld [vmem:[#allocation19 + $0x20] sm:$0xf]
        %v2374 = vld [vmem:[#allocation19 + $0x24] sm:$0xf]
        %v2375 = vld [vmem:[#allocation19 + $0x28] sm:$0xf]
        %v2376 = vld [vmem:[#allocation19 + $0x2c] sm:$0xf]
        %v2377 = vld [vmem:[#allocation19 + $0x30] sm:$0xf]
        %v2378 = vld [vmem:[#allocation19 + $0x34] sm:$0xf]
        %v2379 = vld [vmem:[#allocation19 + $0x38] sm:$0xf]
        %v2380 = vld [vmem:[#allocation19 + $0x3c] sm:$0xf]
        %v2381 = vld [vmem:[%s45] sm:$0x1]
        %v2383 = vperm.slane %v2381, 0
        %v2401 = vunpack.c.l.b16 %v2365
        %v2402 = vunpack.c.l.b16 %v2366
        %v2403 = vunpack.c.l.b16 %v2367
        %v2404 = vunpack.c.l.b16 %v2368
        %v2405 = vunpack.c.l.b16 %v2369
        %v2406 = vunpack.c.l.b16 %v2370
        %v2407 = vunpack.c.l.b16 %v2371
        %v2408 = vunpack.c.l.b16 %v2372
        %v2409 = vunpack.c.l.b16 %v2373
        %v2410 = vunpack.c.l.b16 %v2374
        %v2411 = vunpack.c.l.b16 %v2375
        %v2412 = vunpack.c.l.b16 %v2376
        %v2413 = vunpack.c.l.b16 %v2377
        %v2414 = vunpack.c.l.b16 %v2378
        %v2415 = vunpack.c.l.b16 %v2379
        %v2416 = vunpack.c.l.b16 %v2380
        %v2417 = vpack.c.b16 %v2402, %v2401
        %v2418 = vpack.c.b16 %v2404, %v2403
        %v2419 = vpack.c.b16 %v2406, %v2405
        %v2420 = vpack.c.b16 %v2408, %v2407
        %v2421 = vpack.c.b16 %v2410, %v2409
        %v2422 = vpack.c.b16 %v2412, %v2411
        %v2423 = vpack.c.b16 %v2414, %v2413
        %v2424 = vpack.c.b16 %v2416, %v2415
        %2433 = vmatpush.bf16.msra.mxu0 %v2424
        %2434 = vmatpush.bf16.msra.mxu0 %v2423
        %2435 = vmatpush.bf16.msra.mxu0 %v2422
        %2436 = vmatpush.bf16.msra.mxu0 %v2421
        %2437 = vmatpush.bf16.msra.mxu0 %v2420
        %2438 = vmatpush.bf16.msra.mxu0 %v2419
        %2439 = vmatpush.bf16.msra.mxu0 %v2418
        %2440 = vmatpush.bf16.msra.mxu0 %v2417
        %2441 = vmatmul.bf16.gmra.mxu0 %v2364
        %v2442 = vpop.f32.mrf.mxu0
        %v2443 = vadd.f32 %v2383, %v2442
        %v2444 = vpop.f32.mrf.mxu0
        %2445 = vdwg.mxu0
        %v2446 = vadd.f32 %v2285, %v2443
        %v2447 = vsel %vm1925, %v2446, 0.0
        %2448 = vadd.xlane.f32.xlu0 %v2447
        %v2449 = vpop.xlane.xlu0 %2448
        %v2450 = vmul.f32 %v2449, %v1935
        %v2451 = vsub.f32 %v2446, %v2450
        %v2452 = vmul.f32 %v2451, %v2451
        %v2453 = vsel %vm1925, %v2452, 0.0
        %2454 = vadd.xlane.f32.xlu0 %v2453
        %v2455 = vpop.xlane.xlu0 %2454
        %v2456 = vmul.f32 %v2455, %v1935
        %v2457 = vadd.f32 %v2456, 1e-05
        %v2458 = vrsqrt.pop %v2457
        %v2459 = vmul.f32 %v2458, %v2457
        %v2460 = vmul.f32 %v2459, %v2458
        %v2461 = vmul.f32 0.5, %v2460
        %v2462 = vsub.f32 1.5, %v2461
        %v2463 = vmul.f32 %v2458, %v2462
        %vm2464 = vweird.f32 %v2457
        %vm2465 = vweird.f32 %v2458
        %vm2466 = vmor %vm2464, %vm2465
        %v2467 = vsel %vm2466, %v2458, %v2463
        %v2468 = vmul.f32 %v2451, %v2467
        %v2469 = vld [vmem:[%s69] sm:$0x1]
        %v2471 = vperm.slane %v2469, 0
        %v2473 = vmul.f32 %v2468, %v2471
        %v2474 = vld [vmem:[%s67] sm:$0x1]
        %v2476 = vperm.slane %v2474, 0
        %v2478 = vadd.f32 %v2473, %v2476
        %v2479 = vpack.c.bf16 %v2478, %v2478
        %v2480 = vld [vmem:[#allocation24] sm:$0xf]
        %v2481 = vld [vmem:[#allocation24 + $0x4] sm:$0xf]
        %v2482 = vld [vmem:[#allocation24 + $0x8] sm:$0xf]
        %v2483 = vld [vmem:[#allocation24 + $0xc] sm:$0xf]
        %v2484 = vld [vmem:[%s73] sm:$0x1]
        %v2486 = vperm.slane %v2484, 0
        %v2492 = vunpack.c.l.b16 %v2480
        %v2493 = vunpack.c.l.b16 %v2481
        %v2494 = vunpack.c.l.b16 %v2482
        %v2495 = vunpack.c.l.b16 %v2483
        %v2496 = vpack.c.b16 %v2493, %v2492
        %v2497 = vpack.c.b16 %v2495, %v2494
        %v2501 = vsel %vm1925, %v2479, 0
        %2503 = vmatpush.bf16.msra.mxu0 0
        %2504 = vmatpush.bf16.msra.mxu0 0
        %2505 = vmatpush.bf16.msra.mxu0 0
        %2506 = vmatpush.bf16.msra.mxu0 0
        %2507 = vmatpush.bf16.msra.mxu0 0
        %2508 = vmatpush.bf16.msra.mxu0 0
        %2509 = vmatpush.bf16.msra.mxu0 %v2497
        %2510 = vmatpush.bf16.msra.mxu0 %v2496
        %2511 = vmatmul.bf16.gmra.mxu0 %v2501
        %v2512 = vpop.f32.mrf.mxu0
        %v2513 = vadd.f32 %v2486, %v2512
        %v2514 = vpop.f32.mrf.mxu0
        %2515 = vdwg.mxu0
        %v2517 = vrot.slane %v2513, 1
        %2518 = vrot.lane.b32.xlu0 %v2517, 16
        %v2519 = vpop.permute.xlu0 %2518
        %v2521 = vrot.slane %v2513, 2
        %2522 = vrot.lane.b32.xlu0 %v2521, 32
        %v2523 = vpop.permute.xlu0 %2522
        %v2525 = vrot.slane %v2513, 3
        %2526 = vrot.lane.b32.xlu0 %v2525, 48
        %v2527 = vpop.permute.xlu0 %2526
        %v2529 = vsel %vm2244, %v2513, %v2519
        %v2530 = vsel %vm1925, %v2529, %v2523
        %vm2531 = vcmask 392192
        %v2532 = vsel %vm2531, %v2530, %v2527
        %vm2533 = vcmask 516096
        %2534 = vst.msk [vmem:[%s1790] sm:$0x1] %vm2533, %v2532
        %vm2535 = vcmask 520196
        %2536 = vst.msk [vmem:[%s1796 - $0x4] sm:$0x10] %vm2535, %v2532
        %v2537 = vld [vmem:[%s1805] sm:$0xf]
        %v2538 = vmul.f32 %v2513, 0.5
        %v2539 = vmul.f32 %v2538, 1.442695
        %v2540 = vpow.pop %v2539
        %v2542 = vrot.slane %v2540, 4
        %v2544 = vmul.f32 %v2537, %v2542
        %v2545 = vadd.f32 %v2513, %v2544
        %v2547 = vrot.slane %v2545, 7
        %2548 = vrot.lane.b32.xlu0 %v2547, 120
        %v2549 = vpop.permute.xlu0 %2548
        %v2552 = vrot.slane %v2545, 6
        %2553 = vrot.lane.b32.xlu0 %v2552, 120
        %v2554 = vpop.permute.xlu0 %2553
        %v2557 = vrot.slane %v2545, 5
        %2558 = vrot.lane.b32.xlu0 %v2557, 120
        %v2559 = vpop.permute.xlu0 %2558
        %v2562 = vrot.slane %v2545, 4
        %2563 = vrot.lane.b32.xlu0 %v2562, 120
        %v2564 = vpop.permute.xlu0 %2563
        %v2566 = vsel %vm1860, %v2545, %v2549
        %v2567 = vsel %vm1862, %v2566, %v2547
        %v2568 = vsel %vm1864, %v2567, %v2554
        %v2569 = vsel %vm1866, %v2568, %v2552
        %v2570 = vsel %vm1868, %v2569, %v2559
        %v2571 = vsel %vm1870, %v2570, %v2557
        %v2572 = vsel %vm1872, %v2571, %v2564
        %v2573 = vpack.c.bf16 %v2532, %v2532
        %v2574 = vld [vmem:[%s91] sm:$0xf]
        %v2575 = vld [vmem:[%s91 + $0x4] sm:$0xf]
        %v2576 = vld [vmem:[%s91 + $0x8] sm:$0xf]
        %v2577 = vld [vmem:[%s91 + $0xc] sm:$0xf]
        %v2578 = vld [vmem:[%s91 + $0x10] sm:$0xf]
        %v2579 = vld [vmem:[%s91 + $0x14] sm:$0xf]
        %v2580 = vld [vmem:[%s91 + $0x18] sm:$0xf]
        %v2581 = vld [vmem:[%s91 + $0x1c] sm:$0xf]
        %v2582 = vld [vmem:[%s89] sm:$0x1]
        %v2591 = vunpack.c.l.b16 %v2574
        %v2592 = vunpack.c.l.b16 %v2575
        %v2593 = vunpack.c.l.b16 %v2576
        %v2594 = vunpack.c.l.b16 %v2577
        %v2595 = vunpack.c.l.b16 %v2578
        %v2596 = vunpack.c.l.b16 %v2579
        %v2597 = vunpack.c.l.b16 %v2580
        %v2598 = vunpack.c.l.b16 %v2581
        %v2599 = vpack.c.b16 %v2592, %v2591
        %v2600 = vpack.c.b16 %v2594, %v2593
        %v2601 = vpack.c.b16 %v2596, %v2595
        %v2602 = vpack.c.b16 %v2598, %v2597
        %v2608 = vsel %vm1908, %v2573, 0
        %2610 = vmatpush.bf16.msra.mxu0 0
        %2611 = vmatpush.bf16.msra.mxu0 0
        %2612 = vmatpush.bf16.msra.mxu0 0
        %2613 = vmatpush.bf16.msra.mxu0 0
        %2614 = vmatpush.bf16.msra.mxu0 %v2602
        %2615 = vmatpush.bf16.msra.mxu0 %v2601
        %2616 = vmatpush.bf16.msra.mxu0 %v2600
        %2617 = vmatpush.bf16.msra.mxu0 %v2599
        %2618 = vmatmul.bf16.gmra.mxu0 %v2608
        %v2619 = vpop.f32.mrf.mxu0
        %v2620 = vadd.f32 %v2582, %v2619
        %v2621 = vpop.f32.mrf.mxu0
        %2622 = vdwg.mxu0
        %v2623 = vmax.f32 %v2620, 0.0
        %v2624 = vpack.c.bf16 %v2623, %v2623
        %v2625 = vld [vmem:[#allocation28] sm:$0xf]
        %v2626 = vld [vmem:[#allocation28 + $0x4] sm:$0xf]
        %v2627 = vld [vmem:[#allocation28 + $0x8] sm:$0xf]
        %v2628 = vld [vmem:[#allocation28 + $0xc] sm:$0xf]
        %v2629 = vld [vmem:[%s93] sm:$0x1]
        %v2634 = vunpack.c.l.b16 %v2625
        %v2635 = vunpack.c.l.b16 %v2626
        %v2636 = vunpack.c.l.b16 %v2627
        %v2637 = vunpack.c.l.b16 %v2628
        %v2638 = vpack.c.b16 %v2635, %v2634
        %v2639 = vpack.c.b16 %v2637, %v2636
        %v2643 = vsel %vm1925, %v2624, 0
        %2645 = vmatpush.bf16.msra.mxu0 0
        %2646 = vmatpush.bf16.msra.mxu0 0
        %2647 = vmatpush.bf16.msra.mxu0 0
        %2648 = vmatpush.bf16.msra.mxu0 0
        %2649 = vmatpush.bf16.msra.mxu0 0
        %2650 = vmatpush.bf16.msra.mxu0 0
        %2651 = vmatpush.bf16.msra.mxu0 %v2639
        %2652 = vmatpush.bf16.msra.mxu0 %v2638
        %2653 = vmatmul.bf16.gmra.mxu0 %v2643
        %v2654 = vpop.f32.mrf.mxu0
        %v2655 = vadd.f32 %v2629, %v2654
        %v2656 = vpop.f32.mrf.mxu0
        %2657 = vdwg.mxu0
        %v2658 = vtanh.pop %v2655
        %vm2659 = vcmask 8192
        %2660 = vst.msk [vmem:[%s1808] sm:$0x1] %vm2659, %v2658
        %v2661 = vpack.c.bf16 %v2572, %v2572
        %v2662 = vld [vmem:[#allocation13] sm:$0xf]
        %v2663 = vld [vmem:[%s33] sm:$0x1]
        %v2665 = vperm.slane %v2663, 0
        %v2668 = vsel %vm2006, %v2661, 0
        %v2671 = vsel %vm1866, %v2662, 0
        %2673 = vmatpush.bf16.msra.mxu0 0
        %2674 = vmatpush.bf16.msra.mxu0 0
        %2675 = vmatpush.bf16.msra.mxu0 0
        %2676 = vmatpush.bf16.msra.mxu0 0
        %2677 = vmatpush.bf16.msra.mxu0 0
        %2678 = vmatpush.bf16.msra.mxu0 0
        %2679 = vmatpush.bf16.msra.mxu0 0
        %2680 = vmatpush.bf16.msra.mxu0 %v2671
        %2681 = vmatmul.bf16.gmra.mxu0 %v2668
        %v2682 = vpop.f32.mrf.mxu0
        %v2683 = vadd.f32 %v2665, %v2682
        %v2684 = vpop.f32.mrf.mxu0
        %2685 = vdwg.mxu0
        %v2686 = vmax.f32 %v2683, 0.0
        %v2687 = vpack.c.bf16 %v2686, %v2686
        %v2688 = vld [vmem:[#allocation15] sm:$0xf]
        %v2689 = vld [vmem:[#allocation15 + $0x4] sm:$0xf]
        %v2690 = vld [vmem:[%s37] sm:$0x1]
        %v2692 = vperm.slane %v2690, 0
        %v2696 = vunpack.c.l.b16 %v2688
        %v2697 = vunpack.c.l.b16 %v2689
        %v2698 = vpack.c.b16 %v2697, %v2696
        %v2701 = vsel %vm2244, %v2687, 0
        %2703 = vmatpush.bf16.msra.mxu0 0
        %2704 = vmatpush.bf16.msra.mxu0 0
        %2705 = vmatpush.bf16.msra.mxu0 0
        %2706 = vmatpush.bf16.msra.mxu0 0
        %2707 = vmatpush.bf16.msra.mxu0 0
        %2708 = vmatpush.bf16.msra.mxu0 0
        %2709 = vmatpush.bf16.msra.mxu0 0
        %2710 = vmatpush.bf16.msra.mxu0 %v2698
        %2711 = vmatmul.bf16.gmra.mxu0 %v2701
        %v2712 = vpop.f32.mrf.mxu0
        %v2713 = vadd.f32 %v2692, %v2712
        %v2714 = vpop.f32.mrf.mxu0
        %2715 = vdwg.mxu0
        %v2716 = vld [vmem:[#allocation12] sm:$0xff]
        %v2717 = vadd.f32 %v2713, %v2716
        %v2718 = vsel %vm1925, %v2717, 0.0
        %2719 = vadd.xlane.f32.xlu0 %v2718
        %v2720 = vpop.xlane.xlu0 %2719
        %v2721 = vmul.f32 %v2720, %v1935
        %v2722 = vsub.f32 %v2717, %v2721
        %v2723 = vmul.f32 %v2722, %v2722
        %v2724 = vsel %vm1925, %v2723, 0.0
        %2725 = vadd.xlane.f32.xlu0 %v2724
        %v2726 = vpop.xlane.xlu0 %2725
        %v2727 = vmul.f32 %v2726, %v1935
        %v2728 = vadd.f32 %v2727, 1e-05
        %v2729 = vrsqrt.pop %v2728
        %v2730 = vmul.f32 %v2729, %v2728
        %v2731 = vmul.f32 %v2730, %v2729
        %v2732 = vmul.f32 0.5, %v2731
        %v2733 = vsub.f32 1.5, %v2732
        %v2734 = vmul.f32 %v2729, %v2733
        %vm2735 = vweird.f32 %v2728
        %vm2736 = vweird.f32 %v2729
        %vm2737 = vmor %vm2735, %vm2736
        %v2738 = vsel %vm2737, %v2729, %v2734
        %v2739 = vmul.f32 %v2722, %v2738
        %v2740 = vld [vmem:[%s13] sm:$0x1]
        %v2742 = vperm.slane %v2740, 0
        %v2744 = vmul.f32 %v2739, %v2742
        %v2745 = vld [vmem:[%s11] sm:$0x1]
        %v2747 = vperm.slane %v2745, 0
        %v2749 = vadd.f32 %v2744, %v2747
        %v2750 = vpack.c.bf16 %v2749, %v2749
        %v2751 = vld [vmem:[#allocation10] sm:$0xf]
        %v2752 = vld [vmem:[#allocation10 + $0x4] sm:$0xf]
        %v2753 = vld [vmem:[#allocation10 + $0x8] sm:$0xf]
        %v2754 = vld [vmem:[#allocation10 + $0xc] sm:$0xf]
        %v2755 = vld [vmem:[%s9] sm:$0x1]
        %v2757 = vperm.slane %v2755, 0
        %v2763 = vunpack.c.l.b16 %v2751
        %v2764 = vunpack.c.l.b16 %v2752
        %v2765 = vunpack.c.l.b16 %v2753
        %v2766 = vunpack.c.l.b16 %v2754
        %v2767 = vpack.c.b16 %v2764, %v2763
        %v2768 = vpack.c.b16 %v2766, %v2765
        %v2772 = vsel %vm1925, %v2750, 0
        %2774 = vmatpush.bf16.msra.mxu0 0
        %2775 = vmatpush.bf16.msra.mxu0 0
        %2776 = vmatpush.bf16.msra.mxu0 0
        %2777 = vmatpush.bf16.msra.mxu0 0
        %2778 = vmatpush.bf16.msra.mxu0 0
        %2779 = vmatpush.bf16.msra.mxu0 0
        %2780 = vmatpush.bf16.msra.mxu0 %v2768
        %2781 = vmatpush.bf16.msra.mxu0 %v2767
        %2782 = vmatmul.bf16.gmra.mxu0 %v2772
        %v2783 = vpop.f32.mrf.mxu0
        %v2784 = vadd.f32 %v2757, %v2783
        %v2785 = vpop.f32.mrf.mxu0
        %2786 = vdwg.mxu0
        %v2787 = vpack.c.bf16 %v2784, %v2784
        %2789 = vrot.lane.b32.xlu0 %v2787, 96
        %v2790 = vpop.permute.xlu0 %2789
        %v2792 = vsel %vm2006, %v2787, 0
        %v2795 = vsel %vm2006, %v2790, 0
        %2797 = vmatpush.bf16.xpose.msra.mxu0 0
        %2798 = vmatpush.bf16.xpose.msra.mxu0 0
        %2799 = vmatpush.bf16.xpose.msra.mxu0 0
        %2800 = vmatpush.bf16.xpose.msra.mxu0 0
        %2801 = vmatpush.bf16.xpose.msra.mxu0 0
        %2802 = vmatpush.bf16.xpose.msra.mxu0 0
        %2803 = vmatpush.bf16.xpose.msra.mxu0 0
        %2804 = vmatpush.bf16.xpose.msra.mxu0 %v2795
        %2805 = vmatmul.bf16.gmra.mxu0 %v2792
        %v2806 = vpop.f32.mrf.mxu0
        %v2807 = vadd.f32 0.0, %v2806
        %v2808 = vpop.f32.mrf.mxu0
        %2809 = vdwg.mxu0
        %v2810 = vmul.f32 %v2807, 0.35355338
        %v2811 = vsel %vm2006, %v2810, -inf
        %2812 = vmax.xlane.f32.xlu0 %v2811
        %v2813 = vpop.xlane.xlu0 %2812
        %v2814 = vsub.f32 %v2810, %v2813
        %v2815 = vmul.f32 %v2814, 1.442695
        %v2816 = vpow.pop %v2815
        %v2817 = vsel %vm2006, %v2816, 0.0
        %2818 = vadd.xlane.f32.xlu0 %v2817
        %v2819 = vpop.xlane.xlu0 %2818
        %v2820 = vrcp.pop %v2819
        %v2821 = vmul.f32 %v2816, %v2820
        %v2822 = vpack.c.bf16 %v2821, %v2821
        %2823 = vrot.lane.b32.xlu0 %v2787, 64
        %v2824 = vpop.permute.xlu0 %2823
        %v2826 = vsel %vm2006, %v2822, 0
        %v2829 = vsel %vm1866, %v2824, 0
        %2831 = vmatpush.bf16.msra.mxu0 0
        %2832 = vmatpush.bf16.msra.mxu0 0
        %2833 = vmatpush.bf16.msra.mxu0 0
        %2834 = vmatpush.bf16.msra.mxu0 0
        %2835 = vmatpush.bf16.msra.mxu0 0
        %2836 = vmatpush.bf16.msra.mxu0 0
        %2837 = vmatpush.bf16.msra.mxu0 0
        %2838 = vmatpush.bf16.msra.mxu0 %v2829
        %2839 = vmatmul.bf16.gmra.mxu0 %v2826
        %v2840 = vpop.f32.mrf.mxu0
        %v2841 = vadd.f32 0.0, %v2840
        %v2842 = vpop.f32.mrf.mxu0
        %2843 = vdwg.mxu0
        %2844 = vrot.lane.b32.xlu0 %v2787, 120
        %v2845 = vpop.permute.xlu0 %2844
        %2846 = vrot.lane.b32.xlu0 %v2787, 88
        %v2847 = vpop.permute.xlu0 %2846
        %v2849 = vsel %vm2006, %v2845, 0
        %v2852 = vsel %vm2006, %v2847, 0
        %2854 = vmatpush.bf16.xpose.msra.mxu0 0
        %2855 = vmatpush.bf16.xpose.msra.mxu0 0
        %2856 = vmatpush.bf16.xpose.msra.mxu0 0
        %2857 = vmatpush.bf16.xpose.msra.mxu0 0
        %2858 = vmatpush.bf16.xpose.msra.mxu0 0
        %2859 = vmatpush.bf16.xpose.msra.mxu0 0
        %2860 = vmatpush.bf16.xpose.msra.mxu0 0
        %2861 = vmatpush.bf16.xpose.msra.mxu0 %v2852
        %2862 = vmatmul.bf16.gmra.mxu0 %v2849
        %v2863 = vpop.f32.mrf.mxu0
        %v2864 = vadd.f32 0.0, %v2863
        %v2865 = vpop.f32.mrf.mxu0
        %2866 = vdwg.mxu0
        %v2867 = vmul.f32 %v2864, 0.35355338
        %v2868 = vsel %vm2006, %v2867, -inf
        %2869 = vmax.xlane.f32.xlu0 %v2868
        %v2870 = vpop.xlane.xlu0 %2869
        %v2871 = vsub.f32 %v2867, %v2870
        %v2872 = vmul.f32 %v2871, 1.442695
        %v2873 = vpow.pop %v2872
        %v2874 = vsel %vm2006, %v2873, 0.0
        %2875 = vadd.xlane.f32.xlu0 %v2874
        %v2876 = vpop.xlane.xlu0 %2875
        %v2877 = vrcp.pop %v2876
        %v2878 = vmul.f32 %v2873, %v2877
        %v2879 = vpack.c.bf16 %v2878, %v2878
        %2880 = vrot.lane.b32.xlu0 %v2787, 56
        %v2881 = vpop.permute.xlu0 %2880
        %v2883 = vsel %vm2006, %v2879, 0
        %v2886 = vsel %vm1866, %v2881, 0
        %2888 = vmatpush.bf16.msra.mxu0 0
        %2889 = vmatpush.bf16.msra.mxu0 0
        %2890 = vmatpush.bf16.msra.mxu0 0
        %2891 = vmatpush.bf16.msra.mxu0 0
        %2892 = vmatpush.bf16.msra.mxu0 0
        %2893 = vmatpush.bf16.msra.mxu0 0
        %2894 = vmatpush.bf16.msra.mxu0 0
        %2895 = vmatpush.bf16.msra.mxu0 %v2886
        %2896 = vmatmul.bf16.gmra.mxu0 %v2883
        %v2897 = vpop.f32.mrf.mxu0
        %v2898 = vadd.f32 0.0, %v2897
        %v2899 = vpop.f32.mrf.mxu0
        %2900 = vdwg.mxu0
        %2901 = vrot.lane.b32.xlu0 %v2787, 112
        %v2902 = vpop.permute.xlu0 %2901
        %2903 = vrot.lane.b32.xlu0 %v2787, 80
        %v2904 = vpop.permute.xlu0 %2903
        %v2906 = vsel %vm2006, %v2902, 0
        %v2909 = vsel %vm2006, %v2904, 0
        %2911 = vmatpush.bf16.xpose.msra.mxu0 0
        %2912 = vmatpush.bf16.xpose.msra.mxu0 0
        %2913 = vmatpush.bf16.xpose.msra.mxu0 0
        %2914 = vmatpush.bf16.xpose.msra.mxu0 0
        %2915 = vmatpush.bf16.xpose.msra.mxu0 0
        %2916 = vmatpush.bf16.xpose.msra.mxu0 0
        %2917 = vmatpush.bf16.xpose.msra.mxu0 0
        %2918 = vmatpush.bf16.xpose.msra.mxu0 %v2909
        %2919 = vmatmul.bf16.gmra.mxu0 %v2906
        %v2920 = vpop.f32.mrf.mxu0
        %v2921 = vadd.f32 0.0, %v2920
        %v2922 = vpop.f32.mrf.mxu0
        %2923 = vdwg.mxu0
        %v2924 = vmul.f32 %v2921, 0.35355338
        %v2925 = vsel %vm2006, %v2924, -inf
        %2926 = vmax.xlane.f32.xlu0 %v2925
        %v2927 = vpop.xlane.xlu0 %2926
        %v2928 = vsub.f32 %v2924, %v2927
        %v2929 = vmul.f32 %v2928, 1.442695
        %v2930 = vpow.pop %v2929
        %v2931 = vsel %vm2006, %v2930, 0.0
        %2932 = vadd.xlane.f32.xlu0 %v2931
        %v2933 = vpop.xlane.xlu0 %2932
        %v2934 = vrcp.pop %v2933
        %v2935 = vmul.f32 %v2930, %v2934
        %v2936 = vpack.c.bf16 %v2935, %v2935
        %2937 = vrot.lane.b32.xlu0 %v2787, 48
        %v2938 = vpop.permute.xlu0 %2937
        %v2940 = vsel %vm2006, %v2936, 0
        %v2943 = vsel %vm1866, %v2938, 0
        %2945 = vmatpush.bf16.msra.mxu0 0
        %2946 = vmatpush.bf16.msra.mxu0 0
        %2947 = vmatpush.bf16.msra.mxu0 0
        %2948 = vmatpush.bf16.msra.mxu0 0
        %2949 = vmatpush.bf16.msra.mxu0 0
        %2950 = vmatpush.bf16.msra.mxu0 0
        %2951 = vmatpush.bf16.msra.mxu0 0
        %2952 = vmatpush.bf16.msra.mxu0 %v2943
        %2953 = vmatmul.bf16.gmra.mxu0 %v2940
        %v2954 = vpop.f32.mrf.mxu0
        %v2955 = vadd.f32 0.0, %v2954
        %v2956 = vpop.f32.mrf.mxu0
        %2957 = vdwg.mxu0
        %2958 = vrot.lane.b32.xlu0 %v2787, 104
        %v2959 = vpop.permute.xlu0 %2958
        %2960 = vrot.lane.b32.xlu0 %v2787, 72
        %v2961 = vpop.permute.xlu0 %2960
        %v2963 = vsel %vm2006, %v2959, 0
        %v2966 = vsel %vm2006, %v2961, 0
        %2968 = vmatpush.bf16.xpose.msra.mxu0 0
        %2969 = vmatpush.bf16.xpose.msra.mxu0 0
        %2970 = vmatpush.bf16.xpose.msra.mxu0 0
        %2971 = vmatpush.bf16.xpose.msra.mxu0 0
        %2972 = vmatpush.bf16.xpose.msra.mxu0 0
        %2973 = vmatpush.bf16.xpose.msra.mxu0 0
        %2974 = vmatpush.bf16.xpose.msra.mxu0 0
        %2975 = vmatpush.bf16.xpose.msra.mxu0 %v2966
        %2976 = vmatmul.bf16.gmra.mxu0 %v2963
        %v2977 = vpop.f32.mrf.mxu0
        %v2978 = vadd.f32 0.0, %v2977
        %v2979 = vpop.f32.mrf.mxu0
        %2980 = vdwg.mxu0
        %v2981 = vmul.f32 %v2978, 0.35355338
        %v2982 = vsel %vm2006, %v2981, -inf
        %2983 = vmax.xlane.f32.xlu0 %v2982
        %v2984 = vpop.xlane.xlu0 %2983
        %v2985 = vsub.f32 %v2981, %v2984
        %v2986 = vmul.f32 %v2985, 1.442695
        %v2987 = vpow.pop %v2986
        %v2988 = vsel %vm2006, %v2987, 0.0
        %2989 = vadd.xlane.f32.xlu0 %v2988
        %v2990 = vpop.xlane.xlu0 %2989
        %v2991 = vrcp.pop %v2990
        %v2992 = vmul.f32 %v2987, %v2991
        %v2993 = vpack.c.bf16 %v2992, %v2992
        %2994 = vrot.lane.b32.xlu0 %v2787, 40
        %v2995 = vpop.permute.xlu0 %2994
        %v2997 = vsel %vm2006, %v2993, 0
        %v3000 = vsel %vm1866, %v2995, 0
        %3002 = vmatpush.bf16.msra.mxu0 0
        %3003 = vmatpush.bf16.msra.mxu0 0
        %3004 = vmatpush.bf16.msra.mxu0 0
        %3005 = vmatpush.bf16.msra.mxu0 0
        %3006 = vmatpush.bf16.msra.mxu0 0
        %3007 = vmatpush.bf16.msra.mxu0 0
        %3008 = vmatpush.bf16.msra.mxu0 0
        %3009 = vmatpush.bf16.msra.mxu0 %v3000
        %3010 = vmatmul.bf16.gmra.mxu0 %v2997
        %v3011 = vpop.f32.mrf.mxu0
        %v3012 = vadd.f32 0.0, %v3011
        %v3013 = vpop.f32.mrf.mxu0
        %3014 = vdwg.mxu0
        %3016 = vrot.lane.b32.xlu0 %v2898, 8
        %v3017 = vpop.permute.xlu0 %3016
        %3020 = vrot.lane.b32.xlu0 %v2955, 16
        %v3021 = vpop.permute.xlu0 %3020
        %3024 = vrot.lane.b32.xlu0 %v3012, 24
        %v3025 = vpop.permute.xlu0 %3024
        %v3027 = vsel %vm2006, %v2841, %v3017
        %v3028 = vsel %vm2244, %v3027, %v3021
        %v3029 = vsel %vm2246, %v3028, %v3025
        %v3030 = vpack.c.bf16 %v3029, %v3029
        %v3031 = vld [vmem:[#allocation9] sm:$0xf]
        %v3032 = vld [vmem:[#allocation9 + $0x4] sm:$0xf]
        %v3033 = vld [vmem:[#allocation9 + $0x8] sm:$0xf]
        %v3034 = vld [vmem:[#allocation9 + $0xc] sm:$0xf]
        %v3035 = vld [vmem:[%s7] sm:$0x1]
        %v3037 = vperm.slane %v3035, 0
        %v3043 = vunpack.c.l.b16 %v3031
        %v3044 = vunpack.c.l.b16 %v3032
        %v3045 = vunpack.c.l.b16 %v3033
        %v3046 = vunpack.c.l.b16 %v3034
        %v3047 = vpack.c.b16 %v3044, %v3043
        %v3048 = vpack.c.b16 %v3046, %v3045
        %v3052 = vsel %vm1925, %v3030, 0
        %3054 = vmatpush.bf16.msra.mxu0 0
        %3055 = vmatpush.bf16.msra.mxu0 0
        %3056 = vmatpush.bf16.msra.mxu0 0
        %3057 = vmatpush.bf16.msra.mxu0 0
        %3058 = vmatpush.bf16.msra.mxu0 0
        %3059 = vmatpush.bf16.msra.mxu0 0
        %3060 = vmatpush.bf16.msra.mxu0 %v3048
        %3061 = vmatpush.bf16.msra.mxu0 %v3047
        %3062 = vmatmul.bf16.gmra.mxu0 %v3052
        %v3063 = vpop.f32.mrf.mxu0
        %v3064 = vadd.f32 %v3037, %v3063
        %v3065 = vpop.f32.mrf.mxu0
        %3066 = vdwg.mxu0
        %v3067 = vadd.f32 %v2717, %v3064
        %v3068 = vsel %vm1925, %v3067, 0.0
        %3069 = vadd.xlane.f32.xlu0 %v3068
        %v3070 = vpop.xlane.xlu0 %3069
        %v3071 = vmul.f32 %v3070, %v1935
        %v3072 = vsub.f32 %v3067, %v3071
        %v3073 = vmul.f32 %v3072, %v3072
        %v3074 = vsel %vm1925, %v3073, 0.0
        %3075 = vadd.xlane.f32.xlu0 %v3074
        %v3076 = vpop.xlane.xlu0 %3075
        %v3077 = vmul.f32 %v3076, %v1935
        %v3078 = vadd.f32 %v3077, 1e-05
        %v3079 = vrsqrt.pop %v3078
        %v3080 = vmul.f32 %v3079, %v3078
        %v3081 = vmul.f32 %v3080, %v3079
        %v3082 = vmul.f32 0.5, %v3081
        %v3083 = vsub.f32 1.5, %v3082
        %v3084 = vmul.f32 %v3079, %v3083
        %vm3085 = vweird.f32 %v3078
        %vm3086 = vweird.f32 %v3079
        %vm3087 = vmor %vm3085, %vm3086
        %v3088 = vsel %vm3087, %v3079, %v3084
        %v3089 = vmul.f32 %v3072, %v3088
        %v3090 = vld [vmem:[%s17] sm:$0x1]
        %v3092 = vperm.slane %v3090, 0
        %v3094 = vmul.f32 %v3089, %v3092
        %v3095 = vld [vmem:[%s15] sm:$0x1]
        %v3097 = vperm.slane %v3095, 0
        %v3099 = vadd.f32 %v3094, %v3097
        %v3100 = vpack.c.bf16 %v3099, %v3099
        %v3101 = vld [vmem:[#allocation4] sm:$0xf]
        %v3102 = vld [vmem:[#allocation4 + $0x4] sm:$0xf]
        %v3103 = vld [vmem:[#allocation4 + $0x8] sm:$0xf]
        %v3104 = vld [vmem:[#allocation4 + $0xc] sm:$0xf]
        %v3105 = vld [vmem:[%s3] sm:$0x1]
        %v3107 = vperm.slane %v3105, 0
        %v3113 = vunpack.c.l.b16 %v3101
        %v3114 = vunpack.c.l.b16 %v3102
        %v3115 = vunpack.c.l.b16 %v3103
        %v3116 = vunpack.c.l.b16 %v3104
        %v3117 = vpack.c.b16 %v3114, %v3113
        %v3118 = vpack.c.b16 %v3116, %v3115
        %v3122 = vsel %vm1925, %v3100, 0
        %3124 = vmatpush.bf16.msra.mxu0 0
        %3125 = vmatpush.bf16.msra.mxu0 0
        %3126 = vmatpush.bf16.msra.mxu0 0
        %3127 = vmatpush.bf16.msra.mxu0 0
        %3128 = vmatpush.bf16.msra.mxu0 0
        %3129 = vmatpush.bf16.msra.mxu0 0
        %3130 = vmatpush.bf16.msra.mxu0 %v3118
        %3131 = vmatpush.bf16.msra.mxu0 %v3117
        %3132 = vmatmul.bf16.gmra.mxu0 %v3122
        %v3133 = vpop.f32.mrf.mxu0
        %v3134 = vadd.f32 %v3107, %v3133
        %v3135 = vpop.f32.mrf.mxu0
        %3136 = vdwg.mxu0
        %v3137 = vmul.f32 %v3134, %v3134
        %v3138 = vmul.f32 %v3134, %v3137
        %v3139 = vmul.f32 %v3138, 0.044715
        %v3140 = vadd.f32 %v3134, %v3139
        %v3141 = vmul.f32 %v3140, 0.7978846
        %v3142 = vtanh.pop %v3141
        %v3143 = vadd.f32 %v3142, 1.0
        %v3144 = vmul.f32 %v3143, 0.5
        %v3145 = vmul.f32 %v3134, %v3144
        %v3146 = vpack.c.bf16 %v3145, %v3145
        %v3147 = vld [vmem:[#allocation7] sm:$0xf]
        %v3148 = vld [vmem:[#allocation7 + $0x4] sm:$0xf]
        %v3149 = vld [vmem:[#allocation7 + $0x8] sm:$0xf]
        %v3150 = vld [vmem:[#allocation7 + $0xc] sm:$0xf]
        %v3151 = vld [vmem:[#allocation7 + $0x10] sm:$0xf]
        %v3152 = vld [vmem:[#allocation7 + $0x14] sm:$0xf]
        %v3153 = vld [vmem:[#allocation7 + $0x18] sm:$0xf]
        %v3154 = vld [vmem:[#allocation7 + $0x1c] sm:$0xf]
        %v3155 = vld [vmem:[#allocation7 + $0x20] sm:$0xf]
        %v3156 = vld [vmem:[#allocation7 + $0x24] sm:$0xf]
        %v3157 = vld [vmem:[#allocation7 + $0x28] sm:$0xf]
        %v3158 = vld [vmem:[#allocation7 + $0x2c] sm:$0xf]
        %v3159 = vld [vmem:[#allocation7 + $0x30] sm:$0xf]
        %v3160 = vld [vmem:[#allocation7 + $0x34] sm:$0xf]
        %v3161 = vld [vmem:[#allocation7 + $0x38] sm:$0xf]
        %v3162 = vld [vmem:[#allocation7 + $0x3c] sm:$0xf]
        %v3163 = vld [vmem:[%s5] sm:$0x1]
        %v3165 = vperm.slane %v3163, 0
        %v3183 = vunpack.c.l.b16 %v3147
        %v3184 = vunpack.c.l.b16 %v3148
        %v3185 = vunpack.c.l.b16 %v3149
        %v3186 = vunpack.c.l.b16 %v3150
        %v3187 = vunpack.c.l.b16 %v3151
        %v3188 = vunpack.c.l.b16 %v3152
        %v3189 = vunpack.c.l.b16 %v3153
        %v3190 = vunpack.c.l.b16 %v3154
        %v3191 = vunpack.c.l.b16 %v3155
        %v3192 = vunpack.c.l.b16 %v3156
        %v3193 = vunpack.c.l.b16 %v3157
        %v3194 = vunpack.c.l.b16 %v3158
        %v3195 = vunpack.c.l.b16 %v3159
        %v3196 = vunpack.c.l.b16 %v3160
        %v3197 = vunpack.c.l.b16 %v3161
        %v3198 = vunpack.c.l.b16 %v3162
        %v3199 = vpack.c.b16 %v3184, %v3183
        %v3200 = vpack.c.b16 %v3186, %v3185
        %v3201 = vpack.c.b16 %v3188, %v3187
        %v3202 = vpack.c.b16 %v3190, %v3189
        %v3203 = vpack.c.b16 %v3192, %v3191
        %v3204 = vpack.c.b16 %v3194, %v3193
        %v3205 = vpack.c.b16 %v3196, %v3195
        %v3206 = vpack.c.b16 %v3198, %v3197
        %3215 = vmatpush.bf16.msra.mxu0 %v3206
        %3216 = vmatpush.bf16.msra.mxu0 %v3205
        %3217 = vmatpush.bf16.msra.mxu0 %v3204
        %3218 = vmatpush.bf16.msra.mxu0 %v3203
        %3219 = vmatpush.bf16.msra.mxu0 %v3202
        %3220 = vmatpush.bf16.msra.mxu0 %v3201
        %3221 = vmatpush.bf16.msra.mxu0 %v3200
        %3222 = vmatpush.bf16.msra.mxu0 %v3199
        %3223 = vmatmul.bf16.gmra.mxu0 %v3146
        %v3224 = vpop.f32.mrf.mxu0
        %v3225 = vadd.f32 %v3165, %v3224
        %v3226 = vpop.f32.mrf.mxu0
        %3227 = vdwg.mxu0
        %v3228 = vadd.f32 %v3067, %v3225
        %v3229 = vsel %vm1925, %v3228, 0.0
        %3230 = vadd.xlane.f32.xlu0 %v3229
        %v3231 = vpop.xlane.xlu0 %3230
        %v3232 = vmul.f32 %v3231, %v1935
        %v3233 = vsub.f32 %v3228, %v3232
        %v3234 = vmul.f32 %v3233, %v3233
        %v3235 = vsel %vm1925, %v3234, 0.0
        %3236 = vadd.xlane.f32.xlu0 %v3235
        %v3237 = vpop.xlane.xlu0 %3236
        %v3238 = vmul.f32 %v3237, %v1935
        %v3239 = vadd.f32 %v3238, 1e-05
        %v3240 = vrsqrt.pop %v3239
        %v3241 = vmul.f32 %v3240, %v3239
        %v3242 = vmul.f32 %v3241, %v3240
        %v3243 = vmul.f32 0.5, %v3242
        %v3244 = vsub.f32 1.5, %v3243
        %v3245 = vmul.f32 %v3240, %v3244
        %vm3246 = vweird.f32 %v3239
        %vm3247 = vweird.f32 %v3240
        %vm3248 = vmor %vm3246, %vm3247
        %v3249 = vsel %vm3248, %v3240, %v3245
        %v3250 = vmul.f32 %v3233, %v3249
        %v3251 = vld [vmem:[%s29] sm:$0x1]
        %v3253 = vperm.slane %v3251, 0
        %v3255 = vmul.f32 %v3250, %v3253
        %v3256 = vld [vmem:[%s27] sm:$0x1]
        %v3258 = vperm.slane %v3256, 0
        %v3260 = vadd.f32 %v3255, %v3258
        %v3261 = vpack.c.bf16 %v3260, %v3260
        %v3262 = vld [vmem:[#allocation25] sm:$0xf]
        %v3263 = vld [vmem:[#allocation25 + $0x4] sm:$0xf]
        %v3264 = vld [vmem:[#allocation25 + $0x8] sm:$0xf]
        %v3265 = vld [vmem:[#allocation25 + $0xc] sm:$0xf]
        %v3266 = vld [vmem:[%s77] sm:$0x1]
        %v3268 = vperm.slane %v3266, 0
        %v3274 = vunpack.c.l.b16 %v3262
        %v3275 = vunpack.c.l.b16 %v3263
        %v3276 = vunpack.c.l.b16 %v3264
        %v3277 = vunpack.c.l.b16 %v3265
        %v3278 = vpack.c.b16 %v3275, %v3274
        %v3279 = vpack.c.b16 %v3277, %v3276
        %v3283 = vsel %vm1925, %v3261, 0
        %3285 = vmatpush.bf16.msra.mxu0 0
        %3286 = vmatpush.bf16.msra.mxu0 0
        %3287 = vmatpush.bf16.msra.mxu0 0
        %3288 = vmatpush.bf16.msra.mxu0 0
        %3289 = vmatpush.bf16.msra.mxu0 0
        %3290 = vmatpush.bf16.msra.mxu0 0
        %3291 = vmatpush.bf16.msra.mxu0 %v3279
        %3292 = vmatpush.bf16.msra.mxu0 %v3278
        %3293 = vmatmul.bf16.gmra.mxu0 %v3283
        %v3294 = vpop.f32.mrf.mxu0
        %v3295 = vadd.f32 %v3268, %v3294
        %v3296 = vpop.f32.mrf.mxu0
        %3297 = vdwg.mxu0
        %v3298 = vmul.f32 %v3295, %v3295
        %v3299 = vmul.f32 %v3295, %v3298
        %v3300 = vmul.f32 %v3299, 0.044715
        %v3301 = vadd.f32 %v3295, %v3300
        %v3302 = vmul.f32 %v3301, 0.7978846
        %v3303 = vtanh.pop %v3302
        %v3304 = vadd.f32 %v3303, 1.0
        %v3305 = vmul.f32 %v3304, 0.5
        %v3306 = vmul.f32 %v3295, %v3305
        %v3307 = vsel %vm1925, %v3306, 0.0
        %3308 = vadd.xlane.f32.xlu0 %v3307
        %v3309 = vpop.xlane.xlu0 %3308
        %v3310 = vmul.f32 %v3309, %v1935
        %v3311 = vsub.f32 %v3306, %v3310
        %v3312 = vmul.f32 %v3311, %v3311
        %v3313 = vsel %vm1925, %v3312, 0.0
        %3314 = vadd.xlane.f32.xlu0 %v3313
        %v3315 = vpop.xlane.xlu0 %3314
        %v3316 = vmul.f32 %v3315, %v1935
        %v3317 = vadd.f32 %v3316, 1e-05
        %v3318 = vrsqrt.pop %v3317
        %v3319 = vmul.f32 %v3318, %v3317
        %v3320 = vmul.f32 %v3319, %v3318
        %v3321 = vmul.f32 0.5, %v3320
        %v3322 = vsub.f32 1.5, %v3321
        %v3323 = vmul.f32 %v3318, %v3322
        %vm3324 = vweird.f32 %v3317
        %vm3325 = vweird.f32 %v3318
        %vm3326 = vmor %vm3324, %vm3325
        %v3327 = vsel %vm3326, %v3318, %v3323
        %v3328 = vmul.f32 %v3311, %v3327
        %v3329 = vld [vmem:[%s83] sm:$0x1]
        %v3331 = vperm.slane %v3329, 0
        %v3333 = vmul.f32 %v3328, %v3331
        %v3334 = vld [vmem:[%s81] sm:$0x1]
        %v3336 = vperm.slane %v3334, 0
        %v3338 = vadd.f32 %v3333, %v3336
        %v3339 = vpack.c.bf16 %v3338, %v3338
        %v3340 = vld [vmem:[#allocation27] sm:$0xf]
        %v3341 = vld [vmem:[#allocation27 + $0x4] sm:$0xf]
        %v3342 = vld [vmem:[#allocation27 + $0x8] sm:$0xf]
        %v3343 = vld [vmem:[#allocation27 + $0xc] sm:$0xf]
        %v3344 = vld [vmem:[%s85] sm:$0x1]
        %v3346 = vperm.slane %v3344, 0
        %v3352 = vunpack.c.l.b16 %v3340
        %v3353 = vunpack.c.l.b16 %v3341
        %v3354 = vunpack.c.l.b16 %v3342
        %v3355 = vunpack.c.l.b16 %v3343
        %v3356 = vpack.c.b16 %v3353, %v3352
        %v3357 = vpack.c.b16 %v3355, %v3354
        %v3361 = vsel %vm1925, %v3339, 0
        %3363 = vmatpush.bf16.msra.mxu0 0
        %3364 = vmatpush.bf16.msra.mxu0 0
        %3365 = vmatpush.bf16.msra.mxu0 0
        %3366 = vmatpush.bf16.msra.mxu0 0
        %3367 = vmatpush.bf16.msra.mxu0 0
        %3368 = vmatpush.bf16.msra.mxu0 0
        %3369 = vmatpush.bf16.msra.mxu0 %v3357
        %3370 = vmatpush.bf16.msra.mxu0 %v3356
        %3371 = vmatmul.bf16.gmra.mxu0 %v3361
        %v3372 = vpop.f32.mrf.mxu0
        %v3373 = vadd.f32 %v3346, %v3372
        %v3374 = vpop.f32.mrf.mxu0
        %3375 = vdwg.mxu0
        %3376 = vst.msk [vmem:[%s1784] sm:$0xff] %vm1908, %v3373
        %s3377 = sand.u32 %s1161, 1
        %s3378 = scalar_lea.sflag [#allocation6], %s3377
        %s3379 = sand.u32 %s1161, 1
        %s3380 = smul.addr %s3379, 8
        %s3381 = scalar_lea.vmem [#allocation30], %s3380
        %s3382 = sand.u32 %s140, 1
        %s3383 = scalar_lea.sflag [#allocation32], %s3382
        %s3384 = sand.u32 %s1187, 1
        %s3385 = scalar_lea.vmem [#allocation31], %s3384
        %s3386 = sand.u32 %s140, 1
        %s3387 = scalar_lea.sflag [#allocation32], %s3386
        %s3388 = sand.u32 %s1213, 1
        %s3389 = scalar_lea.vmem [#allocation33], %s3388
        %p3390 = scmp.lt.s32.totalorder %s140, 1
        %s3391 = scalar_select %p3390, %s140, 1
        %s3392 = scalar_lea.vmem %s105, %s3391
        // Predicated region
        $region277: #{forward.1} parent=211 // pred_check
          %p3393 = pneg %p1171
        $region278: #{forward.1} parent=211 // pred_check_branch
          %3395 = sbr.rel (%p3393) target = $region280
        $region279: #{forward.1} parent=211 // pred_region
          %3397 = vsyncadd %s3378, 0
          %s3398 = smul.addr %s140, 8
          %s3399 = scalar_lea.hbm %s99, %s3398
          %s3401 = sshll.u32 %s3381, 4
          %s3402 = int_to_ptr.vmem [resolvable:$true] %s3401
          %s3403 = sshll.u32 %s3399, 4
          %s3404 = int_to_ptr.hbm [resolvable:$true] %s3403
          %3406 = dma.vmem_to_hbm [thread:$0]  %s3402, 128, %s3404, %s3378
        $region280: #{forward.1} parent=211 // pred_fallthru
          _
        // Predicated region
        $region281: #{forward.1} parent=211 // pred_check
          %p3407 = pneg %p1197
        $region282: #{forward.1} parent=211 // pred_check_branch
          %3409 = sbr.rel (%p3407) target = $region284
        $region283: #{forward.1} parent=211 // pred_region
          %3411 = vsyncadd %s3383, 0
          %s3412 = scalar_lea.hbm %s101, %s140
          %s3414 = sshll.u32 %s3385, 4
          %s3415 = int_to_ptr.vmem [resolvable:$true] %s3414
          %s3416 = sshll.u32 %s3412, 4
          %s3417 = int_to_ptr.hbm [resolvable:$true] %s3416
          %3419 = dma.vmem_to_hbm [thread:$0]  %s3415, 16, %s3417, %s3383
        $region284: #{forward.1} parent=211 // pred_fallthru
          _
        // Predicated region
        $region285: #{forward.1} parent=211 // pred_check
          %p3420 = pneg %p1223
        $region286: #{forward.1} parent=211 // pred_check_branch
          %3422 = sbr.rel (%p3420) target = $region288
        $region287: #{forward.1} parent=211 // pred_region
          %3424 = vsyncadd %s3387, 0
          %s3425 = scalar_lea.hbm %s103, %s140
          %s3427 = sshll.u32 %s3389, 4
          %s3428 = int_to_ptr.vmem [resolvable:$true] %s3427
          %s3429 = sshll.u32 %s3425, 4
          %s3430 = int_to_ptr.hbm [resolvable:$true] %s3429
          %3432 = dma.vmem_to_hbm [thread:$0]  %s3428, 16, %s3430, %s3387
        $region288: #{forward.1} parent=211 // pred_fallthru
          _
        // Predicated region
        $region289: #{forward.1} parent=211 // pred_check
          %p3433 = pneg %p1249
        $region290: #{forward.1} parent=211 // pred_check_branch
          %3435 = sbr.rel (%p3433) target = $region292
        $region291: #{forward.1} parent=211 // pred_region
          _
        $region292: #{forward.1} parent=211 // pred_fallthru
          _
      $region212: #{forward.1} parent=5 // pred_fallthru
        _
      %p3436 = scmp.le.s32.totalorder 2, %s135
      // Predicated region
      $region293: #{forward.1} parent=5 // pred_check
        %p3437 = pneg %p3436
      $region294: #{forward.1} parent=5 // pred_check_branch
        %3439 = sbr.rel (%p3437) target = $region296
      $region295: #{forward.1} parent=5 // pred_region
        %s3440 = ssub.s32 %s135, 2
        // Predicated region
        $region297: #{forward.1} parent=295 // pred_check
          %p3441 = pneg %p1177
        $region298: #{forward.1} parent=295 // pred_check_branch
          %3443 = sbr.rel (%p3441) target = $region300
        $region299: #{forward.1} parent=295 // pred_region
          %s3444 = sand.u32 %s1162, 1
          %s3445 = scalar_lea.sflag [#allocation6], %s3444
          %s3446 = sand.u32 %s1162, 1
          %s3447 = smul.addr %s3446, 8
          %s3448 = scalar_lea.vmem [#allocation30], %s3447
          %3450 = dma.done %s3445, 128
        $region300: #{forward.1} parent=295 // pred_fallthru
          _
        // Predicated region
        $region301: #{forward.1} parent=295 // pred_check
          %p3451 = pneg %p1203
        $region302: #{forward.1} parent=295 // pred_check_branch
          %3453 = sbr.rel (%p3451) target = $region304
        $region303: #{forward.1} parent=295 // pred_region
          %s3454 = sand.u32 %s141, 1
          %s3455 = scalar_lea.sflag [#allocation32], %s3454
          %s3456 = sand.u32 %s1188, 1
          %s3457 = scalar_lea.vmem [#allocation31], %s3456
          %3459 = dma.done %s3455, 16
        $region304: #{forward.1} parent=295 // pred_fallthru
          _
        // Predicated region
        $region305: #{forward.1} parent=295 // pred_check
          %p3460 = pneg %p1229
        $region306: #{forward.1} parent=295 // pred_check_branch
          %3462 = sbr.rel (%p3460) target = $region308
        $region307: #{forward.1} parent=295 // pred_region
          %s3463 = sand.u32 %s141, 1
          %s3464 = scalar_lea.sflag [#allocation32], %s3463
          %s3465 = sand.u32 %s1214, 1
          %s3466 = scalar_lea.vmem [#allocation33], %s3465
          %3468 = dma.done %s3464, 16
        $region308: #{forward.1} parent=295 // pred_fallthru
          _
        // Predicated region
        $region309: #{forward.1} parent=295 // pred_check
          %p3469 = pneg %p1255
        $region310: #{forward.1} parent=295 // pred_check_branch
          %3471 = sbr.rel (%p3469) target = $region312
        $region311: #{forward.1} parent=295 // pred_region
          %p3472 = scmp.lt.s32.totalorder %s141, 1
          %s3473 = scalar_select %p3472, %s141, 1
          %s3474 = scalar_lea.vmem %s105, %s3473
        $region312: #{forward.1} parent=295 // pred_fallthru
          _
      $region296: #{forward.1} parent=5 // pred_fallthru
        _
    $region6: #{forward.1} parent=1 // loop_footer
      %s139 = sadd.s32 1, %s135
    $region7: #{forward.1} parent=1 // loop_footer_branch
      %134 = sbr.rel target = $region3
    $region8: #{forward.1} parent=1 // loop_exit
      _
    %3475 = vsyncpa [#allocation5], 1
    %s3476 = scalar_lea.sflag [#allocation5], 1
    %3477 = vsyncpa %s3476, 1
    %3478 = vsyncpa [#allocation8], 1
    %3479 = vsyncpa [#allocation11], 1
    %3480 = vsyncpa [#allocation14], 1
    %3481 = vsyncpa [#allocation17], 1
    %3482 = vsyncpa [#allocation20], 1
    %3483 = vsyncpa [#allocation23], 1
    %3484 = vsyncpa [#allocation26], 1
    %3485 = vsyncpa [#allocation29], 1
    %3486 = vsyncpa [#allocation6], 1
    %s3487 = scalar_lea.sflag [#allocation6], 1
    %3488 = vsyncpa %s3487, 1
    %3489 = vsyncpa [#allocation32], 1
    %s3490 = scalar_lea.sflag [#allocation32], 1
    %3491 = vsyncpa %s3490, 1

</llo_original>
